<compile_context>
chip_gen: v6e
topology: v6e:2x2x1
jax: 0.10.0
libtpu: 0.0.40
codegen_flags: <defaults>
</compile_context>

<pallas_src>
import functools

import jax
import jax.numpy as jnp
from jax.experimental import pallas as pl
from jax.experimental.pallas import tpu as pltpu


# ----------------------------- Pallas kernels ------------------------------

def _conv_kernel(x_ref, r_ref, b_ref, o_ref, *, n_kh, oh):
    """One image: valid conv, stride 1, fused bias + ReLU.

    x_ref: (1, H, W*C)       channels-last merged input, bf16
    r_ref: (KH, W*C, OW*OC)  banded weight matrices, bf16 (grid-resident)
    b_ref: (1, OW*OC)        bias tiled over OW, f32
    o_ref: (1, OH, OW*OC)    output, bf16
    """
    acc = jnp.dot(x_ref[0, 0:oh, :], r_ref[0],
                  preferred_element_type=jnp.float32)
    for ki in range(1, n_kh):
        acc = acc + jnp.dot(x_ref[0, ki:ki + oh, :], r_ref[ki],
                            preferred_element_type=jnp.float32)
    acc = acc + b_ref[...]
    # Fused ReLU: exact because max-pool and ReLU commute (both monotone).
    acc = jnp.maximum(acc, 0.0)
    o_ref[0] = acc.astype(o_ref.dtype)


def _fc_loc_kernel(x_ref, w1_ref, b1_ref, w2_ref, b2_ref, o_ref):
    """Fused fc_loc: Linear(90,32) + ReLU + Linear(32,6); hidden stays in vregs."""
    x = x_ref[...].astype(jnp.float32)
    h = jnp.dot(x, w1_ref[...], preferred_element_type=jnp.float32) + b1_ref[...]
    h = jnp.maximum(h, 0.0)
    o_ref[...] = (jnp.dot(h, w2_ref[...], preferred_element_type=jnp.float32)
                  + b2_ref[...])


def _cls_head_kernel(x_ref, w1_ref, b1_ref, w2_ref, b2_ref, o_ref):
    """Fused head: Linear(320,50) + ReLU + Linear(50,10) + log_softmax."""
    x = x_ref[...].astype(jnp.float32)
    h = jnp.dot(x, w1_ref[...], preferred_element_type=jnp.float32) + b1_ref[...]
    h = jnp.maximum(h, 0.0)
    logits = (jnp.dot(h, w2_ref[...], preferred_element_type=jnp.float32)
              + b2_ref[...])
    m = jnp.max(logits, axis=-1, keepdims=True)
    s = logits - m
    lse = jnp.log(jnp.sum(jnp.exp(s), axis=-1, keepdims=True))
    o_ref[...] = s - lse


# ----------------------------- kernel wrappers ------------------------------

_VMEM = functools.partial(pl.BlockSpec, memory_space=pltpu.MemorySpace.VMEM)


def conv_layer(x, r_mat, b_row):
    """x: (B, H, W*C) bf16 -> (B, OH, OW*OC) bf16  (conv + bias + ReLU)."""
    B, H, WC = x.shape
    KH, _, OWOC = r_mat.shape
    OH = H - KH + 1
    return pl.pallas_call(
        functools.partial(_conv_kernel, n_kh=KH, oh=OH),
        out_shape=jax.ShapeDtypeStruct((B, OH, OWOC), x.dtype),
        grid=(B,),
        in_specs=[
            pl.BlockSpec((1, H, WC), lambda i: (i, 0, 0)),
            pl.BlockSpec((KH, WC, OWOC), lambda i: (0, 0, 0)),  # resident, no re-DMA
            pl.BlockSpec((1, OWOC), lambda i: (0, 0)),          # resident
        ],
        out_specs=pl.BlockSpec((1, OH, OWOC), lambda i: (i, 0, 0)),
        compiler_params=pltpu.CompilerParams(
            dimension_semantics=("parallel",),   # v7x: shard batch over 2 TCs
            vmem_limit_bytes=32 * 1024 * 1024,   # explicit, safe on v5e/v6e/v7x
        ),
    )(x, r_mat, b_row)


def fc_loc_head(x, w1, b1, w2, b2):
    B = x.shape[0]
    return pl.pallas_call(
        _fc_loc_kernel,
        out_shape=jax.ShapeDtypeStruct((B, w2.shape[1]), jnp.float32),
        in_specs=[_VMEM() for _ in range(5)],
        out_specs=_VMEM(),
    )(x, w1, b1, w2, b2)


def cls_head(x, w1, b1, w2, b2):
    B = x.shape[0]
    return pl.pallas_call(
        _cls_head_kernel,
        out_shape=jax.ShapeDtypeStruct((B, w2.shape[1]), jnp.float32),
        in_specs=[_VMEM() for _ in range(5)],
        out_specs=_VMEM(),
    )(x, w1, b1, w2, b2)


# ------------------------------ JAX glue ops -------------------------------

def maxpool2(a, c):
    """nn.MaxPool2d(2, stride=2) (floor) on the (B, H, W*C) layout. Pure
    reshape-max (no transposes)."""
    B, H, WC = a.shape
    W = WC // c
    H2, W2 = H // 2, W // 2
    a = a.reshape(B, H, W, c)[:, :H2 * 2, :W2 * 2, :]
    a = a.reshape(B, H2, 2, W2, 2, c).max(axis=(2, 4))
    return a.reshape(B, H2, W2 * c)


def affine_grid_sample(x, theta):
    """F.affine_grid + F.grid_sample (bilinear, zeros padding,
    align_corners=False) as dense interpolation-matrix matmuls -- no gather.
    x: (B, H, W) single channel f32, theta: (B, 2, 3)."""
    B, H, W = x.shape
    xs = (2.0 * jnp.arange(W, dtype=jnp.float32) + 1.0) / W - 1.0
    ys = (2.0 * jnp.arange(H, dtype=jnp.float32) + 1.0) / H - 1.0
    xg, yg = jnp.meshgrid(xs, ys)                            # (H, W)
    base = jnp.stack([xg, yg, jnp.ones_like(xg)], axis=-1)   # (H, W, 3)
    grid = jnp.einsum('hwk,bjk->bhwj', base, theta)          # (B, H, W, 2)
    gx = grid[..., 0].reshape(B, H * W)
    gy = grid[..., 1].reshape(B, H * W)
    ix = ((gx + 1.0) * W - 1.0) * 0.5
    iy = ((gy + 1.0) * H - 1.0) * 0.5
    ix0 = jnp.floor(ix)
    iy0 = jnp.floor(iy)
    wx1, wy1 = ix - ix0, iy - iy0
    wx0, wy0 = 1.0 - wx1, 1.0 - wy1
    # Out-of-range corner indices give all-zero one-hot rows == zeros padding.
    # Clip only so the int cast stays sane; [-2, dim] keeps both corners of a
    # fully-out-of-range sample invalid.
    ix0i = jnp.clip(ix0, -2.0, float(W)).astype(jnp.int32)
    iy0i = jnp.clip(iy0, -2.0, float(H)).astype(jnp.int32)
    ry = (wy0[..., None] * jax.nn.one_hot(iy0i, H, dtype=jnp.float32)
          + wy1[..., None] * jax.nn.one_hot(iy0i + 1, H, dtype=jnp.float32))
    cx = (wx0[..., None] * jax.nn.one_hot(ix0i, W, dtype=jnp.float32)
          + wx1[..., None] * jax.nn.one_hot(ix0i + 1, W, dtype=jnp.float32))
    rows = jnp.einsum('bph,bhw->bpw', ry, x)                 # (B, P, W)
    out = jnp.sum(rows * cx, axis=-1)                        # (B, P)
    return out.reshape(B, H, W)


# ----------------------- parameter preparation (once) -----------------------

def _build_conv_mats(w, b, width):
    """PyTorch Conv2d weight (OC, C, KH, KW) -> banded matmul operands.

    R[ki, w*C + c, ow*OC + oc] = w[oc, c, ki, w - ow] when 0 <= w-ow < KW else 0,
    so that   out[oh, ow*OC + oc] = sum_ki  X[oh+ki, :] @ R[ki]
    with X the (H, W*C) channels-last-merged input slab."""
    OC, C, KH, KW = w.shape
    OW = width - KW + 1
    wt = jnp.transpose(w, (2, 3, 1, 0))                          # (KH, KW, C, OC)
    kj = jnp.arange(width)[:, None] - jnp.arange(OW)[None, :]    # (W, OW)
    valid = (kj >= 0) & (kj < KW)
    band = wt[:, jnp.clip(kj, 0, KW - 1)] * valid[None, :, :, None, None]
    r_mat = band.transpose(0, 1, 3, 2, 4).reshape(KH, width * C, OW * OC)
    b_row = jnp.tile(b, OW).reshape(1, OW * OC)
    return r_mat.astype(jnp.bfloat16), b_row.astype(jnp.float32)


def _permute_fc_rows(w, c, h, width):
    """PyTorch NCHW flatten order -> our channels-last (H, W, C) flatten order."""
    return w.reshape(c, h, width, -1).transpose(1, 2, 0, 3).reshape(c * h * width, -1)


def prepare(params):
    """One-time transform of PyTorch-layout parameters into kernel operands."""
    p = {}
    p['loc1_R'], p['loc1_b'] = _build_conv_mats(params['loc_c1_w'], params['loc_c1_b'], 28)
    p['loc2_R'], p['loc2_b'] = _build_conv_mats(params['loc_c2_w'], params['loc_c2_b'], 11)
    p['cls1_R'], p['cls1_b'] = _build_conv_mats(params['cls_c1_w'], params['cls_c1_b'], 28)
    p['cls2_R'], p['cls2_b'] = _build_conv_mats(params['cls_c2_w'], params['cls_c2_b'], 12)
    p['fc_loc1_w'] = _permute_fc_rows(params['fc_loc1_w'], 10, 3, 3)
    p['fc_loc1_b'] = params['fc_loc1_b'].reshape(1, -1)
    p['fc_loc2_w'] = params['fc_loc2_w']
    p['fc_loc2_b'] = params['fc_loc2_b'].reshape(1, -1)
    p['fc1_w'] = _permute_fc_rows(params['fc1_w'], 20, 4, 4)
    p['fc1_b'] = params['fc1_b'].reshape(1, -1)
    p['fc2_w'] = params['fc2_w']
    p['fc2_b'] = params['fc2_b'].reshape(1, -1)
    return p


# --------------------------- parameters / forward ---------------------------

def init_params(key):
    """Deterministic synthetic init in PyTorch layout.  fc_loc[2] (theta head)
    matches the module's explicit init exactly (zero weight, identity bias)."""
    ks = jax.random.split(key, 12)

    def rnd(k, shape, scale):
        return scale * jax.random.normal(k, shape, dtype=jnp.float32)

    return {
        # localization: Conv2d(1,8,7), Conv2d(8,10,5)
        'loc_c1_w': rnd(ks[0], (8, 1, 7, 7), 0.1),
        'loc_c1_b': rnd(ks[1], (8,), 0.1),
        'loc_c2_w': rnd(ks[2], (10, 8, 5, 5), 0.05),
        'loc_c2_b': rnd(ks[3], (10,), 0.05),
        # fc_loc: Linear(90,32), Linear(32,6)
        'fc_loc1_w': rnd(ks[4], (90, 32), 0.05),
        'fc_loc1_b': rnd(ks[5], (32,), 0.05),
        'fc_loc2_w': jnp.zeros((32, 6), jnp.float32),
        'fc_loc2_b': jnp.array([1, 0, 0, 0, 1, 0], jnp.float32),
        # classifier: Conv2d(1,10,5), Conv2d(10,20,5), Linear(320,50), Linear(50,10)
        'cls_c1_w': rnd(ks[6], (10, 1, 5, 5), 0.1),
        'cls_c1_b': rnd(ks[7], (10,), 0.1),
        'cls_c2_w': rnd(ks[8], (20, 10, 5, 5), 0.05),
        'cls_c2_b': rnd(ks[9], (20,), 0.05),
        'fc1_w': rnd(ks[10], (320, 50), 0.05),
        'fc1_b': jnp.zeros((50,), jnp.float32),
        'fc2_w': rnd(ks[11], (50, 10), 0.05),
        'fc2_b': jnp.zeros((10,), jnp.float32),
    }


def forward(p, x):
    """x: (B, 1, 28, 28) NCHW f32 -> (B, 10) log-probabilities."""
    B = x.shape[0]
    x0 = x.reshape(B, 28, 28)                      # C=1: (B, H, W*C) layout (free)
    xb = x0.astype(jnp.bfloat16)

    # ---- stn_theta: localization convs (+fused ReLU) + fused fc_loc ----
    h = conv_layer(xb, p['loc1_R'], p['loc1_b'])   # (B, 22, 22*8)
    h = maxpool2(h, 8)                             # (B, 11, 11*8)
    h = conv_layer(h, p['loc2_R'], p['loc2_b'])    # (B, 7, 7*10)
    h = maxpool2(h, 10)                            # (B, 3, 3*10)
    theta = fc_loc_head(h.reshape(B, 90), p['fc_loc1_w'], p['fc_loc1_b'],
                        p['fc_loc2_w'], p['fc_loc2_b'])
    theta = theta.reshape(B, 2, 3)

    # ---- stn: affine grid + bilinear sample (matmul formulation, no gather) ----
    xt = affine_grid_sample(x0, theta)             # (B, 28, 28) f32
    xt = xt.astype(jnp.bfloat16)

    # ---- classifier convs (+fused ReLU) + fused head (fc1+ReLU+fc2+log_softmax) ----
    c = conv_layer(xt, p['cls1_R'], p['cls1_b'])   # (B, 24, 24*10)
    c = maxpool2(c, 10)                            # (B, 12, 12*10)
    c = conv_layer(c, p['cls2_R'], p['cls2_b'])    # (B, 8, 8*20)
    # Dropout2d / Dropout: identity (eval-mode forward)
    c = maxpool2(c, 20)                            # (B, 4, 4*20)
    logp = cls_head(c.reshape(B, 320), p['fc1_w'], p['fc1_b'],
                    p['fc2_w'], p['fc2_b'])
    return logp                                    # (B, 10)


# --------------------------- pure-JAX f32 reference -------------------------

def _ref_conv(x, w, b):
    out = jax.lax.conv_general_dilated(
        x, w, window_strides=(1, 1), padding='VALID',
        dimension_numbers=('NCHW', 'OIHW', 'NCHW'))
    return out + b[None, :, None, None]


def _ref_maxpool2(x):
    B, C, H, W = x.shape
    H2, W2 = H // 2, W // 2
    x = x[:, :, :H2 * 2, :W2 * 2]
    return x.reshape(B, C, H2, 2, W2, 2).max(axis=(3, 5))


def _ref_grid_sample(x, theta):
    """Gather-based bilinear sampler (align_corners=False, zeros padding)."""
    B, C, H, W = x.shape
    xs = (2.0 * jnp.arange(W, dtype=jnp.float32) + 1.0) / W - 1.0
    ys = (2.0 * jnp.arange(H, dtype=jnp.float32) + 1.0) / H - 1.0
    xg, yg = jnp.meshgrid(xs, ys)
    base = jnp.stack([xg, yg, jnp.ones_like(xg)], axis=-1)
    grid = jnp.einsum('hwk,bjk->bhwj', base, theta)
    gx, gy = grid[..., 0], grid[..., 1]
    ix = ((gx + 1.0) * W - 1.0) * 0.5
    iy = ((gy + 1.0) * H - 1.0) * 0.5
    ix0 = jnp.floor(ix)
    iy0 = jnp.floor(iy)
    wx1, wy1 = ix - ix0, iy - iy0
    wx0, wy0 = 1.0 - wx1, 1.0 - wy1

    def gather(img, iyf, ixf):
        valid = (ixf >= 0) & (ixf <= W - 1) & (iyf >= 0) & (iyf <= H - 1)
        ic = jnp.clip(ixf, 0, W - 1).astype(jnp.int32)
        jc = jnp.clip(iyf, 0, H - 1).astype(jnp.int32)
        return img[:, jc, ic] * valid.astype(img.dtype)[None]

    def one(img, iy0b, ix0b, wy0b, wx0b, wy1b, wx1b):
        v00 = gather(img, iy0b, ix0b)
        v01 = gather(img, iy0b, ix0b + 1.0)
        v10 = gather(img, iy0b + 1.0, ix0b)
        v11 = gather(img, iy0b + 1.0, ix0b + 1.0)
        return (v00 * (wy0b * wx0b)[None] + v01 * (wy0b * wx1b)[None]
                + v10 * (wy1b * wx0b)[None] + v11 * (wy1b * wx1b)[None])

    return jax.vmap(one)(x, iy0, ix0, wy0, wx0, wy1, wx1)


def reference_forward(params, x):
    B = x.shape[0]
    xs = jnp.maximum(_ref_maxpool2(_ref_conv(x, params['loc_c1_w'], params['loc_c1_b'])), 0.0)
    xs = jnp.maximum(_ref_maxpool2(_ref_conv(xs, params['loc_c2_w'], params['loc_c2_b'])), 0.0)
    xs = xs.reshape(B, -1)
    h = jnp.maximum(xs @ params['fc_loc1_w'] + params['fc_loc1_b'], 0.0)
    theta = (h @ params['fc_loc2_w'] + params['fc_loc2_b']).reshape(B, 2, 3)
    xt = _ref_grid_sample(x, theta)
    c = jnp.maximum(_ref_maxpool2(_ref_conv(xt, params['cls_c1_w'], params['cls_c1_b'])), 0.0)
    c = jnp.maximum(_ref_maxpool2(_ref_conv(c, params['cls_c2_w'], params['cls_c2_b'])), 0.0)
    c = c.reshape(B, -1)
    c = jnp.maximum(c @ params['fc1_w'] + params['fc1_b'], 0.0)
    logits = c @ params['fc2_w'] + params['fc2_b']
    return jax.nn.log_softmax(logits, axis=-1)


# ----------------------------------- main -----------------------------------

if __name__ == "__main__":
    key = jax.random.PRNGKey(0)
    pkey, xkey, tkey = jax.random.split(key, 3)
    params = init_params(pkey)
    x = jax.random.normal(xkey, (2, 1, 28, 28), dtype=jnp.float32)

    prep = prepare(params)                    # one-time weight -> operand transform
    out = jax.jit(forward)(prep, x)
    jax.block_until_ready(out)

    assert out.shape == (2, 10)
    assert bool(jnp.all(jnp.isfinite(out)))
    assert bool(jnp.allclose(jnp.sum(jnp.exp(out), axis=1), 1.0, atol=1e-4))

    # cross-check against a pure-JAX f32 reference (bf16 conv path -> loose tol)
    ref = jax.jit(reference_forward)(params, x)
    max_diff = float(jnp.max(jnp.abs(out - ref)))
    assert max_diff < 5e-2, f"pallas vs reference max diff {max_diff}"

    # cross-check the matmul-form grid sampler against the gather-based one
    theta_r = (jnp.array([[1.0, 0.0, 0.0], [0.0, 1.0, 0.0]], jnp.float32)
               + 0.1 * jax.random.normal(tkey, (2, 2, 3), dtype=jnp.float32))
    samp_a = affine_grid_sample(x[:, 0], theta_r)
    samp_b = _ref_grid_sample(x, theta_r)[:, 0]
    assert bool(jnp.allclose(samp_a, samp_b, atol=1e-4))

    print("KERNEL_OK")
</pallas_src>

<mosaic_0001>
module attributes {stable_mosaic.version = 11 : i64} {
  func.func @_conv_kernel(%arg0: i32, %arg1: memref<1x28x28xbf16, #tpu.memory_space<vmem>>, %arg2: memref<7x28x176xbf16, #tpu.memory_space<vmem>>, %arg3: memref<1x176xf32, #tpu.memory_space<vmem>>, %arg4: memref<1x22x176xbf16, #tpu.memory_space<vmem>>) attributes {dimension_semantics = [#tpu.dimension_semantics<parallel>], iteration_bounds = array<i64: 2>, scalar_prefetch = 0 : i64, scratch_operands = 0 : i64, tpu.core_type = #tpu.core_type<tc>, window_params = [{transform_indices = @transform_0, window_bounds = array<i64: 1, 28, 28>}, {pipeline_mode = #tpu.pipeline_mode<synchronous>, transform_indices = @transform_1, window_bounds = array<i64: 7, 28, 176>}, {pipeline_mode = #tpu.pipeline_mode<synchronous>, transform_indices = @transform_2, window_bounds = array<i64: 1, 176>}, {transform_indices = @transform_3, window_bounds = array<i64: 1, 22, 176>}]} {
    %c0 = arith.constant 0 : index
    %c0_0 = arith.constant 0 : index
    %c0_1 = arith.constant 0 : index
    %0 = vector.load %arg1[%c0, %c0_0, %c0_1] : memref<1x28x28xbf16, #tpu.memory_space<vmem>>, vector<1x22x28xbf16>
    %1 = vector.shape_cast %0 : vector<1x22x28xbf16> to vector<22x28xbf16>
    %c0_2 = arith.constant 0 : index
    %c0_3 = arith.constant 0 : index
    %c0_4 = arith.constant 0 : index
    %2 = vector.load %arg2[%c0_2, %c0_3, %c0_4] : memref<7x28x176xbf16, #tpu.memory_space<vmem>>, vector<1x28x176xbf16>
    %3 = vector.shape_cast %2 : vector<1x28x176xbf16> to vector<28x176xbf16>
    %cst = arith.constant dense<0.000000e+00> : vector<22x176xf32>
    %4 = tpu.matmul %1, %3, %cst {dimension_numbers = #tpu.dot_dimension_numbers<[1], [0], [0], [1], [0, 0, 1, 1], [], []>} : vector<22x28xbf16>, vector<28x176xbf16>, vector<22x176xf32> -> vector<22x176xf32>
    %c0_5 = arith.constant 0 : index
    %c1 = arith.constant 1 : index
    %c0_6 = arith.constant 0 : index
    %5 = vector.load %arg1[%c0_5, %c1, %c0_6] : memref<1x28x28xbf16, #tpu.memory_space<vmem>>, vector<1x22x28xbf16>
    %6 = vector.shape_cast %5 : vector<1x22x28xbf16> to vector<22x28xbf16>
    %c1_7 = arith.constant 1 : index
    %c0_8 = arith.constant 0 : index
    %c0_9 = arith.constant 0 : index
    %7 = vector.load %arg2[%c1_7, %c0_8, %c0_9] : memref<7x28x176xbf16, #tpu.memory_space<vmem>>, vector<1x28x176xbf16>
    %8 = vector.shape_cast %7 : vector<1x28x176xbf16> to vector<28x176xbf16>
    %cst_10 = arith.constant dense<0.000000e+00> : vector<22x176xf32>
    %9 = tpu.matmul %6, %8, %cst_10 {dimension_numbers = #tpu.dot_dimension_numbers<[1], [0], [0], [1], [0, 0, 1, 1], [], []>} : vector<22x28xbf16>, vector<28x176xbf16>, vector<22x176xf32> -> vector<22x176xf32>
    %10 = arith.addf %4, %9 : vector<22x176xf32>
    %c0_11 = arith.constant 0 : index
    %c2 = arith.constant 2 : index
    %c0_12 = arith.constant 0 : index
    %11 = vector.load %arg1[%c0_11, %c2, %c0_12] : memref<1x28x28xbf16, #tpu.memory_space<vmem>>, vector<1x22x28xbf16>
    %12 = vector.shape_cast %11 : vector<1x22x28xbf16> to vector<22x28xbf16>
    %c2_13 = arith.constant 2 : index
    %c0_14 = arith.constant 0 : index
    %c0_15 = arith.constant 0 : index
    %13 = vector.load %arg2[%c2_13, %c0_14, %c0_15] : memref<7x28x176xbf16, #tpu.memory_space<vmem>>, vector<1x28x176xbf16>
    %14 = vector.shape_cast %13 : vector<1x28x176xbf16> to vector<28x176xbf16>
    %cst_16 = arith.constant dense<0.000000e+00> : vector<22x176xf32>
    %15 = tpu.matmul %12, %14, %cst_16 {dimension_numbers = #tpu.dot_dimension_numbers<[1], [0], [0], [1], [0, 0, 1, 1], [], []>} : vector<22x28xbf16>, vector<28x176xbf16>, vector<22x176xf32> -> vector<22x176xf32>
    %16 = arith.addf %10, %15 : vector<22x176xf32>
    %c0_17 = arith.constant 0 : index
    %c3 = arith.constant 3 : index
    %c0_18 = arith.constant 0 : index
    %17 = vector.load %arg1[%c0_17, %c3, %c0_18] : memref<1x28x28xbf16, #tpu.memory_space<vmem>>, vector<1x22x28xbf16>
    %18 = vector.shape_cast %17 : vector<1x22x28xbf16> to vector<22x28xbf16>
    %c3_19 = arith.constant 3 : index
    %c0_20 = arith.constant 0 : index
    %c0_21 = arith.constant 0 : index
    %19 = vector.load %arg2[%c3_19, %c0_20, %c0_21] : memref<7x28x176xbf16, #tpu.memory_space<vmem>>, vector<1x28x176xbf16>
    %20 = vector.shape_cast %19 : vector<1x28x176xbf16> to vector<28x176xbf16>
    %cst_22 = arith.constant dense<0.000000e+00> : vector<22x176xf32>
    %21 = tpu.matmul %18, %20, %cst_22 {dimension_numbers = #tpu.dot_dimension_numbers<[1], [0], [0], [1], [0, 0, 1, 1], [], []>} : vector<22x28xbf16>, vector<28x176xbf16>, vector<22x176xf32> -> vector<22x176xf32>
    %22 = arith.addf %16, %21 : vector<22x176xf32>
    %c0_23 = arith.constant 0 : index
    %c4 = arith.constant 4 : index
    %c0_24 = arith.constant 0 : index
    %23 = vector.load %arg1[%c0_23, %c4, %c0_24] : memref<1x28x28xbf16, #tpu.memory_space<vmem>>, vector<1x22x28xbf16>
    %24 = vector.shape_cast %23 : vector<1x22x28xbf16> to vector<22x28xbf16>
    %c4_25 = arith.constant 4 : index
    %c0_26 = arith.constant 0 : index
    %c0_27 = arith.constant 0 : index
    %25 = vector.load %arg2[%c4_25, %c0_26, %c0_27] : memref<7x28x176xbf16, #tpu.memory_space<vmem>>, vector<1x28x176xbf16>
    %26 = vector.shape_cast %25 : vector<1x28x176xbf16> to vector<28x176xbf16>
    %cst_28 = arith.constant dense<0.000000e+00> : vector<22x176xf32>
    %27 = tpu.matmul %24, %26, %cst_28 {dimension_numbers = #tpu.dot_dimension_numbers<[1], [0], [0], [1], [0, 0, 1, 1], [], []>} : vector<22x28xbf16>, vector<28x176xbf16>, vector<22x176xf32> -> vector<22x176xf32>
    %28 = arith.addf %22, %27 : vector<22x176xf32>
    %c0_29 = arith.constant 0 : index
    %c5 = arith.constant 5 : index
    %c0_30 = arith.constant 0 : index
    %29 = vector.load %arg1[%c0_29, %c5, %c0_30] : memref<1x28x28xbf16, #tpu.memory_space<vmem>>, vector<1x22x28xbf16>
    %30 = vector.shape_cast %29 : vector<1x22x28xbf16> to vector<22x28xbf16>
    %c5_31 = arith.constant 5 : index
    %c0_32 = arith.constant 0 : index
    %c0_33 = arith.constant 0 : index
    %31 = vector.load %arg2[%c5_31, %c0_32, %c0_33] : memref<7x28x176xbf16, #tpu.memory_space<vmem>>, vector<1x28x176xbf16>
    %32 = vector.shape_cast %31 : vector<1x28x176xbf16> to vector<28x176xbf16>
    %cst_34 = arith.constant dense<0.000000e+00> : vector<22x176xf32>
    %33 = tpu.matmul %30, %32, %cst_34 {dimension_numbers = #tpu.dot_dimension_numbers<[1], [0], [0], [1], [0, 0, 1, 1], [], []>} : vector<22x28xbf16>, vector<28x176xbf16>, vector<22x176xf32> -> vector<22x176xf32>
    %34 = arith.addf %28, %33 : vector<22x176xf32>
    %c0_35 = arith.constant 0 : index
    %c6 = arith.constant 6 : index
    %c0_36 = arith.constant 0 : index
    %35 = vector.load %arg1[%c0_35, %c6, %c0_36] : memref<1x28x28xbf16, #tpu.memory_space<vmem>>, vector<1x22x28xbf16>
    %36 = vector.shape_cast %35 : vector<1x22x28xbf16> to vector<22x28xbf16>
    %c6_37 = arith.constant 6 : index
    %c0_38 = arith.constant 0 : index
    %c0_39 = arith.constant 0 : index
    %37 = vector.load %arg2[%c6_37, %c0_38, %c0_39] : memref<7x28x176xbf16, #tpu.memory_space<vmem>>, vector<1x28x176xbf16>
    %38 = vector.shape_cast %37 : vector<1x28x176xbf16> to vector<28x176xbf16>
    %cst_40 = arith.constant dense<0.000000e+00> : vector<22x176xf32>
    %39 = tpu.matmul %36, %38, %cst_40 {dimension_numbers = #tpu.dot_dimension_numbers<[1], [0], [0], [1], [0, 0, 1, 1], [], []>} : vector<22x28xbf16>, vector<28x176xbf16>, vector<22x176xf32> -> vector<22x176xf32>
    %40 = arith.addf %34, %39 : vector<22x176xf32>
    %c0_41 = arith.constant 0 : index
    %c0_42 = arith.constant 0 : index
    %41 = vector.load %arg3[%c0_41, %c0_42] : memref<1x176xf32, #tpu.memory_space<vmem>>, vector<1x176xf32>
    %42 = vector.broadcast %41 : vector<1x176xf32> to vector<22x176xf32>
    %43 = arith.addf %40, %42 : vector<22x176xf32>
    %cst_43 = arith.constant 0.000000e+00 : f32
    %44 = vector.broadcast %cst_43 : f32 to vector<22x176xf32>
    %45 = arith.maximumf %43, %44 : vector<22x176xf32>
    %46 = arith.truncf %45 : vector<22x176xf32> to vector<22x176xbf16>
    %c0_44 = arith.constant 0 : index
    %c0_45 = arith.constant 0 : index
    %c0_46 = arith.constant 0 : index
    %47 = vector.load %arg4[%c0_44, %c0_45, %c0_46] : memref<1x22x176xbf16, #tpu.memory_space<vmem>>, vector<1x22x176xbf16>
    %48 = vector.shape_cast %47 : vector<1x22x176xbf16> to vector<22x176xbf16>
    %49 = vector.shape_cast %46 : vector<22x176xbf16> to vector<1x22x176xbf16>
    tpu.vector_store %arg4[%c0_44, %c0_45, %c0_46], %49 {strides = array<i32>} : memref<1x22x176xbf16, #tpu.memory_space<vmem>>, vector<1x22x176xbf16>,
    return
  }
  func.func @transform_0(%arg0: i32) -> (i32, i32, i32) {
    %c0_i32 = arith.constant 0 : i32
    %c0_i32_0 = arith.constant 0 : i32
    %c0_i32_1 = arith.constant 0 : i32
    return %arg0, %c0_i32, %c0_i32_0 : i32, i32, i32
  }
  func.func @transform_1(%arg0: i32) -> (i32, i32, i32) {
    %c0_i32 = arith.constant 0 : i32
    %c0_i32_0 = arith.constant 0 : i32
    %c0_i32_1 = arith.constant 0 : i32
    %c0_i32_2 = arith.constant 0 : i32
    return %c0_i32, %c0_i32_0, %c0_i32_1 : i32, i32, i32
  }
  func.func @transform_2(%arg0: i32) -> (i32, i32) {
    %c0_i32 = arith.constant 0 : i32
    %c0_i32_0 = arith.constant 0 : i32
    %c0_i32_1 = arith.constant 0 : i32
    return %c0_i32, %c0_i32_0 : i32, i32
  }
  func.func @transform_3(%arg0: i32) -> (i32, i32, i32) {
    %c0_i32 = arith.constant 0 : i32
    %c0_i32_0 = arith.constant 0 : i32
    %c0_i32_1 = arith.constant 0 : i32
    return %arg0, %c0_i32, %c0_i32_0 : i32, i32, i32
  }
}

module attributes {stable_mosaic.version = 11 : i64} {
  func.func @_conv_kernel(%arg0: i32, %arg1: memref<1x11x88xbf16, #tpu.memory_space<vmem>>, %arg2: memref<5x88x70xbf16, #tpu.memory_space<vmem>>, %arg3: memref<1x70xf32, #tpu.memory_space<vmem>>, %arg4: memref<1x7x70xbf16, #tpu.memory_space<vmem>>) attributes {dimension_semantics = [#tpu.dimension_semantics<parallel>], iteration_bounds = array<i64: 2>, scalar_prefetch = 0 : i64, scratch_operands = 0 : i64, tpu.core_type = #tpu.core_type<tc>, window_params = [{transform_indices = @transform_0, window_bounds = array<i64: 1, 11, 88>}, {pipeline_mode = #tpu.pipeline_mode<synchronous>, transform_indices = @transform_1, window_bounds = array<i64: 5, 88, 70>}, {pipeline_mode = #tpu.pipeline_mode<synchronous>, transform_indices = @transform_2, window_bounds = array<i64: 1, 70>}, {transform_indices = @transform_3, window_bounds = array<i64: 1, 7, 70>}]} {
    %c0 = arith.constant 0 : index
    %c0_0 = arith.constant 0 : index
    %c0_1 = arith.constant 0 : index
    %0 = vector.load %arg1[%c0, %c0_0, %c0_1] : memref<1x11x88xbf16, #tpu.memory_space<vmem>>, vector<1x7x88xbf16>
    %1 = vector.shape_cast %0 : vector<1x7x88xbf16> to vector<7x88xbf16>
    %c0_2 = arith.constant 0 : index
    %c0_3 = arith.constant 0 : index
    %c0_4 = arith.constant 0 : index
    %2 = vector.load %arg2[%c0_2, %c0_3, %c0_4] : memref<5x88x70xbf16, #tpu.memory_space<vmem>>, vector<1x88x70xbf16>
    %3 = vector.shape_cast %2 : vector<1x88x70xbf16> to vector<88x70xbf16>
    %cst = arith.constant dense<0.000000e+00> : vector<7x70xf32>
    %4 = tpu.matmul %1, %3, %cst {dimension_numbers = #tpu.dot_dimension_numbers<[1], [0], [0], [1], [0, 0, 1, 1], [], []>} : vector<7x88xbf16>, vector<88x70xbf16>, vector<7x70xf32> -> vector<7x70xf32>
    %c0_5 = arith.constant 0 : index
    %c1 = arith.constant 1 : index
    %c0_6 = arith.constant 0 : index
    %5 = vector.load %arg1[%c0_5, %c1, %c0_6] : memref<1x11x88xbf16, #tpu.memory_space<vmem>>, vector<1x7x88xbf16>
    %6 = vector.shape_cast %5 : vector<1x7x88xbf16> to vector<7x88xbf16>
    %c1_7 = arith.constant 1 : index
    %c0_8 = arith.constant 0 : index
    %c0_9 = arith.constant 0 : index
    %7 = vector.load %arg2[%c1_7, %c0_8, %c0_9] : memref<5x88x70xbf16, #tpu.memory_space<vmem>>, vector<1x88x70xbf16>
    %8 = vector.shape_cast %7 : vector<1x88x70xbf16> to vector<88x70xbf16>
    %cst_10 = arith.constant dense<0.000000e+00> : vector<7x70xf32>
    %9 = tpu.matmul %6, %8, %cst_10 {dimension_numbers = #tpu.dot_dimension_numbers<[1], [0], [0], [1], [0, 0, 1, 1], [], []>} : vector<7x88xbf16>, vector<88x70xbf16>, vector<7x70xf32> -> vector<7x70xf32>
    %10 = arith.addf %4, %9 : vector<7x70xf32>
    %c0_11 = arith.constant 0 : index
    %c2 = arith.constant 2 : index
    %c0_12 = arith.constant 0 : index
    %11 = vector.load %arg1[%c0_11, %c2, %c0_12] : memref<1x11x88xbf16, #tpu.memory_space<vmem>>, vector<1x7x88xbf16>
    %12 = vector.shape_cast %11 : vector<1x7x88xbf16> to vector<7x88xbf16>
    %c2_13 = arith.constant 2 : index
    %c0_14 = arith.constant 0 : index
    %c0_15 = arith.constant 0 : index
    %13 = vector.load %arg2[%c2_13, %c0_14, %c0_15] : memref<5x88x70xbf16, #tpu.memory_space<vmem>>, vector<1x88x70xbf16>
    %14 = vector.shape_cast %13 : vector<1x88x70xbf16> to vector<88x70xbf16>
    %cst_16 = arith.constant dense<0.000000e+00> : vector<7x70xf32>
    %15 = tpu.matmul %12, %14, %cst_16 {dimension_numbers = #tpu.dot_dimension_numbers<[1], [0], [0], [1], [0, 0, 1, 1], [], []>} : vector<7x88xbf16>, vector<88x70xbf16>, vector<7x70xf32> -> vector<7x70xf32>
    %16 = arith.addf %10, %15 : vector<7x70xf32>
    %c0_17 = arith.constant 0 : index
    %c3 = arith.constant 3 : index
    %c0_18 = arith.constant 0 : index
    %17 = vector.load %arg1[%c0_17, %c3, %c0_18] : memref<1x11x88xbf16, #tpu.memory_space<vmem>>, vector<1x7x88xbf16>
    %18 = vector.shape_cast %17 : vector<1x7x88xbf16> to vector<7x88xbf16>
    %c3_19 = arith.constant 3 : index
    %c0_20 = arith.constant 0 : index
    %c0_21 = arith.constant 0 : index
    %19 = vector.load %arg2[%c3_19, %c0_20, %c0_21] : memref<5x88x70xbf16, #tpu.memory_space<vmem>>, vector<1x88x70xbf16>
    %20 = vector.shape_cast %19 : vector<1x88x70xbf16> to vector<88x70xbf16>
    %cst_22 = arith.constant dense<0.000000e+00> : vector<7x70xf32>
    %21 = tpu.matmul %18, %20, %cst_22 {dimension_numbers = #tpu.dot_dimension_numbers<[1], [0], [0], [1], [0, 0, 1, 1], [], []>} : vector<7x88xbf16>, vector<88x70xbf16>, vector<7x70xf32> -> vector<7x70xf32>
    %22 = arith.addf %16, %21 : vector<7x70xf32>
    %c0_23 = arith.constant 0 : index
    %c4 = arith.constant 4 : index
    %c0_24 = arith.constant 0 : index
    %23 = vector.load %arg1[%c0_23, %c4, %c0_24] : memref<1x11x88xbf16, #tpu.memory_space<vmem>>, vector<1x7x88xbf16>
    %24 = vector.shape_cast %23 : vector<1x7x88xbf16> to vector<7x88xbf16>
    %c4_25 = arith.constant 4 : index
    %c0_26 = arith.constant 0 : index
    %c0_27 = arith.constant 0 : index
    %25 = vector.load %arg2[%c4_25, %c0_26, %c0_27] : memref<5x88x70xbf16, #tpu.memory_space<vmem>>, vector<1x88x70xbf16>
    %26 = vector.shape_cast %25 : vector<1x88x70xbf16> to vector<88x70xbf16>
    %cst_28 = arith.constant dense<0.000000e+00> : vector<7x70xf32>
    %27 = tpu.matmul %24, %26, %cst_28 {dimension_numbers = #tpu.dot_dimension_numbers<[1], [0], [0], [1], [0, 0, 1, 1], [], []>} : vector<7x88xbf16>, vector<88x70xbf16>, vector<7x70xf32> -> vector<7x70xf32>
    %28 = arith.addf %22, %27 : vector<7x70xf32>
    %c0_29 = arith.constant 0 : index
    %c0_30 = arith.constant 0 : index
    %29 = vector.load %arg3[%c0_29, %c0_30] : memref<1x70xf32, #tpu.memory_space<vmem>>, vector<1x70xf32>
    %30 = vector.broadcast %29 : vector<1x70xf32> to vector<7x70xf32>
    %31 = arith.addf %28, %30 : vector<7x70xf32>
    %cst_31 = arith.constant 0.000000e+00 : f32
    %32 = vector.broadcast %cst_31 : f32 to vector<7x70xf32>
    %33 = arith.maximumf %31, %32 : vector<7x70xf32>
    %34 = arith.truncf %33 : vector<7x70xf32> to vector<7x70xbf16>
    %c0_32 = arith.constant 0 : index
    %c0_33 = arith.constant 0 : index
    %c0_34 = arith.constant 0 : index
    %35 = vector.load %arg4[%c0_32, %c0_33, %c0_34] : memref<1x7x70xbf16, #tpu.memory_space<vmem>>, vector<1x7x70xbf16>
    %36 = vector.shape_cast %35 : vector<1x7x70xbf16> to vector<7x70xbf16>
    %37 = vector.shape_cast %34 : vector<7x70xbf16> to vector<1x7x70xbf16>
    tpu.vector_store %arg4[%c0_32, %c0_33, %c0_34], %37 {strides = array<i32>} : memref<1x7x70xbf16, #tpu.memory_space<vmem>>, vector<1x7x70xbf16>,
    return
  }
  func.func @transform_0(%arg0: i32) -> (i32, i32, i32) {
    %c0_i32 = arith.constant 0 : i32
    %c0_i32_0 = arith.constant 0 : i32
    %c0_i32_1 = arith.constant 0 : i32
    return %arg0, %c0_i32, %c0_i32_0 : i32, i32, i32
  }
  func.func @transform_1(%arg0: i32) -> (i32, i32, i32) {
    %c0_i32 = arith.constant 0 : i32
    %c0_i32_0 = arith.constant 0 : i32
    %c0_i32_1 = arith.constant 0 : i32
    %c0_i32_2 = arith.constant 0 : i32
    return %c0_i32, %c0_i32_0, %c0_i32_1 : i32, i32, i32
  }
  func.func @transform_2(%arg0: i32) -> (i32, i32) {
    %c0_i32 = arith.constant 0 : i32
    %c0_i32_0 = arith.constant 0 : i32
    %c0_i32_1 = arith.constant 0 : i32
    return %c0_i32, %c0_i32_0 : i32, i32
  }
  func.func @transform_3(%arg0: i32) -> (i32, i32, i32) {
    %c0_i32 = arith.constant 0 : i32
    %c0_i32_0 = arith.constant 0 : i32
    %c0_i32_1 = arith.constant 0 : i32
    return %arg0, %c0_i32, %c0_i32_0 : i32, i32, i32
  }
}

module attributes {stable_mosaic.version = 11 : i64} {
  func.func @_fc_loc_kernel(%arg0: memref<2x90xbf16, #tpu.memory_space<vmem>>, %arg1: memref<90x32xf32, #tpu.memory_space<vmem>>, %arg2: memref<1x32xf32, #tpu.memory_space<vmem>>, %arg3: memref<32x6xf32, #tpu.memory_space<vmem>>, %arg4: memref<1x6xf32, #tpu.memory_space<vmem>>, %arg5: memref<2x6xf32, #tpu.memory_space<vmem>>) attributes {dimension_semantics = [], scalar_prefetch = 0 : i64, scratch_operands = 0 : i64, tpu.core_type = #tpu.core_type<tc>} {
    %c0 = arith.constant 0 : index
    %c0_0 = arith.constant 0 : index
    %0 = vector.load %arg0[%c0, %c0_0] : memref<2x90xbf16, #tpu.memory_space<vmem>>, vector<2x90xbf16>
    %1 = arith.extf %0 : vector<2x90xbf16> to vector<2x90xf32>
    %c0_1 = arith.constant 0 : index
    %c0_2 = arith.constant 0 : index
    %2 = vector.load %arg1[%c0_1, %c0_2] : memref<90x32xf32, #tpu.memory_space<vmem>>, vector<90x32xf32>
    %cst = arith.constant dense<0.000000e+00> : vector<2x32xf32>
    %3 = tpu.matmul %1, %2, %cst {dimension_numbers = #tpu.dot_dimension_numbers<[1], [0], [0], [1], [0, 0, 1, 1], [], []>} : vector<2x90xf32>, vector<90x32xf32>, vector<2x32xf32> -> vector<2x32xf32>
    %c0_3 = arith.constant 0 : index
    %c0_4 = arith.constant 0 : index
    %4 = vector.load %arg2[%c0_3, %c0_4] : memref<1x32xf32, #tpu.memory_space<vmem>>, vector<1x32xf32>
    %5 = vector.broadcast %4 : vector<1x32xf32> to vector<2x32xf32>
    %6 = arith.addf %3, %5 : vector<2x32xf32>
    %cst_5 = arith.constant 0.000000e+00 : f32
    %7 = vector.broadcast %cst_5 : f32 to vector<2x32xf32>
    %8 = arith.maximumf %6, %7 : vector<2x32xf32>
    %c0_6 = arith.constant 0 : index
    %c0_7 = arith.constant 0 : index
    %9 = vector.load %arg3[%c0_6, %c0_7] : memref<32x6xf32, #tpu.memory_space<vmem>>, vector<32x6xf32>
    %cst_8 = arith.constant dense<0.000000e+00> : vector<2x6xf32>
    %10 = tpu.matmul %8, %9, %cst_8 {dimension_numbers = #tpu.dot_dimension_numbers<[1], [0], [0], [1], [0, 0, 1, 1], [], []>} : vector<2x32xf32>, vector<32x6xf32>, vector<2x6xf32> -> vector<2x6xf32>
    %c0_9 = arith.constant 0 : index
    %c0_10 = arith.constant 0 : index
    %11 = vector.load %arg4[%c0_9, %c0_10] : memref<1x6xf32, #tpu.memory_space<vmem>>, vector<1x6xf32>
    %12 = vector.broadcast %11 : vector<1x6xf32> to vector<2x6xf32>
    %13 = arith.addf %10, %12 : vector<2x6xf32>
    %c0_11 = arith.constant 0 : index
    %c0_12 = arith.constant 0 : index
    %14 = vector.load %arg5[%c0_11, %c0_12] : memref<2x6xf32, #tpu.memory_space<vmem>>, vector<2x6xf32>
    tpu.vector_store %arg5[%c0_11, %c0_12], %13 {strides = array<i32>} : memref<2x6xf32, #tpu.memory_space<vmem>>, vector<2x6xf32>,
    return
  }
}

module attributes {stable_mosaic.version = 11 : i64} {
  func.func @_conv_kernel(%arg0: i32, %arg1: memref<1x28x28xbf16, #tpu.memory_space<vmem>>, %arg2: memref<5x28x240xbf16, #tpu.memory_space<vmem>>, %arg3: memref<1x240xf32, #tpu.memory_space<vmem>>, %arg4: memref<1x24x240xbf16, #tpu.memory_space<vmem>>) attributes {dimension_semantics = [#tpu.dimension_semantics<parallel>], iteration_bounds = array<i64: 2>, scalar_prefetch = 0 : i64, scratch_operands = 0 : i64, tpu.core_type = #tpu.core_type<tc>, window_params = [{transform_indices = @transform_0, window_bounds = array<i64: 1, 28, 28>}, {pipeline_mode = #tpu.pipeline_mode<synchronous>, transform_indices = @transform_1, window_bounds = array<i64: 5, 28, 240>}, {pipeline_mode = #tpu.pipeline_mode<synchronous>, transform_indices = @transform_2, window_bounds = array<i64: 1, 240>}, {transform_indices = @transform_3, window_bounds = array<i64: 1, 24, 240>}]} {
    %c0 = arith.constant 0 : index
    %c0_0 = arith.constant 0 : index
    %c0_1 = arith.constant 0 : index
    %0 = vector.load %arg1[%c0, %c0_0, %c0_1] : memref<1x28x28xbf16, #tpu.memory_space<vmem>>, vector<1x24x28xbf16>
    %1 = vector.shape_cast %0 : vector<1x24x28xbf16> to vector<24x28xbf16>
    %c0_2 = arith.constant 0 : index
    %c0_3 = arith.constant 0 : index
    %c0_4 = arith.constant 0 : index
    %2 = vector.load %arg2[%c0_2, %c0_3, %c0_4] : memref<5x28x240xbf16, #tpu.memory_space<vmem>>, vector<1x28x240xbf16>
    %3 = vector.shape_cast %2 : vector<1x28x240xbf16> to vector<28x240xbf16>
    %cst = arith.constant dense<0.000000e+00> : vector<24x240xf32>
    %4 = tpu.matmul %1, %3, %cst {dimension_numbers = #tpu.dot_dimension_numbers<[1], [0], [0], [1], [0, 0, 1, 1], [], []>} : vector<24x28xbf16>, vector<28x240xbf16>, vector<24x240xf32> -> vector<24x240xf32>
    %c0_5 = arith.constant 0 : index
    %c1 = arith.constant 1 : index
    %c0_6 = arith.constant 0 : index
    %5 = vector.load %arg1[%c0_5, %c1, %c0_6] : memref<1x28x28xbf16, #tpu.memory_space<vmem>>, vector<1x24x28xbf16>
    %6 = vector.shape_cast %5 : vector<1x24x28xbf16> to vector<24x28xbf16>
    %c1_7 = arith.constant 1 : index
    %c0_8 = arith.constant 0 : index
    %c0_9 = arith.constant 0 : index
    %7 = vector.load %arg2[%c1_7, %c0_8, %c0_9] : memref<5x28x240xbf16, #tpu.memory_space<vmem>>, vector<1x28x240xbf16>
    %8 = vector.shape_cast %7 : vector<1x28x240xbf16> to vector<28x240xbf16>
    %cst_10 = arith.constant dense<0.000000e+00> : vector<24x240xf32>
    %9 = tpu.matmul %6, %8, %cst_10 {dimension_numbers = #tpu.dot_dimension_numbers<[1], [0], [0], [1], [0, 0, 1, 1], [], []>} : vector<24x28xbf16>, vector<28x240xbf16>, vector<24x240xf32> -> vector<24x240xf32>
    %10 = arith.addf %4, %9 : vector<24x240xf32>
    %c0_11 = arith.constant 0 : index
    %c2 = arith.constant 2 : index
    %c0_12 = arith.constant 0 : index
    %11 = vector.load %arg1[%c0_11, %c2, %c0_12] : memref<1x28x28xbf16, #tpu.memory_space<vmem>>, vector<1x24x28xbf16>
    %12 = vector.shape_cast %11 : vector<1x24x28xbf16> to vector<24x28xbf16>
    %c2_13 = arith.constant 2 : index
    %c0_14 = arith.constant 0 : index
    %c0_15 = arith.constant 0 : index
    %13 = vector.load %arg2[%c2_13, %c0_14, %c0_15] : memref<5x28x240xbf16, #tpu.memory_space<vmem>>, vector<1x28x240xbf16>
    %14 = vector.shape_cast %13 : vector<1x28x240xbf16> to vector<28x240xbf16>
    %cst_16 = arith.constant dense<0.000000e+00> : vector<24x240xf32>
    %15 = tpu.matmul %12, %14, %cst_16 {dimension_numbers = #tpu.dot_dimension_numbers<[1], [0], [0], [1], [0, 0, 1, 1], [], []>} : vector<24x28xbf16>, vector<28x240xbf16>, vector<24x240xf32> -> vector<24x240xf32>
    %16 = arith.addf %10, %15 : vector<24x240xf32>
    %c0_17 = arith.constant 0 : index
    %c3 = arith.constant 3 : index
    %c0_18 = arith.constant 0 : index
    %17 = vector.load %arg1[%c0_17, %c3, %c0_18] : memref<1x28x28xbf16, #tpu.memory_space<vmem>>, vector<1x24x28xbf16>
    %18 = vector.shape_cast %17 : vector<1x24x28xbf16> to vector<24x28xbf16>
    %c3_19 = arith.constant 3 : index
    %c0_20 = arith.constant 0 : index
    %c0_21 = arith.constant 0 : index
    %19 = vector.load %arg2[%c3_19, %c0_20, %c0_21] : memref<5x28x240xbf16, #tpu.memory_space<vmem>>, vector<1x28x240xbf16>
    %20 = vector.shape_cast %19 : vector<1x28x240xbf16> to vector<28x240xbf16>
    %cst_22 = arith.constant dense<0.000000e+00> : vector<24x240xf32>
    %21 = tpu.matmul %18, %20, %cst_22 {dimension_numbers = #tpu.dot_dimension_numbers<[1], [0], [0], [1], [0, 0, 1, 1], [], []>} : vector<24x28xbf16>, vector<28x240xbf16>, vector<24x240xf32> -> vector<24x240xf32>
    %22 = arith.addf %16, %21 : vector<24x240xf32>
    %c0_23 = arith.constant 0 : index
    %c4 = arith.constant 4 : index
    %c0_24 = arith.constant 0 : index
    %23 = vector.load %arg1[%c0_23, %c4, %c0_24] : memref<1x28x28xbf16, #tpu.memory_space<vmem>>, vector<1x24x28xbf16>
    %24 = vector.shape_cast %23 : vector<1x24x28xbf16> to vector<24x28xbf16>
    %c4_25 = arith.constant 4 : index
    %c0_26 = arith.constant 0 : index
    %c0_27 = arith.constant 0 : index
    %25 = vector.load %arg2[%c4_25, %c0_26, %c0_27] : memref<5x28x240xbf16, #tpu.memory_space<vmem>>, vector<1x28x240xbf16>
    %26 = vector.shape_cast %25 : vector<1x28x240xbf16> to vector<28x240xbf16>
    %cst_28 = arith.constant dense<0.000000e+00> : vector<24x240xf32>
    %27 = tpu.matmul %24, %26, %cst_28 {dimension_numbers = #tpu.dot_dimension_numbers<[1], [0], [0], [1], [0, 0, 1, 1], [], []>} : vector<24x28xbf16>, vector<28x240xbf16>, vector<24x240xf32> -> vector<24x240xf32>
    %28 = arith.addf %22, %27 : vector<24x240xf32>
    %c0_29 = arith.constant 0 : index
    %c0_30 = arith.constant 0 : index
    %29 = vector.load %arg3[%c0_29, %c0_30] : memref<1x240xf32, #tpu.memory_space<vmem>>, vector<1x240xf32>
    %30 = vector.broadcast %29 : vector<1x240xf32> to vector<24x240xf32>
    %31 = arith.addf %28, %30 : vector<24x240xf32>
    %cst_31 = arith.constant 0.000000e+00 : f32
    %32 = vector.broadcast %cst_31 : f32 to vector<24x240xf32>
    %33 = arith.maximumf %31, %32 : vector<24x240xf32>
    %34 = arith.truncf %33 : vector<24x240xf32> to vector<24x240xbf16>
    %c0_32 = arith.constant 0 : index
    %c0_33 = arith.constant 0 : index
    %c0_34 = arith.constant 0 : index
    %35 = vector.load %arg4[%c0_32, %c0_33, %c0_34] : memref<1x24x240xbf16, #tpu.memory_space<vmem>>, vector<1x24x240xbf16>
    %36 = vector.shape_cast %35 : vector<1x24x240xbf16> to vector<24x240xbf16>
    %37 = vector.shape_cast %34 : vector<24x240xbf16> to vector<1x24x240xbf16>
    tpu.vector_store %arg4[%c0_32, %c0_33, %c0_34], %37 {strides = array<i32>} : memref<1x24x240xbf16, #tpu.memory_space<vmem>>, vector<1x24x240xbf16>,
    return
  }
  func.func @transform_0(%arg0: i32) -> (i32, i32, i32) {
    %c0_i32 = arith.constant 0 : i32
    %c0_i32_0 = arith.constant 0 : i32
    %c0_i32_1 = arith.constant 0 : i32
    return %arg0, %c0_i32, %c0_i32_0 : i32, i32, i32
  }
  func.func @transform_1(%arg0: i32) -> (i32, i32, i32) {
    %c0_i32 = arith.constant 0 : i32
    %c0_i32_0 = arith.constant 0 : i32
    %c0_i32_1 = arith.constant 0 : i32
    %c0_i32_2 = arith.constant 0 : i32
    return %c0_i32, %c0_i32_0, %c0_i32_1 : i32, i32, i32
  }
  func.func @transform_2(%arg0: i32) -> (i32, i32) {
    %c0_i32 = arith.constant 0 : i32
    %c0_i32_0 = arith.constant 0 : i32
    %c0_i32_1 = arith.constant 0 : i32
    return %c0_i32, %c0_i32_0 : i32, i32
  }
  func.func @transform_3(%arg0: i32) -> (i32, i32, i32) {
    %c0_i32 = arith.constant 0 : i32
    %c0_i32_0 = arith.constant 0 : i32
    %c0_i32_1 = arith.constant 0 : i32
    return %arg0, %c0_i32, %c0_i32_0 : i32, i32, i32
  }
}

module attributes {stable_mosaic.version = 11 : i64} {
  func.func @_conv_kernel(%arg0: i32, %arg1: memref<1x12x120xbf16, #tpu.memory_space<vmem>>, %arg2: memref<5x120x160xbf16, #tpu.memory_space<vmem>>, %arg3: memref<1x160xf32, #tpu.memory_space<vmem>>, %arg4: memref<1x8x160xbf16, #tpu.memory_space<vmem>>) attributes {dimension_semantics = [#tpu.dimension_semantics<parallel>], iteration_bounds = array<i64: 2>, scalar_prefetch = 0 : i64, scratch_operands = 0 : i64, tpu.core_type = #tpu.core_type<tc>, window_params = [{transform_indices = @transform_0, window_bounds = array<i64: 1, 12, 120>}, {pipeline_mode = #tpu.pipeline_mode<synchronous>, transform_indices = @transform_1, window_bounds = array<i64: 5, 120, 160>}, {pipeline_mode = #tpu.pipeline_mode<synchronous>, transform_indices = @transform_2, window_bounds = array<i64: 1, 160>}, {transform_indices = @transform_3, window_bounds = array<i64: 1, 8, 160>}]} {
    %c0 = arith.constant 0 : index
    %c0_0 = arith.constant 0 : index
    %c0_1 = arith.constant 0 : index
    %0 = vector.load %arg1[%c0, %c0_0, %c0_1] : memref<1x12x120xbf16, #tpu.memory_space<vmem>>, vector<1x8x120xbf16>
    %1 = vector.shape_cast %0 : vector<1x8x120xbf16> to vector<8x120xbf16>
    %c0_2 = arith.constant 0 : index
    %c0_3 = arith.constant 0 : index
    %c0_4 = arith.constant 0 : index
    %2 = vector.load %arg2[%c0_2, %c0_3, %c0_4] : memref<5x120x160xbf16, #tpu.memory_space<vmem>>, vector<1x120x160xbf16>
    %3 = vector.shape_cast %2 : vector<1x120x160xbf16> to vector<120x160xbf16>
    %cst = arith.constant dense<0.000000e+00> : vector<8x160xf32>
    %4 = tpu.matmul %1, %3, %cst {dimension_numbers = #tpu.dot_dimension_numbers<[1], [0], [0], [1], [0, 0, 1, 1], [], []>} : vector<8x120xbf16>, vector<120x160xbf16>, vector<8x160xf32> -> vector<8x160xf32>
    %c0_5 = arith.constant 0 : index
    %c1 = arith.constant 1 : index
    %c0_6 = arith.constant 0 : index
    %5 = vector.load %arg1[%c0_5, %c1, %c0_6] : memref<1x12x120xbf16, #tpu.memory_space<vmem>>, vector<1x8x120xbf16>
    %6 = vector.shape_cast %5 : vector<1x8x120xbf16> to vector<8x120xbf16>
    %c1_7 = arith.constant 1 : index
    %c0_8 = arith.constant 0 : index
    %c0_9 = arith.constant 0 : index
    %7 = vector.load %arg2[%c1_7, %c0_8, %c0_9] : memref<5x120x160xbf16, #tpu.memory_space<vmem>>, vector<1x120x160xbf16>
    %8 = vector.shape_cast %7 : vector<1x120x160xbf16> to vector<120x160xbf16>
    %cst_10 = arith.constant dense<0.000000e+00> : vector<8x160xf32>
    %9 = tpu.matmul %6, %8, %cst_10 {dimension_numbers = #tpu.dot_dimension_numbers<[1], [0], [0], [1], [0, 0, 1, 1], [], []>} : vector<8x120xbf16>, vector<120x160xbf16>, vector<8x160xf32> -> vector<8x160xf32>
    %10 = arith.addf %4, %9 : vector<8x160xf32>
    %c0_11 = arith.constant 0 : index
    %c2 = arith.constant 2 : index
    %c0_12 = arith.constant 0 : index
    %11 = vector.load %arg1[%c0_11, %c2, %c0_12] : memref<1x12x120xbf16, #tpu.memory_space<vmem>>, vector<1x8x120xbf16>
    %12 = vector.shape_cast %11 : vector<1x8x120xbf16> to vector<8x120xbf16>
    %c2_13 = arith.constant 2 : index
    %c0_14 = arith.constant 0 : index
    %c0_15 = arith.constant 0 : index
    %13 = vector.load %arg2[%c2_13, %c0_14, %c0_15] : memref<5x120x160xbf16, #tpu.memory_space<vmem>>, vector<1x120x160xbf16>
    %14 = vector.shape_cast %13 : vector<1x120x160xbf16> to vector<120x160xbf16>
    %cst_16 = arith.constant dense<0.000000e+00> : vector<8x160xf32>
    %15 = tpu.matmul %12, %14, %cst_16 {dimension_numbers = #tpu.dot_dimension_numbers<[1], [0], [0], [1], [0, 0, 1, 1], [], []>} : vector<8x120xbf16>, vector<120x160xbf16>, vector<8x160xf32> -> vector<8x160xf32>
    %16 = arith.addf %10, %15 : vector<8x160xf32>
    %c0_17 = arith.constant 0 : index
    %c3 = arith.constant 3 : index
    %c0_18 = arith.constant 0 : index
    %17 = vector.load %arg1[%c0_17, %c3, %c0_18] : memref<1x12x120xbf16, #tpu.memory_space<vmem>>, vector<1x8x120xbf16>
    %18 = vector.shape_cast %17 : vector<1x8x120xbf16> to vector<8x120xbf16>
    %c3_19 = arith.constant 3 : index
    %c0_20 = arith.constant 0 : index
    %c0_21 = arith.constant 0 : index
    %19 = vector.load %arg2[%c3_19, %c0_20, %c0_21] : memref<5x120x160xbf16, #tpu.memory_space<vmem>>, vector<1x120x160xbf16>
    %20 = vector.shape_cast %19 : vector<1x120x160xbf16> to vector<120x160xbf16>
    %cst_22 = arith.constant dense<0.000000e+00> : vector<8x160xf32>
    %21 = tpu.matmul %18, %20, %cst_22 {dimension_numbers = #tpu.dot_dimension_numbers<[1], [0], [0], [1], [0, 0, 1, 1], [], []>} : vector<8x120xbf16>, vector<120x160xbf16>, vector<8x160xf32> -> vector<8x160xf32>
    %22 = arith.addf %16, %21 : vector<8x160xf32>
    %c0_23 = arith.constant 0 : index
    %c4 = arith.constant 4 : index
    %c0_24 = arith.constant 0 : index
    %23 = vector.load %arg1[%c0_23, %c4, %c0_24] : memref<1x12x120xbf16, #tpu.memory_space<vmem>>, vector<1x8x120xbf16>
    %24 = vector.shape_cast %23 : vector<1x8x120xbf16> to vector<8x120xbf16>
    %c4_25 = arith.constant 4 : index
    %c0_26 = arith.constant 0 : index
    %c0_27 = arith.constant 0 : index
    %25 = vector.load %arg2[%c4_25, %c0_26, %c0_27] : memref<5x120x160xbf16, #tpu.memory_space<vmem>>, vector<1x120x160xbf16>
    %26 = vector.shape_cast %25 : vector<1x120x160xbf16> to vector<120x160xbf16>
    %cst_28 = arith.constant dense<0.000000e+00> : vector<8x160xf32>
    %27 = tpu.matmul %24, %26, %cst_28 {dimension_numbers = #tpu.dot_dimension_numbers<[1], [0], [0], [1], [0, 0, 1, 1], [], []>} : vector<8x120xbf16>, vector<120x160xbf16>, vector<8x160xf32> -> vector<8x160xf32>
    %28 = arith.addf %22, %27 : vector<8x160xf32>
    %c0_29 = arith.constant 0 : index
    %c0_30 = arith.constant 0 : index
    %29 = vector.load %arg3[%c0_29, %c0_30] : memref<1x160xf32, #tpu.memory_space<vmem>>, vector<1x160xf32>
    %30 = vector.broadcast %29 : vector<1x160xf32> to vector<8x160xf32>
    %31 = arith.addf %28, %30 : vector<8x160xf32>
    %cst_31 = arith.constant 0.000000e+00 : f32
    %32 = vector.broadcast %cst_31 : f32 to vector<8x160xf32>
    %33 = arith.maximumf %31, %32 : vector<8x160xf32>
    %34 = arith.truncf %33 : vector<8x160xf32> to vector<8x160xbf16>
    %c0_32 = arith.constant 0 : index
    %c0_33 = arith.constant 0 : index
    %c0_34 = arith.constant 0 : index
    %35 = vector.load %arg4[%c0_32, %c0_33, %c0_34] : memref<1x8x160xbf16, #tpu.memory_space<vmem>>, vector<1x8x160xbf16>
    %36 = vector.shape_cast %35 : vector<1x8x160xbf16> to vector<8x160xbf16>
    %37 = vector.shape_cast %34 : vector<8x160xbf16> to vector<1x8x160xbf16>
    tpu.vector_store %arg4[%c0_32, %c0_33, %c0_34], %37 {strides = array<i32>} : memref<1x8x160xbf16, #tpu.memory_space<vmem>>, vector<1x8x160xbf16>,
    return
  }
  func.func @transform_0(%arg0: i32) -> (i32, i32, i32) {
    %c0_i32 = arith.constant 0 : i32
    %c0_i32_0 = arith.constant 0 : i32
    %c0_i32_1 = arith.constant 0 : i32
    return %arg0, %c0_i32, %c0_i32_0 : i32, i32, i32
  }
  func.func @transform_1(%arg0: i32) -> (i32, i32, i32) {
    %c0_i32 = arith.constant 0 : i32
    %c0_i32_0 = arith.constant 0 : i32
    %c0_i32_1 = arith.constant 0 : i32
    %c0_i32_2 = arith.constant 0 : i32
    return %c0_i32, %c0_i32_0, %c0_i32_1 : i32, i32, i32
  }
  func.func @transform_2(%arg0: i32) -> (i32, i32) {
    %c0_i32 = arith.constant 0 : i32
    %c0_i32_0 = arith.constant 0 : i32
    %c0_i32_1 = arith.constant 0 : i32
    return %c0_i32, %c0_i32_0 : i32, i32
  }
  func.func @transform_3(%arg0: i32) -> (i32, i32, i32) {
    %c0_i32 = arith.constant 0 : i32
    %c0_i32_0 = arith.constant 0 : i32
    %c0_i32_1 = arith.constant 0 : i32
    return %arg0, %c0_i32, %c0_i32_0 : i32, i32, i32
  }
}

module attributes {stable_mosaic.version = 11 : i64} {
  func.func @_cls_head_kernel(%arg0: memref<2x320xbf16, #tpu.memory_space<vmem>>, %arg1: memref<320x50xf32, #tpu.memory_space<vmem>>, %arg2: memref<1x50xf32, #tpu.memory_space<vmem>>, %arg3: memref<50x10xf32, #tpu.memory_space<vmem>>, %arg4: memref<1x10xf32, #tpu.memory_space<vmem>>, %arg5: memref<2x10xf32, #tpu.memory_space<vmem>>) attributes {dimension_semantics = [], scalar_prefetch = 0 : i64, scratch_operands = 0 : i64, tpu.core_type = #tpu.core_type<tc>} {
    %c0 = arith.constant 0 : index
    %c0_0 = arith.constant 0 : index
    %0 = vector.load %arg0[%c0, %c0_0] : memref<2x320xbf16, #tpu.memory_space<vmem>>, vector<2x320xbf16>
    %1 = arith.extf %0 : vector<2x320xbf16> to vector<2x320xf32>
    %c0_1 = arith.constant 0 : index
    %c0_2 = arith.constant 0 : index
    %2 = vector.load %arg1[%c0_1, %c0_2] : memref<320x50xf32, #tpu.memory_space<vmem>>, vector<320x50xf32>
    %cst = arith.constant dense<0.000000e+00> : vector<2x50xf32>
    %3 = tpu.matmul %1, %2, %cst {dimension_numbers = #tpu.dot_dimension_numbers<[1], [0], [0], [1], [0, 0, 1, 1], [], []>} : vector<2x320xf32>, vector<320x50xf32>, vector<2x50xf32> -> vector<2x50xf32>
    %c0_3 = arith.constant 0 : index
    %c0_4 = arith.constant 0 : index
    %4 = vector.load %arg2[%c0_3, %c0_4] : memref<1x50xf32, #tpu.memory_space<vmem>>, vector<1x50xf32>
    %5 = vector.broadcast %4 : vector<1x50xf32> to vector<2x50xf32>
    %6 = arith.addf %3, %5 : vector<2x50xf32>
    %cst_5 = arith.constant 0.000000e+00 : f32
    %7 = vector.broadcast %cst_5 : f32 to vector<2x50xf32>
    %8 = arith.maximumf %6, %7 : vector<2x50xf32>
    %c0_6 = arith.constant 0 : index
    %c0_7 = arith.constant 0 : index
    %9 = vector.load %arg3[%c0_6, %c0_7] : memref<50x10xf32, #tpu.memory_space<vmem>>, vector<50x10xf32>
    %cst_8 = arith.constant dense<0.000000e+00> : vector<2x10xf32>
    %10 = tpu.matmul %8, %9, %cst_8 {dimension_numbers = #tpu.dot_dimension_numbers<[1], [0], [0], [1], [0, 0, 1, 1], [], []>} : vector<2x50xf32>, vector<50x10xf32>, vector<2x10xf32> -> vector<2x10xf32>
    %c0_9 = arith.constant 0 : index
    %c0_10 = arith.constant 0 : index
    %11 = vector.load %arg4[%c0_9, %c0_10] : memref<1x10xf32, #tpu.memory_space<vmem>>, vector<1x10xf32>
    %12 = vector.broadcast %11 : vector<1x10xf32> to vector<2x10xf32>
    %13 = arith.addf %10, %12 : vector<2x10xf32>
    %cst_11 = arith.constant dense<0xFF800000> : vector<2xf32>
    %14 = vector.multi_reduction <maximumf>, %13, %cst_11 [1] : vector<2x10xf32> to vector<2xf32>
    %15 = vector.shape_cast %14 : vector<2xf32> to vector<2x1xf32>
    %16 = vector.broadcast %15 : vector<2x1xf32> to vector<2x10xf32>
    %17 = arith.subf %13, %16 : vector<2x10xf32>
    %18 = math.exp %17 : vector<2x10xf32>
    %cst_12 = arith.constant dense<0.000000e+00> : vector<2xf32>
    %19 = vector.multi_reduction <add>, %18, %cst_12 [1] : vector<2x10xf32> to vector<2xf32>
    %20 = vector.shape_cast %19 : vector<2xf32> to vector<2x1xf32>
    %21 = math.log %20 : vector<2x1xf32>
    %22 = vector.broadcast %21 : vector<2x1xf32> to vector<2x10xf32>
    %23 = arith.subf %17, %22 : vector<2x10xf32>
    %c0_13 = arith.constant 0 : index
    %c0_14 = arith.constant 0 : index
    %24 = vector.load %arg5[%c0_13, %c0_14] : memref<2x10xf32, #tpu.memory_space<vmem>>, vector<2x10xf32>
    tpu.vector_store %arg5[%c0_13, %c0_14], %23 {strides = array<i32>} : memref<2x10xf32, #tpu.memory_space<vmem>>, vector<2x10xf32>,
    return
  }
}

</mosaic_0001>

<llo_original>
// kernel: forward.6
$region0: #{forward.6}
  #allocation0 [shape = 'u32[]', space=smem, size = 0x4, offset = 0x4, fixed_abs, tag = 'smem constant byte address 0x4 - core index']
  #allocation1 [shape = 'u32[144,128]{1,0:T(1,128)}', space=vmem, size = 0x12000, scoped, tag = 'internal scratch']
  %s0 = inlined_call_operand.vmem [shape: bf16[2,28,28], index: 0, kind: input, shape index: {}]
  %s1 = inlined_call_operand.hbm [shape: bf16[7,28,176], index: 1, kind: input, shape index: {}]
  %s2 = inlined_call_operand.vmem [shape: f32[1,176], index: 2, kind: input, shape index: {}]
  %s3 = inlined_call_operand.vmem [shape: bf16[2,22,176], index: 3, kind: output, shape index: {}]
  %s4 = sld [smem:[#allocation0]]
  $region49: #{forward.6} parent=0
    _
  %s6 = ssub.s32 1, %s4
  %s7 = scalar_select 0, %s6, %s4
  $region1: #{forward.6} parent=0
    #allocation2 [shape = 'u8[114688]{0}', space=vmem, size = 0x1c000, scoped, tag = 'input window, operand 1, single buffered']
    #allocation3 [shape = 's32[2]{0}', space=sflag, size = 0x8, scoped, tag = 'scoped memory for forward.6']
    %8 = vsyncpa [#allocation3], 0
    loop: start=0, step=1, limit=4
    $region2: #{forward.6} parent=1 // loop_pre_header
      _
    $region3: #{forward.6} parent=1 // loop_header
      %s10 = sphi 0, %s14
      %p11 = scmp.ge.s32.totalorder %s10, 4
      %s20 = sphi 0, %s22
      %s23 = sphi 0, %s20
      %s24 = sphi 0, %s23
      %s40 = sphi 0, %s24
      %s44 = sphi 0, %s44
      %s46 = sphi 0, %s44
      %s47 = sphi 0, %s46
      %s61 = sphi 0, %s47
      %s65 = sphi 0, %s65
      %s67 = sphi 0, %s65
      %s68 = sphi 0, %s67
      %s82 = sphi 0, %s68
      %s88 = sphi 0, %s90
      %s91 = sphi 0, %s88
      %s92 = sphi 0, %s91
      %s108 = sphi 0, %s92
    $region4: #{forward.6} parent=1 // loop_header_branch
      %13 = sbr.rel (%p11) target = $region8
    $region5: #{forward.6} parent=1 // loop_body
      %s15 = ssub.s32 %s10, 1
      %s16 = ssub.s32 %s10, 2
      %s17 = sadd.s32 %s10, 1
      %s18 = ssub.s32 %s10, %s17
      %p19 = scmp.eq.s32.totalorder %s18, 0
      %s21 = sadd.s32 %s20, 1
      %s22 = scalar_select %p19, %s20, %s21
      %p25 = pneg %p19
      %p26 = scmp.eq.s32.totalorder %s10, 1
      %p27 = por %p25, %p26
      %p28 = scmp.ne.s32.totalorder %s20, %s23
      %p29 = scmp.eq.s32.totalorder %s10, 0
      %p30 = por %p28, %p29
      %p31 = scmp.ne.s32.totalorder %s20, %s23
      %p32 = scmp.eq.s32.totalorder %s15, 1
      %p33 = por %p31, %p32
      %p34 = scmp.ne.s32.totalorder %s23, %s24
      %p35 = scmp.eq.s32.totalorder %s15, 0
      %p36 = por %p34, %p35
      %p37 = scmp.ne.s32.totalorder %s23, %s24
      %p38 = scmp.eq.s32.totalorder %s16, 1
      %p39 = por %p37, %p38
      %p41 = scmp.ne.s32.totalorder %s24, %s40
      %p42 = scmp.eq.s32.totalorder %s16, 0
      %p43 = por %p41, %p42
      %s45 = sadd.s32 %s44, 1
      %p48 = scmp.eq.s32.totalorder %s10, 1
      %p49 = scmp.ne.s32.totalorder %s44, %s46
      %p50 = scmp.eq.s32.totalorder %s10, 0
      %p51 = por %p49, %p50
      %p52 = scmp.ne.s32.totalorder %s44, %s46
      %p53 = scmp.eq.s32.totalorder %s15, 1
      %p54 = por %p52, %p53
      %p55 = scmp.ne.s32.totalorder %s46, %s47
      %p56 = scmp.eq.s32.totalorder %s15, 0
      %p57 = por %p55, %p56
      %p58 = scmp.ne.s32.totalorder %s46, %s47
      %p59 = scmp.eq.s32.totalorder %s16, 1
      %p60 = por %p58, %p59
      %p62 = scmp.ne.s32.totalorder %s47, %s61
      %p63 = scmp.eq.s32.totalorder %s16, 0
      %p64 = por %p62, %p63
      %s66 = sadd.s32 %s65, 1
      %p69 = scmp.eq.s32.totalorder %s10, 1
      %p70 = scmp.ne.s32.totalorder %s65, %s67
      %p71 = scmp.eq.s32.totalorder %s10, 0
      %p72 = por %p70, %p71
      %p73 = scmp.ne.s32.totalorder %s65, %s67
      %p74 = scmp.eq.s32.totalorder %s15, 1
      %p75 = por %p73, %p74
      %p76 = scmp.ne.s32.totalorder %s67, %s68
      %p77 = scmp.eq.s32.totalorder %s15, 0
      %p78 = por %p76, %p77
      %p79 = scmp.ne.s32.totalorder %s67, %s68
      %p80 = scmp.eq.s32.totalorder %s16, 1
      %p81 = por %p79, %p80
      %p83 = scmp.ne.s32.totalorder %s68, %s82
      %p84 = scmp.eq.s32.totalorder %s16, 0
      %p85 = por %p83, %p84
      %s86 = ssub.s32 %s10, %s17
      %p87 = scmp.eq.s32.totalorder %s86, 0
      %s89 = sadd.s32 %s88, 1
      %s90 = scalar_select %p87, %s88, %s89
      %p93 = pneg %p87
      %p94 = scmp.eq.s32.totalorder %s10, 1
      %p95 = por %p93, %p94
      %p96 = scmp.ne.s32.totalorder %s88, %s91
      %p97 = scmp.eq.s32.totalorder %s10, 0
      %p98 = por %p96, %p97
      %p99 = scmp.ne.s32.totalorder %s88, %s91
      %p100 = scmp.eq.s32.totalorder %s15, 1
      %p101 = por %p99, %p100
      %p102 = scmp.ne.s32.totalorder %s91, %s92
      %p103 = scmp.eq.s32.totalorder %s15, 0
      %p104 = por %p102, %p103
      %p105 = scmp.ne.s32.totalorder %s91, %s92
      %p106 = scmp.eq.s32.totalorder %s16, 1
      %p107 = por %p105, %p106
      %p109 = scmp.ne.s32.totalorder %s92, %s108
      %p110 = scmp.eq.s32.totalorder %s16, 0
      %p111 = por %p109, %p110
      %p112 = scmp.le.s32.totalorder 1, %s10
      %p113 = scmp.lt.s32.totalorder %s10, 3
      %p114 = pnand %p112, %p113
      %p115 = pneg %p114
      // Predicated region
      $region9: #{forward.6} parent=5 // pred_check
        _
      $region10: #{forward.6} parent=5 // pred_check_branch
        %117 = sbr.rel (%p114) target = $region12
      $region11: #{forward.6} parent=5 // pred_region
        %s118 = ssub.s32 %s10, 1
        // Predicated region
        $region13: #{forward.6} parent=11 // pred_check
          %p119 = pneg %p57
        $region14: #{forward.6} parent=11 // pred_check_branch
          %121 = sbr.rel (%p119) target = $region16
        $region15: #{forward.6} parent=11 // pred_region
          %s123 = ssub.s32 3584, 3584
          %124 = vsyncadd [#allocation3], %s123
          %s125 = sshll.u32 [#allocation2], 4
          %s126 = int_to_ptr.vmem [resolvable:$true] %s125
          %131 = dma.hbm_to_vmem [thread:$0]  %s1, 3584, %s126, [#allocation3], 128, 128, 8
        $region16: #{forward.6} parent=11 // pred_fallthru
          _
        // Predicated region
        $region17: #{forward.6} parent=11 // pred_check
          %p132 = pneg %p78
        $region18: #{forward.6} parent=11 // pred_check_branch
          %134 = sbr.rel (%p132) target = $region20
        $region19: #{forward.6} parent=11 // pred_region
          _
        $region20: #{forward.6} parent=11 // pred_fallthru
          _
      $region12: #{forward.6} parent=5 // pred_fallthru
        _
      %p135 = scmp.lt.s32.totalorder %s10, 2
      // Predicated region
      $region21: #{forward.6} parent=5 // pred_check
        %p136 = pneg %p135
      $region22: #{forward.6} parent=5 // pred_check_branch
        %138 = sbr.rel (%p136) target = $region24
      $region23: #{forward.6} parent=5 // pred_region
        // Predicated region
        $region25: #{forward.6} parent=23 // pred_check
          %p139 = pneg %p30
        $region26: #{forward.6} parent=23 // pred_check_branch
          %141 = sbr.rel (%p139) target = $region28
        $region27: #{forward.6} parent=23 // pred_region
          %p142 = scmp.lt.s32.totalorder %s10, 1
          %s143 = scalar_select %p142, %s10, 1
          %s144 = smul.addr %s143, 4
          %s145 = smul.addr %s144, 4
          %s146 = scalar_lea.vmem %s0, %s145
        $region28: #{forward.6} parent=23 // pred_fallthru
          _
      $region24: #{forward.6} parent=5 // pred_fallthru
        _
      %p147 = scmp.le.s32.totalorder 1, %s10
      %p148 = scmp.lt.s32.totalorder %s10, 3
      %p149 = pnand %p147, %p148
      %p150 = pneg %p149
      // Predicated region
      $region29: #{forward.6} parent=5 // pred_check
        _
      $region30: #{forward.6} parent=5 // pred_check_branch
        %152 = sbr.rel (%p149) target = $region32
      $region31: #{forward.6} parent=5 // pred_region
        %s153 = ssub.s32 %s10, 1
        // Predicated region
        $region33: #{forward.6} parent=31 // pred_check
          %p154 = pneg %p57
        $region34: #{forward.6} parent=31 // pred_check_branch
          %156 = sbr.rel (%p154) target = $region36
        $region35: #{forward.6} parent=31 // pred_region
          %157 = dma.done [#allocation3], 3584
        $region36: #{forward.6} parent=31 // pred_fallthru
          _
        %p158 = scmp.lt.s32.totalorder %s15, 1
        %s159 = scalar_select %p158, %s15, 1
        %s160 = smul.addr %s159, 4
        %s161 = smul.addr %s160, 4
        %s162 = scalar_lea.vmem %s0, %s161
        %p163 = pneg %p36
        %p164 = pneg %p33
        %p165 = pneg %p57
        %p166 = pneg %p54
        %p167 = pneg %p78
        %p168 = pneg %p75
        %p169 = pneg %p104
        %p170 = pneg %p101
        %p171 = scmp.lt.s32.totalorder %s15, 1
        %s172 = scalar_select %p171, %s15, 1
        %s173 = smul.addr %s172, 6
        %s174 = smul.addr %s173, 4
        %s175 = scalar_lea.vmem %s3, %s174
        %p176 = scmp.lt.s32.totalorder %s15, 1
        %s177 = scalar_select %p176, %s15, 1
        %s178 = smul.addr %s177, 4
        %s179 = smul.addr %s178, 4
        %s180 = scalar_lea.vmem %s0, %s179
        %p181 = scmp.lt.s32.totalorder %s15, 1
        %s182 = scalar_select %p181, %s15, 1
        %s183 = smul.addr %s182, 6
        %s184 = smul.addr %s183, 4
        %s185 = scalar_lea.vmem %s3, %s184
        %v187 = vld [vmem:[%s180] sm:$0xf]
        %v188 = vld [vmem:[%s180 + $0x4] sm:$0xf]
        %v189 = vld [vmem:[%s180 + $0x8] sm:$0x7]
        %v190 = vld [vmem:[#allocation2] sm:$0xff]
        %v191 = vld [vmem:[#allocation2 + $0x8] sm:$0xff]
        %v192 = vld [vmem:[#allocation2 + $0x10] sm:$0xff]
        %v193 = vld [vmem:[#allocation2 + $0x18] sm:$0x33]
        %v194 = vld [vmem:[%s180 + $0x8] sm:$0xf]
        %s195 = scalar_lea.vmem [#allocation2], 32
        %v196 = vld [vmem:[%s195] sm:$0xff]
        %v197 = vld [vmem:[%s195 + $0x8] sm:$0xff]
        %v198 = vld [vmem:[%s195 + $0x10] sm:$0xff]
        %v199 = vld [vmem:[%s195 + $0x18] sm:$0x33]
        %v203 = vunpack.c.l.b16 %v187
        %v204 = vunpack.c.l.b16 %v188
        %v205 = vunpack.c.l.b16 %v194
        %v206 = vpack.c.b16 %v204, %v203
        %v207 = vpack.c.b16 %v205, %v205
        %vm208 = vsmask.f32 7424
        %v210 = vshrl.u32 %v206, 16
        %v212 = vshll.u32 %v206, 16
        %v214 = vrot.slane %v212, 1
        %v215 = vor.u32 %v210, %v214
        %v217 = vshll.u32 %v207, 16
        %v219 = vrot.slane %v217, 1
        %v220 = vsel %vm208, %v215, %v219
        %v221 = vshrl.u32 %v207, 16
        %v223 = vor.u32 %v221, %v219
        %v228 = vunpack.c.l.b16 %v196
        %v229 = vunpack.c.h.b16 %v196
        %v230 = vunpack.c.l.b16 %v197
        %v231 = vunpack.c.h.b16 %v197
        %v232 = vunpack.c.l.b16 %v198
        %v233 = vunpack.c.h.b16 %v198
        %v234 = vunpack.c.l.b16 %v199
        %v235 = vunpack.c.h.b16 %v199
        %v236 = vpack.c.b16 %v230, %v228
        %v237 = vpack.c.b16 %v231, %v229
        %v238 = vpack.c.b16 %v234, %v232
        %v239 = vpack.c.b16 %v235, %v233
        %vm242 = vcmask 228352
        %v244 = vsel %vm242, %v220, 0
        %v247 = vsel %vm242, %v223, 0
        %vm249 = vcmask 1045504
        %v251 = vsel %vm249, %v238, 0
        %v254 = vsel %vm249, %v239, 0
        %256 = vmatprep.subr.bf16.mxu0 0
        %257 = vmatpush1.bf16.msra.mxu0 0
        %258 = vmatprep.subr.bf16.mxu0 0
        %259 = vmatpush1.bf16.msra.mxu0 0
        %260 = vmatprep.subr.bf16.mxu0 0
        %261 = vmatpush1.bf16.msra.mxu0 0
        %262 = vmatprep.subr.bf16.mxu0 0
        %263 = vmatpush1.bf16.msra.mxu0 0
        %264 = vmatprep.subr.bf16.mxu0 0
        %265 = vmatpush1.bf16.msra.mxu0 0
        %266 = vmatprep.subr.bf16.mxu0 0
        %267 = vmatpush1.bf16.msra.mxu0 0
        %268 = vmatprep.subr.bf16.mxu0 %v254
        %269 = vmatpush1.bf16.msra.mxu0 %v251
        %270 = vmatprep.subr.bf16.mxu0 %v237
        %271 = vmatpush1.bf16.msra.mxu0 %v236
        %272 = vmatprep.subr.bf16.mxu0 0
        %273 = vmatpush2.bf16.msra.mxu0 0
        %274 = vmatprep.subr.bf16.mxu0 0
        %275 = vmatpush2.bf16.msra.mxu0 0
        %276 = vmatprep.subr.bf16.mxu0 0
        %277 = vmatpush2.bf16.msra.mxu0 0
        %278 = vmatprep.subr.bf16.mxu0 0
        %279 = vmatpush2.bf16.msra.mxu0 0
        %280 = vmatprep.subr.bf16.mxu0 0
        %281 = vmatpush2.bf16.msra.mxu0 0
        %282 = vmatprep.subr.bf16.mxu0 0
        %283 = vmatpush2.bf16.msra.mxu0 0
        %284 = vmatprep.subr.bf16.mxu0 0
        %285 = vmatpush2.bf16.msra.mxu0 0
        %286 = vmatprep.subr.bf16.mxu0 0
        %287 = vmatpush2.bf16.msra.mxu0 0
        %288 = vmatprep.mubr.bf16.mxu0 0
        %289 = vmatmul.mubr.bf16.gmra.mxu0 %v244
        %v290 = vpop.f32.mrf.mxu0
        %v291 = vadd.f32 0.0, %v290
        %v292 = vpop.f32.mrf.mxu0
        %v293 = vadd.f32 0.0, %v292
        %v294 = vpop.f32.mrf.mxu0
        %v295 = vadd.f32 0.0, %v294
        %v296 = vpop.f32.mrf.mxu0
        %v297 = vadd.f32 0.0, %v296
        %298 = vmatprep.mubr.bf16.mxu0 0
        %299 = vmatmul.mubr.bf16.gmra.mxu0 %v247
        %v300 = vpop.f32.mrf.mxu0
        %v301 = vadd.f32 0.0, %v300
        %v302 = vpop.f32.mrf.mxu0
        %v303 = vadd.f32 0.0, %v302
        %v304 = vpop.f32.mrf.mxu0
        %v305 = vpop.f32.mrf.mxu0
        %306 = vdwg.mxu0
        %v308 = vunpack.c.l.b16 %v189
        %v309 = vpack.c.b16 %v308, %v308
        %v314 = vunpack.c.l.b16 %v190
        %v315 = vunpack.c.h.b16 %v190
        %v316 = vunpack.c.l.b16 %v191
        %v317 = vunpack.c.h.b16 %v191
        %v318 = vunpack.c.l.b16 %v192
        %v319 = vunpack.c.h.b16 %v192
        %v320 = vunpack.c.l.b16 %v193
        %v321 = vunpack.c.h.b16 %v193
        %v322 = vpack.c.b16 %v316, %v314
        %v323 = vpack.c.b16 %v317, %v315
        %v324 = vpack.c.b16 %v320, %v318
        %v325 = vpack.c.b16 %v321, %v319
        %v328 = vsel %vm242, %v206, 0
        %v331 = vsel %vm242, %v309, 0
        %v334 = vsel %vm249, %v324, 0
        %v337 = vsel %vm249, %v325, 0
        %339 = vmatprep.subr.bf16.mxu0 0
        %340 = vmatpush1.bf16.msra.mxu0 0
        %341 = vmatprep.subr.bf16.mxu0 0
        %342 = vmatpush1.bf16.msra.mxu0 0
        %343 = vmatprep.subr.bf16.mxu0 0
        %344 = vmatpush1.bf16.msra.mxu0 0
        %345 = vmatprep.subr.bf16.mxu0 0
        %346 = vmatpush1.bf16.msra.mxu0 0
        %347 = vmatprep.subr.bf16.mxu0 0
        %348 = vmatpush1.bf16.msra.mxu0 0
        %349 = vmatprep.subr.bf16.mxu0 0
        %350 = vmatpush1.bf16.msra.mxu0 0
        %351 = vmatprep.subr.bf16.mxu0 %v337
        %352 = vmatpush1.bf16.msra.mxu0 %v334
        %353 = vmatprep.subr.bf16.mxu0 %v323
        %354 = vmatpush1.bf16.msra.mxu0 %v322
        %355 = vmatprep.subr.bf16.mxu0 0
        %356 = vmatpush2.bf16.msra.mxu0 0
        %357 = vmatprep.subr.bf16.mxu0 0
        %358 = vmatpush2.bf16.msra.mxu0 0
        %359 = vmatprep.subr.bf16.mxu0 0
        %360 = vmatpush2.bf16.msra.mxu0 0
        %361 = vmatprep.subr.bf16.mxu0 0
        %362 = vmatpush2.bf16.msra.mxu0 0
        %363 = vmatprep.subr.bf16.mxu0 0
        %364 = vmatpush2.bf16.msra.mxu0 0
        %365 = vmatprep.subr.bf16.mxu0 0
        %366 = vmatpush2.bf16.msra.mxu0 0
        %367 = vmatprep.subr.bf16.mxu0 0
        %368 = vmatpush2.bf16.msra.mxu0 0
        %369 = vmatprep.subr.bf16.mxu0 0
        %370 = vmatpush2.bf16.msra.mxu0 0
        %371 = vmatprep.mubr.bf16.mxu0 0
        %372 = vmatmul.mubr.bf16.gmra.mxu0 %v328
        %v373 = vpop.f32.mrf.mxu0
        %v374 = vadd.f32 %v291, %v373
        %v375 = vpop.f32.mrf.mxu0
        %v376 = vadd.f32 %v293, %v375
        %v377 = vpop.f32.mrf.mxu0
        %v378 = vadd.f32 %v295, %v377
        %v379 = vpop.f32.mrf.mxu0
        %v380 = vadd.f32 %v297, %v379
        %381 = vmatprep.mubr.bf16.mxu0 0
        %382 = vmatmul.mubr.bf16.gmra.mxu0 %v331
        %v383 = vpop.f32.mrf.mxu0
        %v384 = vadd.f32 %v301, %v383
        %v385 = vpop.f32.mrf.mxu0
        %v386 = vadd.f32 %v303, %v385
        %v387 = vpop.f32.mrf.mxu0
        %v388 = vpop.f32.mrf.mxu0
        %389 = vdwg.mxu0
        %v390 = vld [vmem:[%s180] sm:$0xe]
        %s391 = scalar_lea.vmem [#allocation2], 64
        %v392 = vld [vmem:[%s391] sm:$0xff]
        %v393 = vld [vmem:[%s391 + $0x8] sm:$0xff]
        %v394 = vld [vmem:[%s391 + $0x10] sm:$0xff]
        %v395 = vld [vmem:[%s391 + $0x18] sm:$0x33]
        %v397 = vunpack.c.l.b16 %v390
        %v398 = vpack.c.b16 %v204, %v397
        %vm399 = vcmask 1046528
        %v400 = vrot.slane %v398, 1
        %v401 = vrot.slane %v207, 1
        %v402 = vsel %vm399, %v400, %v401
        %v407 = vunpack.c.l.b16 %v392
        %v408 = vunpack.c.h.b16 %v392
        %v409 = vunpack.c.l.b16 %v393
        %v410 = vunpack.c.h.b16 %v393
        %v411 = vunpack.c.l.b16 %v394
        %v412 = vunpack.c.h.b16 %v394
        %v413 = vunpack.c.l.b16 %v395
        %v414 = vunpack.c.h.b16 %v395
        %v415 = vpack.c.b16 %v409, %v407
        %v416 = vpack.c.b16 %v410, %v408
        %v417 = vpack.c.b16 %v413, %v411
        %v418 = vpack.c.b16 %v414, %v412
        %v422 = vsel %vm242, %v402, 0
        %v425 = vsel %vm242, %v401, 0
        %v428 = vsel %vm249, %v417, 0
        %v431 = vsel %vm249, %v418, 0
        %433 = vmatprep.subr.bf16.mxu0 0
        %434 = vmatpush1.bf16.msra.mxu0 0
        %435 = vmatprep.subr.bf16.mxu0 0
        %436 = vmatpush1.bf16.msra.mxu0 0
        %437 = vmatprep.subr.bf16.mxu0 0
        %438 = vmatpush1.bf16.msra.mxu0 0
        %439 = vmatprep.subr.bf16.mxu0 0
        %440 = vmatpush1.bf16.msra.mxu0 0
        %441 = vmatprep.subr.bf16.mxu0 0
        %442 = vmatpush1.bf16.msra.mxu0 0
        %443 = vmatprep.subr.bf16.mxu0 0
        %444 = vmatpush1.bf16.msra.mxu0 0
        %445 = vmatprep.subr.bf16.mxu0 %v431
        %446 = vmatpush1.bf16.msra.mxu0 %v428
        %447 = vmatprep.subr.bf16.mxu0 %v416
        %448 = vmatpush1.bf16.msra.mxu0 %v415
        %449 = vmatprep.subr.bf16.mxu0 0
        %450 = vmatpush2.bf16.msra.mxu0 0
        %451 = vmatprep.subr.bf16.mxu0 0
        %452 = vmatpush2.bf16.msra.mxu0 0
        %453 = vmatprep.subr.bf16.mxu0 0
        %454 = vmatpush2.bf16.msra.mxu0 0
        %455 = vmatprep.subr.bf16.mxu0 0
        %456 = vmatpush2.bf16.msra.mxu0 0
        %457 = vmatprep.subr.bf16.mxu0 0
        %458 = vmatpush2.bf16.msra.mxu0 0
        %459 = vmatprep.subr.bf16.mxu0 0
        %460 = vmatpush2.bf16.msra.mxu0 0
        %461 = vmatprep.subr.bf16.mxu0 0
        %462 = vmatpush2.bf16.msra.mxu0 0
        %463 = vmatprep.subr.bf16.mxu0 0
        %464 = vmatpush2.bf16.msra.mxu0 0
        %465 = vmatprep.mubr.bf16.mxu0 0
        %466 = vmatmul.mubr.bf16.gmra.mxu0 %v422
        %v467 = vpop.f32.mrf.mxu0
        %v468 = vadd.f32 0.0, %v467
        %v469 = vpop.f32.mrf.mxu0
        %v470 = vadd.f32 0.0, %v469
        %v471 = vpop.f32.mrf.mxu0
        %v472 = vadd.f32 0.0, %v471
        %v473 = vpop.f32.mrf.mxu0
        %v474 = vadd.f32 0.0, %v473
        %475 = vmatprep.mubr.bf16.mxu0 0
        %476 = vmatmul.mubr.bf16.gmra.mxu0 %v425
        %v477 = vpop.f32.mrf.mxu0
        %v478 = vadd.f32 0.0, %v477
        %v479 = vpop.f32.mrf.mxu0
        %v480 = vadd.f32 0.0, %v479
        %v481 = vpop.f32.mrf.mxu0
        %v482 = vpop.f32.mrf.mxu0
        %483 = vdwg.mxu0
        %v484 = vadd.f32 %v374, %v468
        %v485 = vadd.f32 %v376, %v470
        %v486 = vadd.f32 %v378, %v472
        %v487 = vadd.f32 %v380, %v474
        %v488 = vadd.f32 %v384, %v478
        %v489 = vadd.f32 %v386, %v480
        %v490 = vld [vmem:[%s180] sm:$0xe]
        %v491 = vld [vmem:[%s180 + $0x4] sm:$0xf]
        %v492 = vld [vmem:[%s180 + $0x8] sm:$0xf]
        %v493 = vld [vmem:[%s180 + $0xc] sm:$0x1]
        %s494 = scalar_lea.vmem [#allocation2], 96
        %v495 = vld [vmem:[%s494] sm:$0xff]
        %v496 = vld [vmem:[%s494 + $0x8] sm:$0xff]
        %v497 = vld [vmem:[%s494 + $0x10] sm:$0xff]
        %v498 = vld [vmem:[%s494 + $0x18] sm:$0x33]
        %v503 = vunpack.c.l.b16 %v490
        %v504 = vunpack.c.l.b16 %v491
        %v505 = vunpack.c.l.b16 %v492
        %v506 = vunpack.c.l.b16 %v493
        %v507 = vpack.c.b16 %v504, %v503
        %v508 = vpack.c.b16 %v506, %v505
        %vm509 = vsmask.f32 6400
        %v511 = vshrl.u32 %v507, 16
        %v513 = vrot.slane %v511, 1
        %v514 = vshll.u32 %v507, 16
        %v516 = vrot.slane %v514, 2
        %v517 = vor.u32 %v513, %v516
        %v519 = vshrl.u32 %v508, 16
        %v521 = vrot.slane %v519, 1
        %v522 = vshll.u32 %v508, 16
        %v524 = vrot.slane %v522, 2
        %v525 = vor.u32 %v521, %v524
        %v526 = vsel %vm509, %v517, %v525
        %v531 = vunpack.c.l.b16 %v495
        %v532 = vunpack.c.h.b16 %v495
        %v533 = vunpack.c.l.b16 %v496
        %v534 = vunpack.c.h.b16 %v496
        %v535 = vunpack.c.l.b16 %v497
        %v536 = vunpack.c.h.b16 %v497
        %v537 = vunpack.c.l.b16 %v498
        %v538 = vunpack.c.h.b16 %v498
        %v539 = vpack.c.b16 %v533, %v531
        %v540 = vpack.c.b16 %v534, %v532
        %v541 = vpack.c.b16 %v537, %v535
        %v542 = vpack.c.b16 %v538, %v536
        %v546 = vsel %vm242, %v526, 0
        %v549 = vsel %vm242, %v525, 0
        %v552 = vsel %vm249, %v541, 0
        %v555 = vsel %vm249, %v542, 0
        %557 = vmatprep.subr.bf16.mxu0 0
        %558 = vmatpush1.bf16.msra.mxu0 0
        %559 = vmatprep.subr.bf16.mxu0 0
        %560 = vmatpush1.bf16.msra.mxu0 0
        %561 = vmatprep.subr.bf16.mxu0 0
        %562 = vmatpush1.bf16.msra.mxu0 0
        %563 = vmatprep.subr.bf16.mxu0 0
        %564 = vmatpush1.bf16.msra.mxu0 0
        %565 = vmatprep.subr.bf16.mxu0 0
        %566 = vmatpush1.bf16.msra.mxu0 0
        %567 = vmatprep.subr.bf16.mxu0 0
        %568 = vmatpush1.bf16.msra.mxu0 0
        %569 = vmatprep.subr.bf16.mxu0 %v555
        %570 = vmatpush1.bf16.msra.mxu0 %v552
        %571 = vmatprep.subr.bf16.mxu0 %v540
        %572 = vmatpush1.bf16.msra.mxu0 %v539
        %573 = vmatprep.subr.bf16.mxu0 0
        %574 = vmatpush2.bf16.msra.mxu0 0
        %575 = vmatprep.subr.bf16.mxu0 0
        %576 = vmatpush2.bf16.msra.mxu0 0
        %577 = vmatprep.subr.bf16.mxu0 0
        %578 = vmatpush2.bf16.msra.mxu0 0
        %579 = vmatprep.subr.bf16.mxu0 0
        %580 = vmatpush2.bf16.msra.mxu0 0
        %581 = vmatprep.subr.bf16.mxu0 0
        %582 = vmatpush2.bf16.msra.mxu0 0
        %583 = vmatprep.subr.bf16.mxu0 0
        %584 = vmatpush2.bf16.msra.mxu0 0
        %585 = vmatprep.subr.bf16.mxu0 0
        %586 = vmatpush2.bf16.msra.mxu0 0
        %587 = vmatprep.subr.bf16.mxu0 0
        %588 = vmatpush2.bf16.msra.mxu0 0
        %589 = vmatprep.mubr.bf16.mxu0 0
        %590 = vmatmul.mubr.bf16.gmra.mxu0 %v546
        %v591 = vpop.f32.mrf.mxu0
        %v592 = vadd.f32 0.0, %v591
        %v593 = vpop.f32.mrf.mxu0
        %v594 = vadd.f32 0.0, %v593
        %v595 = vpop.f32.mrf.mxu0
        %v596 = vadd.f32 0.0, %v595
        %v597 = vpop.f32.mrf.mxu0
        %v598 = vadd.f32 0.0, %v597
        %599 = vmatprep.mubr.bf16.mxu0 0
        %600 = vmatmul.mubr.bf16.gmra.mxu0 %v549
        %v601 = vpop.f32.mrf.mxu0
        %v602 = vadd.f32 0.0, %v601
        %v603 = vpop.f32.mrf.mxu0
        %v604 = vadd.f32 0.0, %v603
        %v605 = vpop.f32.mrf.mxu0
        %v606 = vpop.f32.mrf.mxu0
        %607 = vdwg.mxu0
        %v608 = vadd.f32 %v484, %v592
        %v609 = vadd.f32 %v485, %v594
        %v610 = vadd.f32 %v486, %v596
        %v611 = vadd.f32 %v487, %v598
        %v612 = vadd.f32 %v488, %v602
        %v613 = vadd.f32 %v489, %v604
        %v614 = vld [vmem:[%s180] sm:$0xc]
        %s615 = scalar_lea.vmem [#allocation2], 128
        %v616 = vld [vmem:[%s615] sm:$0xff]
        %v617 = vld [vmem:[%s615 + $0x8] sm:$0xff]
        %v618 = vld [vmem:[%s615 + $0x10] sm:$0xff]
        %v619 = vld [vmem:[%s615 + $0x18] sm:$0x33]
        %v621 = vunpack.c.l.b16 %v614
        %v622 = vpack.c.b16 %v504, %v621
        %vm623 = vcmask 1045504
        %v624 = vrot.slane %v622, 2
        %v625 = vrot.slane %v508, 2
        %v626 = vsel %vm623, %v624, %v625
        %v631 = vunpack.c.l.b16 %v616
        %v632 = vunpack.c.h.b16 %v616
        %v633 = vunpack.c.l.b16 %v617
        %v634 = vunpack.c.h.b16 %v617
        %v635 = vunpack.c.l.b16 %v618
        %v636 = vunpack.c.h.b16 %v618
        %v637 = vunpack.c.l.b16 %v619
        %v638 = vunpack.c.h.b16 %v619
        %v639 = vpack.c.b16 %v633, %v631
        %v640 = vpack.c.b16 %v634, %v632
        %v641 = vpack.c.b16 %v637, %v635
        %v642 = vpack.c.b16 %v638, %v636
        %v646 = vsel %vm242, %v626, 0
        %v649 = vsel %vm242, %v625, 0
        %v652 = vsel %vm249, %v641, 0
        %v655 = vsel %vm249, %v642, 0
        %657 = vmatprep.subr.bf16.mxu0 0
        %658 = vmatpush1.bf16.msra.mxu0 0
        %659 = vmatprep.subr.bf16.mxu0 0
        %660 = vmatpush1.bf16.msra.mxu0 0
        %661 = vmatprep.subr.bf16.mxu0 0
        %662 = vmatpush1.bf16.msra.mxu0 0
        %663 = vmatprep.subr.bf16.mxu0 0
        %664 = vmatpush1.bf16.msra.mxu0 0
        %665 = vmatprep.subr.bf16.mxu0 0
        %666 = vmatpush1.bf16.msra.mxu0 0
        %667 = vmatprep.subr.bf16.mxu0 0
        %668 = vmatpush1.bf16.msra.mxu0 0
        %669 = vmatprep.subr.bf16.mxu0 %v655
        %670 = vmatpush1.bf16.msra.mxu0 %v652
        %671 = vmatprep.subr.bf16.mxu0 %v640
        %672 = vmatpush1.bf16.msra.mxu0 %v639
        %673 = vmatprep.subr.bf16.mxu0 0
        %674 = vmatpush2.bf16.msra.mxu0 0
        %675 = vmatprep.subr.bf16.mxu0 0
        %676 = vmatpush2.bf16.msra.mxu0 0
        %677 = vmatprep.subr.bf16.mxu0 0
        %678 = vmatpush2.bf16.msra.mxu0 0
        %679 = vmatprep.subr.bf16.mxu0 0
        %680 = vmatpush2.bf16.msra.mxu0 0
        %681 = vmatprep.subr.bf16.mxu0 0
        %682 = vmatpush2.bf16.msra.mxu0 0
        %683 = vmatprep.subr.bf16.mxu0 0
        %684 = vmatpush2.bf16.msra.mxu0 0
        %685 = vmatprep.subr.bf16.mxu0 0
        %686 = vmatpush2.bf16.msra.mxu0 0
        %687 = vmatprep.subr.bf16.mxu0 0
        %688 = vmatpush2.bf16.msra.mxu0 0
        %689 = vmatprep.mubr.bf16.mxu0 0
        %690 = vmatmul.mubr.bf16.gmra.mxu0 %v646
        %v691 = vpop.f32.mrf.mxu0
        %v692 = vadd.f32 0.0, %v691
        %v693 = vpop.f32.mrf.mxu0
        %v694 = vadd.f32 0.0, %v693
        %v695 = vpop.f32.mrf.mxu0
        %v696 = vadd.f32 0.0, %v695
        %v697 = vpop.f32.mrf.mxu0
        %v698 = vadd.f32 0.0, %v697
        %699 = vmatprep.mubr.bf16.mxu0 0
        %700 = vmatmul.mubr.bf16.gmra.mxu0 %v649
        %v701 = vpop.f32.mrf.mxu0
        %v702 = vadd.f32 0.0, %v701
        %v703 = vpop.f32.mrf.mxu0
        %v704 = vadd.f32 0.0, %v703
        %v705 = vpop.f32.mrf.mxu0
        %v706 = vpop.f32.mrf.mxu0
        %707 = vdwg.mxu0
        %v708 = vadd.f32 %v608, %v692
        %v709 = vadd.f32 %v609, %v694
        %v710 = vadd.f32 %v610, %v696
        %v711 = vadd.f32 %v611, %v698
        %v712 = vadd.f32 %v612, %v702
        %v713 = vadd.f32 %v613, %v704
        %v714 = vld [vmem:[%s180 + $0xc] sm:$0x3]
        %s715 = scalar_lea.vmem [#allocation2], 160
        %v716 = vld [vmem:[%s715] sm:$0xff]
        %v717 = vld [vmem:[%s715 + $0x8] sm:$0xff]
        %v718 = vld [vmem:[%s715 + $0x10] sm:$0xff]
        %v719 = vld [vmem:[%s715 + $0x18] sm:$0x33]
        %v721 = vunpack.c.l.b16 %v714
        %v722 = vpack.c.b16 %v721, %v505
        %vm723 = vsmask.f32 5376
        %v725 = vshrl.u32 %v622, 16
        %v727 = vrot.slane %v725, 2
        %v728 = vshll.u32 %v622, 16
        %v730 = vrot.slane %v728, 3
        %v731 = vor.u32 %v727, %v730
        %v733 = vshrl.u32 %v722, 16
        %v735 = vrot.slane %v733, 2
        %v736 = vshll.u32 %v722, 16
        %v738 = vrot.slane %v736, 3
        %v739 = vor.u32 %v735, %v738
        %v740 = vsel %vm723, %v731, %v739
        %v745 = vunpack.c.l.b16 %v716
        %v746 = vunpack.c.h.b16 %v716
        %v747 = vunpack.c.l.b16 %v717
        %v748 = vunpack.c.h.b16 %v717
        %v749 = vunpack.c.l.b16 %v718
        %v750 = vunpack.c.h.b16 %v718
        %v751 = vunpack.c.l.b16 %v719
        %v752 = vunpack.c.h.b16 %v719
        %v753 = vpack.c.b16 %v747, %v745
        %v754 = vpack.c.b16 %v748, %v746
        %v755 = vpack.c.b16 %v751, %v749
        %v756 = vpack.c.b16 %v752, %v750
        %v760 = vsel %vm242, %v740, 0
        %v763 = vsel %vm242, %v739, 0
        %v766 = vsel %vm249, %v755, 0
        %v769 = vsel %vm249, %v756, 0
        %771 = vmatprep.subr.bf16.mxu0 0
        %772 = vmatpush1.bf16.msra.mxu0 0
        %773 = vmatprep.subr.bf16.mxu0 0
        %774 = vmatpush1.bf16.msra.mxu0 0
        %775 = vmatprep.subr.bf16.mxu0 0
        %776 = vmatpush1.bf16.msra.mxu0 0
        %777 = vmatprep.subr.bf16.mxu0 0
        %778 = vmatpush1.bf16.msra.mxu0 0
        %779 = vmatprep.subr.bf16.mxu0 0
        %780 = vmatpush1.bf16.msra.mxu0 0
        %781 = vmatprep.subr.bf16.mxu0 0
        %782 = vmatpush1.bf16.msra.mxu0 0
        %783 = vmatprep.subr.bf16.mxu0 %v769
        %784 = vmatpush1.bf16.msra.mxu0 %v766
        %785 = vmatprep.subr.bf16.mxu0 %v754
        %786 = vmatpush1.bf16.msra.mxu0 %v753
        %787 = vmatprep.subr.bf16.mxu0 0
        %788 = vmatpush2.bf16.msra.mxu0 0
        %789 = vmatprep.subr.bf16.mxu0 0
        %790 = vmatpush2.bf16.msra.mxu0 0
        %791 = vmatprep.subr.bf16.mxu0 0
        %792 = vmatpush2.bf16.msra.mxu0 0
        %793 = vmatprep.subr.bf16.mxu0 0
        %794 = vmatpush2.bf16.msra.mxu0 0
        %795 = vmatprep.subr.bf16.mxu0 0
        %796 = vmatpush2.bf16.msra.mxu0 0
        %797 = vmatprep.subr.bf16.mxu0 0
        %798 = vmatpush2.bf16.msra.mxu0 0
        %799 = vmatprep.subr.bf16.mxu0 0
        %800 = vmatpush2.bf16.msra.mxu0 0
        %801 = vmatprep.subr.bf16.mxu0 0
        %802 = vmatpush2.bf16.msra.mxu0 0
        %803 = vmatprep.mubr.bf16.mxu0 0
        %804 = vmatmul.mubr.bf16.gmra.mxu0 %v760
        %v805 = vpop.f32.mrf.mxu0
        %v806 = vadd.f32 0.0, %v805
        %v807 = vpop.f32.mrf.mxu0
        %v808 = vadd.f32 0.0, %v807
        %v809 = vpop.f32.mrf.mxu0
        %v810 = vadd.f32 0.0, %v809
        %v811 = vpop.f32.mrf.mxu0
        %v812 = vadd.f32 0.0, %v811
        %813 = vmatprep.mubr.bf16.mxu0 0
        %814 = vmatmul.mubr.bf16.gmra.mxu0 %v763
        %v815 = vpop.f32.mrf.mxu0
        %v816 = vadd.f32 0.0, %v815
        %v817 = vpop.f32.mrf.mxu0
        %v818 = vadd.f32 0.0, %v817
        %v819 = vpop.f32.mrf.mxu0
        %v820 = vpop.f32.mrf.mxu0
        %821 = vdwg.mxu0
        %v822 = vadd.f32 %v708, %v806
        %v823 = vadd.f32 %v709, %v808
        %v824 = vadd.f32 %v710, %v810
        %v825 = vadd.f32 %v711, %v812
        %v826 = vadd.f32 %v712, %v816
        %v827 = vadd.f32 %v713, %v818
        %v828 = vld [vmem:[%s180] sm:$0x8]
        %s829 = scalar_lea.vmem [#allocation2], 192
        %v830 = vld [vmem:[%s829] sm:$0xff]
        %v831 = vld [vmem:[%s829 + $0x8] sm:$0xff]
        %v832 = vld [vmem:[%s829 + $0x10] sm:$0xff]
        %v833 = vld [vmem:[%s829 + $0x18] sm:$0x33]
        %v835 = vunpack.c.l.b16 %v828
        %v836 = vpack.c.b16 %v504, %v835
        %vm837 = vcmask 1044480
        %v838 = vrot.slane %v836, 3
        %v839 = vrot.slane %v722, 3
        %v840 = vsel %vm837, %v838, %v839
        %v845 = vunpack.c.l.b16 %v830
        %v846 = vunpack.c.h.b16 %v830
        %v847 = vunpack.c.l.b16 %v831
        %v848 = vunpack.c.h.b16 %v831
        %v849 = vunpack.c.l.b16 %v832
        %v850 = vunpack.c.h.b16 %v832
        %v851 = vunpack.c.l.b16 %v833
        %v852 = vunpack.c.h.b16 %v833
        %v853 = vpack.c.b16 %v847, %v845
        %v854 = vpack.c.b16 %v848, %v846
        %v855 = vpack.c.b16 %v851, %v849
        %v856 = vpack.c.b16 %v852, %v850
        %v860 = vsel %vm242, %v840, 0
        %v863 = vsel %vm242, %v839, 0
        %v866 = vsel %vm249, %v855, 0
        %v869 = vsel %vm249, %v856, 0
        %871 = vmatprep.subr.bf16.mxu0 0
        %872 = vmatpush1.bf16.msra.mxu0 0
        %873 = vmatprep.subr.bf16.mxu0 0
        %874 = vmatpush1.bf16.msra.mxu0 0
        %875 = vmatprep.subr.bf16.mxu0 0
        %876 = vmatpush1.bf16.msra.mxu0 0
        %877 = vmatprep.subr.bf16.mxu0 0
        %878 = vmatpush1.bf16.msra.mxu0 0
        %879 = vmatprep.subr.bf16.mxu0 0
        %880 = vmatpush1.bf16.msra.mxu0 0
        %881 = vmatprep.subr.bf16.mxu0 0
        %882 = vmatpush1.bf16.msra.mxu0 0
        %883 = vmatprep.subr.bf16.mxu0 %v869
        %884 = vmatpush1.bf16.msra.mxu0 %v866
        %885 = vmatprep.subr.bf16.mxu0 %v854
        %886 = vmatpush1.bf16.msra.mxu0 %v853
        %887 = vmatprep.subr.bf16.mxu0 0
        %888 = vmatpush2.bf16.msra.mxu0 0
        %889 = vmatprep.subr.bf16.mxu0 0
        %890 = vmatpush2.bf16.msra.mxu0 0
        %891 = vmatprep.subr.bf16.mxu0 0
        %892 = vmatpush2.bf16.msra.mxu0 0
        %893 = vmatprep.subr.bf16.mxu0 0
        %894 = vmatpush2.bf16.msra.mxu0 0
        %895 = vmatprep.subr.bf16.mxu0 0
        %896 = vmatpush2.bf16.msra.mxu0 0
        %897 = vmatprep.subr.bf16.mxu0 0
        %898 = vmatpush2.bf16.msra.mxu0 0
        %899 = vmatprep.subr.bf16.mxu0 0
        %900 = vmatpush2.bf16.msra.mxu0 0
        %901 = vmatprep.subr.bf16.mxu0 0
        %902 = vmatpush2.bf16.msra.mxu0 0
        %903 = vmatprep.mubr.bf16.mxu0 0
        %904 = vmatmul.mubr.bf16.gmra.mxu0 %v860
        %v905 = vpop.f32.mrf.mxu0
        %v906 = vadd.f32 0.0, %v905
        %v907 = vpop.f32.mrf.mxu0
        %v908 = vadd.f32 0.0, %v907
        %v909 = vpop.f32.mrf.mxu0
        %v910 = vadd.f32 0.0, %v909
        %v911 = vpop.f32.mrf.mxu0
        %v912 = vadd.f32 0.0, %v911
        %913 = vmatprep.mubr.bf16.mxu0 0
        %914 = vmatmul.mubr.bf16.gmra.mxu0 %v863
        %v915 = vpop.f32.mrf.mxu0
        %v916 = vadd.f32 0.0, %v915
        %v917 = vpop.f32.mrf.mxu0
        %v918 = vadd.f32 0.0, %v917
        %v919 = vpop.f32.mrf.mxu0
        %v920 = vpop.f32.mrf.mxu0
        %921 = vdwg.mxu0
        %v922 = vadd.f32 %v822, %v906
        %v923 = vadd.f32 %v823, %v908
        %v924 = vadd.f32 %v824, %v910
        %v925 = vadd.f32 %v825, %v912
        %v926 = vadd.f32 %v826, %v916
        %v927 = vadd.f32 %v827, %v918
        %v928 = vld [vmem:[%s2] sm:$0x3]
        %v930 = vlaneseq
        %v931 = vshrl.u32 %v930, 7
        %v932 = vsub.s32 0, %v931
        %v933 = vrot.slane %v928, %v932
        %v934 = vlaneseq
        %v935 = vshrl.u32 %v934, 7
        %v936 = vsub.s32 1, %v935
        %v937 = vrot.slane %v928, %v936
        %v940 = vadd.f32 %v922, %v933
        %v941 = vadd.f32 %v923, %v937
        %v942 = vadd.f32 %v924, %v933
        %v943 = vadd.f32 %v925, %v937
        %v944 = vadd.f32 %v926, %v933
        %v945 = vadd.f32 %v927, %v937
        %v946 = vmax.f32 %v940, 0.0
        %v947 = vmax.f32 %v941, 0.0
        %v948 = vmax.f32 %v942, 0.0
        %v949 = vmax.f32 %v943, 0.0
        %v950 = vmax.f32 %v944, 0.0
        %v951 = vmax.f32 %v945, 0.0
        %v952 = vpack.c.bf16 %v948, %v946
        %v953 = vpack.c.bf16 %v949, %v947
        %v954 = vpack.c.bf16 %v950, %v950
        %v955 = vpack.c.bf16 %v951, %v951
        %v960 = vunpack.c.l.b16 %v952
        %v961 = vunpack.c.l.b16 %v953
        %v962 = vunpack.c.h.b16 %v952
        %v963 = vunpack.c.h.b16 %v953
        %v964 = vunpack.c.l.b16 %v954
        %v965 = vunpack.c.l.b16 %v955
        %v966 = vpack.c.b16 %v961, %v960
        %v967 = vpack.c.b16 %v963, %v962
        %v968 = vpack.c.b16 %v965, %v964
        %vm972 = vcmask 1043456
        %vm973 = vcmask 392196
        %vm974 = vmor %vm973, %vm972
        %975 = vst.msk [vmem:[%s185] sm:$0xff] %vm974, %v966
        %976 = vst.msk [vmem:[%s185 + $0x8] sm:$0xff] %vm974, %v967
        %vm977 = vcmask 1042432
        %vm978 = vcmask 391172
        %vm979 = vmor %vm978, %vm977
        %980 = vst.msk [vmem:[%s185 + $0x10] sm:$0x77] %vm979, %v968
        %p981 = scmp.lt.s32.totalorder %s15, 1
        %s982 = scalar_select %p981, %s15, 1
        %s983 = smul.addr %s982, 6
        %s984 = smul.addr %s983, 4
        %s985 = scalar_lea.vmem %s3, %s984
        // Predicated region
        $region37: #{forward.6} parent=31 // pred_check
          %p986 = pneg %p101
        $region38: #{forward.6} parent=31 // pred_check_branch
          %988 = sbr.rel (%p986) target = $region40
        $region39: #{forward.6} parent=31 // pred_region
          _
        $region40: #{forward.6} parent=31 // pred_fallthru
          _
      $region32: #{forward.6} parent=5 // pred_fallthru
        _
      %p989 = scmp.le.s32.totalorder 2, %s10
      // Predicated region
      $region41: #{forward.6} parent=5 // pred_check
        %p990 = pneg %p989
      $region42: #{forward.6} parent=5 // pred_check_branch
        %992 = sbr.rel (%p990) target = $region44
      $region43: #{forward.6} parent=5 // pred_region
        %s993 = ssub.s32 %s10, 2
        // Predicated region
        $region45: #{forward.6} parent=43 // pred_check
          %p994 = pneg %p107
        $region46: #{forward.6} parent=43 // pred_check_branch
          %996 = sbr.rel (%p994) target = $region48
        $region47: #{forward.6} parent=43 // pred_region
          %p997 = scmp.lt.s32.totalorder %s16, 1
          %s998 = scalar_select %p997, %s16, 1
          %s999 = smul.addr %s998, 6
          %s1000 = smul.addr %s999, 4
          %s1001 = scalar_lea.vmem %s3, %s1000
        $region48: #{forward.6} parent=43 // pred_fallthru
          _
      $region44: #{forward.6} parent=5 // pred_fallthru
        _
    $region6: #{forward.6} parent=1 // loop_footer
      %s14 = sadd.s32 1, %s10
    $region7: #{forward.6} parent=1 // loop_footer_branch
      %9 = sbr.rel target = $region3
    $region8: #{forward.6} parent=1 // loop_exit
      _
    %1002 = vsyncpa [#allocation3], 1
    %s1003 = scalar_lea.sflag [#allocation3], 1
    %1004 = vsyncpa %s1003, 1

// kernel: forward.7
$region0: #{forward.7}
  #allocation0 [shape = 'u32[]', space=smem, size = 0x4, offset = 0x4, fixed_abs, tag = 'smem constant byte address 0x4 - core index']
  #allocation1 [shape = 'u32[144,128]{1,0:T(1,128)}', space=vmem, size = 0x12000, scoped, tag = 'internal scratch']
  %s0 = inlined_call_operand.vmem [shape: bf16[2,11,88], index: 0, kind: input, shape index: {}]
  %s1 = inlined_call_operand.vmem [shape: bf16[5,88,70], index: 1, kind: input, shape index: {}]
  %s2 = inlined_call_operand.vmem [shape: f32[1,70], index: 2, kind: input, shape index: {}]
  %s3 = inlined_call_operand.vmem [shape: bf16[2,7,70], index: 3, kind: output, shape index: {}]
  %s4 = sld [smem:[#allocation0]]
  $region45: #{forward.7} parent=0
    _
  %s6 = ssub.s32 1, %s4
  %s7 = scalar_select 0, %s6, %s4
  loop: start=0, step=1, limit=4
  $region2: #{forward.7} parent=0 // loop_pre_header
    _
  $region3: #{forward.7} parent=0 // loop_header
    %s9 = sphi 0, %s13
    %p10 = scmp.ge.s32.totalorder %s9, 4
    %s19 = sphi 0, %s21
    %s22 = sphi 0, %s19
    %s23 = sphi 0, %s22
    %s39 = sphi 0, %s23
    %s43 = sphi 0, %s43
    %s45 = sphi 0, %s43
    %s46 = sphi 0, %s45
    %s60 = sphi 0, %s46
    %s64 = sphi 0, %s64
    %s66 = sphi 0, %s64
    %s67 = sphi 0, %s66
    %s81 = sphi 0, %s67
    %s87 = sphi 0, %s89
    %s90 = sphi 0, %s87
    %s91 = sphi 0, %s90
    %s107 = sphi 0, %s91
  $region4: #{forward.7} parent=0 // loop_header_branch
    %12 = sbr.rel (%p10) target = $region8
  $region5: #{forward.7} parent=0 // loop_body
    %s14 = ssub.s32 %s9, 1
    %s15 = ssub.s32 %s9, 2
    %s16 = sadd.s32 %s9, 1
    %s17 = ssub.s32 %s9, %s16
    %p18 = scmp.eq.s32.totalorder %s17, 0
    %s20 = sadd.s32 %s19, 1
    %s21 = scalar_select %p18, %s19, %s20
    %p24 = pneg %p18
    %p25 = scmp.eq.s32.totalorder %s9, 1
    %p26 = por %p24, %p25
    %p27 = scmp.ne.s32.totalorder %s19, %s22
    %p28 = scmp.eq.s32.totalorder %s9, 0
    %p29 = por %p27, %p28
    %p30 = scmp.ne.s32.totalorder %s19, %s22
    %p31 = scmp.eq.s32.totalorder %s14, 1
    %p32 = por %p30, %p31
    %p33 = scmp.ne.s32.totalorder %s22, %s23
    %p34 = scmp.eq.s32.totalorder %s14, 0
    %p35 = por %p33, %p34
    %p36 = scmp.ne.s32.totalorder %s22, %s23
    %p37 = scmp.eq.s32.totalorder %s15, 1
    %p38 = por %p36, %p37
    %p40 = scmp.ne.s32.totalorder %s23, %s39
    %p41 = scmp.eq.s32.totalorder %s15, 0
    %p42 = por %p40, %p41
    %s44 = sadd.s32 %s43, 1
    %p47 = scmp.eq.s32.totalorder %s9, 1
    %p48 = scmp.ne.s32.totalorder %s43, %s45
    %p49 = scmp.eq.s32.totalorder %s9, 0
    %p50 = por %p48, %p49
    %p51 = scmp.ne.s32.totalorder %s43, %s45
    %p52 = scmp.eq.s32.totalorder %s14, 1
    %p53 = por %p51, %p52
    %p54 = scmp.ne.s32.totalorder %s45, %s46
    %p55 = scmp.eq.s32.totalorder %s14, 0
    %p56 = por %p54, %p55
    %p57 = scmp.ne.s32.totalorder %s45, %s46
    %p58 = scmp.eq.s32.totalorder %s15, 1
    %p59 = por %p57, %p58
    %p61 = scmp.ne.s32.totalorder %s46, %s60
    %p62 = scmp.eq.s32.totalorder %s15, 0
    %p63 = por %p61, %p62
    %s65 = sadd.s32 %s64, 1
    %p68 = scmp.eq.s32.totalorder %s9, 1
    %p69 = scmp.ne.s32.totalorder %s64, %s66
    %p70 = scmp.eq.s32.totalorder %s9, 0
    %p71 = por %p69, %p70
    %p72 = scmp.ne.s32.totalorder %s64, %s66
    %p73 = scmp.eq.s32.totalorder %s14, 1
    %p74 = por %p72, %p73
    %p75 = scmp.ne.s32.totalorder %s66, %s67
    %p76 = scmp.eq.s32.totalorder %s14, 0
    %p77 = por %p75, %p76
    %p78 = scmp.ne.s32.totalorder %s66, %s67
    %p79 = scmp.eq.s32.totalorder %s15, 1
    %p80 = por %p78, %p79
    %p82 = scmp.ne.s32.totalorder %s67, %s81
    %p83 = scmp.eq.s32.totalorder %s15, 0
    %p84 = por %p82, %p83
    %s85 = ssub.s32 %s9, %s16
    %p86 = scmp.eq.s32.totalorder %s85, 0
    %s88 = sadd.s32 %s87, 1
    %s89 = scalar_select %p86, %s87, %s88
    %p92 = pneg %p86
    %p93 = scmp.eq.s32.totalorder %s9, 1
    %p94 = por %p92, %p93
    %p95 = scmp.ne.s32.totalorder %s87, %s90
    %p96 = scmp.eq.s32.totalorder %s9, 0
    %p97 = por %p95, %p96
    %p98 = scmp.ne.s32.totalorder %s87, %s90
    %p99 = scmp.eq.s32.totalorder %s14, 1
    %p100 = por %p98, %p99
    %p101 = scmp.ne.s32.totalorder %s90, %s91
    %p102 = scmp.eq.s32.totalorder %s14, 0
    %p103 = por %p101, %p102
    %p104 = scmp.ne.s32.totalorder %s90, %s91
    %p105 = scmp.eq.s32.totalorder %s15, 1
    %p106 = por %p104, %p105
    %p108 = scmp.ne.s32.totalorder %s91, %s107
    %p109 = scmp.eq.s32.totalorder %s15, 0
    %p110 = por %p108, %p109
    %p111 = scmp.le.s32.totalorder 1, %s9
    %p112 = scmp.lt.s32.totalorder %s9, 3
    %p113 = pnand %p111, %p112
    %p114 = pneg %p113
    // Predicated region
    $region9: #{forward.7} parent=5 // pred_check
      _
    $region10: #{forward.7} parent=5 // pred_check_branch
      %116 = sbr.rel (%p113) target = $region12
    $region11: #{forward.7} parent=5 // pred_region
      %s117 = ssub.s32 %s9, 1
      // Predicated region
      $region13: #{forward.7} parent=11 // pred_check
        %p118 = pneg %p56
      $region14: #{forward.7} parent=11 // pred_check_branch
        %120 = sbr.rel (%p118) target = $region16
      $region15: #{forward.7} parent=11 // pred_region
        _
      $region16: #{forward.7} parent=11 // pred_fallthru
        _
      // Predicated region
      $region17: #{forward.7} parent=11 // pred_check
        %p121 = pneg %p77
      $region18: #{forward.7} parent=11 // pred_check_branch
        %123 = sbr.rel (%p121) target = $region20
      $region19: #{forward.7} parent=11 // pred_region
        _
      $region20: #{forward.7} parent=11 // pred_fallthru
        _
    $region12: #{forward.7} parent=5 // pred_fallthru
      _
    %p124 = scmp.lt.s32.totalorder %s9, 2
    // Predicated region
    $region21: #{forward.7} parent=5 // pred_check
      %p125 = pneg %p124
    $region22: #{forward.7} parent=5 // pred_check_branch
      %127 = sbr.rel (%p125) target = $region24
    $region23: #{forward.7} parent=5 // pred_region
      // Predicated region
      $region25: #{forward.7} parent=23 // pred_check
        %p128 = pneg %p29
      $region26: #{forward.7} parent=23 // pred_check_branch
        %130 = sbr.rel (%p128) target = $region28
      $region27: #{forward.7} parent=23 // pred_region
        %p131 = scmp.lt.s32.totalorder %s9, 1
        %s132 = scalar_select %p131, %s9, 1
        %s133 = smul.addr %s132, 2
        %s134 = smul.addr %s133, 4
        %s135 = scalar_lea.vmem %s0, %s134
      $region28: #{forward.7} parent=23 // pred_fallthru
        _
    $region24: #{forward.7} parent=5 // pred_fallthru
      _
    %p136 = scmp.le.s32.totalorder 1, %s9
    %p137 = scmp.lt.s32.totalorder %s9, 3
    %p138 = pnand %p136, %p137
    %p139 = pneg %p138
    // Predicated region
    $region29: #{forward.7} parent=5 // pred_check
      _
    $region30: #{forward.7} parent=5 // pred_check_branch
      %141 = sbr.rel (%p138) target = $region32
    $region31: #{forward.7} parent=5 // pred_region
      %s142 = ssub.s32 %s9, 1
      %p143 = scmp.lt.s32.totalorder %s14, 1
      %s144 = scalar_select %p143, %s14, 1
      %s145 = smul.addr %s144, 2
      %s146 = smul.addr %s145, 4
      %s147 = scalar_lea.vmem %s0, %s146
      %p148 = pneg %p35
      %p149 = pneg %p32
      %p150 = pneg %p56
      %p151 = pneg %p53
      %p152 = pneg %p77
      %p153 = pneg %p74
      %p154 = pneg %p103
      %p155 = pneg %p100
      %p156 = scmp.lt.s32.totalorder %s14, 1
      %s157 = scalar_select %p156, %s14, 1
      %s158 = smul.addr %s157, 4
      %s159 = scalar_lea.vmem %s3, %s158
      %p160 = scmp.lt.s32.totalorder %s14, 1
      %s161 = scalar_select %p160, %s14, 1
      %s162 = smul.addr %s161, 2
      %s163 = smul.addr %s162, 4
      %s164 = scalar_lea.vmem %s0, %s163
      %p165 = scmp.lt.s32.totalorder %s14, 1
      %s166 = scalar_select %p165, %s14, 1
      %s167 = smul.addr %s166, 4
      %s168 = scalar_lea.vmem %s3, %s167
      %v170 = vld [vmem:[%s164] sm:$0xf]
      %v171 = vld [vmem:[%s1] sm:$0xf]
      %v172 = vld [vmem:[%s1 + $0x4] sm:$0xf]
      %v173 = vld [vmem:[%s1 + $0x8] sm:$0xf]
      %v174 = vld [vmem:[%s1 + $0xc] sm:$0xf]
      %v175 = vld [vmem:[%s1 + $0x10] sm:$0xf]
      %v176 = vld [vmem:[%s1 + $0x14] sm:$0xf]
      %v177 = vld [vmem:[%s1 + $0x18] sm:$0xf]
      %v178 = vld [vmem:[%s1 + $0x1c] sm:$0xf]
      %v179 = vld [vmem:[%s1 + $0x20] sm:$0xf]
      %v180 = vld [vmem:[%s1 + $0x24] sm:$0xf]
      %v181 = vld [vmem:[%s1 + $0x28] sm:$0xf]
      %s182 = scalar_lea.vmem %s1, 44
      %v183 = vld [vmem:[%s182] sm:$0xf]
      %v184 = vld [vmem:[%s182 + $0x4] sm:$0xf]
      %v185 = vld [vmem:[%s182 + $0x8] sm:$0xf]
      %v186 = vld [vmem:[%s182 + $0xc] sm:$0xf]
      %v187 = vld [vmem:[%s182 + $0x10] sm:$0xf]
      %v188 = vld [vmem:[%s182 + $0x14] sm:$0xf]
      %v189 = vld [vmem:[%s182 + $0x18] sm:$0xf]
      %v190 = vld [vmem:[%s182 + $0x1c] sm:$0xf]
      %v191 = vld [vmem:[%s182 + $0x20] sm:$0xf]
      %v192 = vld [vmem:[%s182 + $0x24] sm:$0xf]
      %v193 = vld [vmem:[%s182 + $0x28] sm:$0xf]
      %v195 = vunpack.c.l.b16 %v170
      %v196 = vpack.c.b16 %v195, %v195
      %v198 = vshrl.u32 %v196, 16
      %v200 = vshll.u32 %v196, 16
      %v202 = vrot.slane %v200, 1
      %v203 = vor.u32 %v198, %v202
      %v215 = vunpack.c.l.b16 %v183
      %v216 = vunpack.c.l.b16 %v184
      %v217 = vunpack.c.l.b16 %v185
      %v218 = vunpack.c.l.b16 %v186
      %v219 = vunpack.c.l.b16 %v187
      %v220 = vunpack.c.l.b16 %v188
      %v221 = vunpack.c.l.b16 %v189
      %v222 = vunpack.c.l.b16 %v190
      %v223 = vunpack.c.l.b16 %v191
      %v224 = vunpack.c.l.b16 %v192
      %v225 = vunpack.c.l.b16 %v193
      %v226 = vpack.c.b16 %v216, %v215
      %v227 = vpack.c.b16 %v218, %v217
      %v228 = vpack.c.b16 %v220, %v219
      %v229 = vpack.c.b16 %v222, %v221
      %v230 = vpack.c.b16 %v224, %v223
      %v231 = vpack.c.b16 %v225, %v225
      %vm237 = vcmask 719872
      %v239 = vsel %vm237, %v203, 0
      %vm241 = vcmask 1043456
      %v243 = vsel %vm241, %v231, 0
      %245 = vmatprep.subr.bf16.mxu0 0
      %246 = vmatpush1.bf16.msra.mxu0 0
      %247 = vmatprep.subr.bf16.mxu0 0
      %248 = vmatpush1.bf16.msra.mxu0 0
      %249 = vmatprep.subr.bf16.mxu0 0
      %250 = vmatpush1.bf16.msra.mxu0 %v243
      %251 = vmatprep.subr.bf16.mxu0 0
      %252 = vmatpush1.bf16.msra.mxu0 %v230
      %253 = vmatprep.subr.bf16.mxu0 0
      %254 = vmatpush1.bf16.msra.mxu0 %v229
      %255 = vmatprep.subr.bf16.mxu0 0
      %256 = vmatpush1.bf16.msra.mxu0 %v228
      %257 = vmatprep.subr.bf16.mxu0 0
      %258 = vmatpush1.bf16.msra.mxu0 %v227
      %259 = vmatprep.subr.bf16.mxu0 0
      %260 = vmatpush1.bf16.msra.mxu0 %v226
      %261 = vmatprep.subr.bf16.mxu0 0
      %262 = vmatpush2.bf16.msra.mxu0 0
      %263 = vmatprep.subr.bf16.mxu0 0
      %264 = vmatpush2.bf16.msra.mxu0 0
      %265 = vmatprep.subr.bf16.mxu0 0
      %266 = vmatpush2.bf16.msra.mxu0 0
      %267 = vmatprep.subr.bf16.mxu0 0
      %268 = vmatpush2.bf16.msra.mxu0 0
      %269 = vmatprep.subr.bf16.mxu0 0
      %270 = vmatpush2.bf16.msra.mxu0 0
      %271 = vmatprep.subr.bf16.mxu0 0
      %272 = vmatpush2.bf16.msra.mxu0 0
      %273 = vmatprep.subr.bf16.mxu0 0
      %274 = vmatpush2.bf16.msra.mxu0 0
      %275 = vmatprep.subr.bf16.mxu0 0
      %276 = vmatpush2.bf16.msra.mxu0 0
      %277 = vmatprep.mubr.bf16.mxu0 0
      %278 = vmatmul.mubr.bf16.gmra.mxu0 %v239
      %v279 = vpop.f32.mrf.mxu0
      %v280 = vadd.f32 0.0, %v279
      %v281 = vpop.f32.mrf.mxu0
      %v282 = vpop.f32.mrf.mxu0
      %v283 = vpop.f32.mrf.mxu0
      %284 = vdwg.mxu0
      %v296 = vunpack.c.l.b16 %v171
      %v297 = vunpack.c.l.b16 %v172
      %v298 = vunpack.c.l.b16 %v173
      %v299 = vunpack.c.l.b16 %v174
      %v300 = vunpack.c.l.b16 %v175
      %v301 = vunpack.c.l.b16 %v176
      %v302 = vunpack.c.l.b16 %v177
      %v303 = vunpack.c.l.b16 %v178
      %v304 = vunpack.c.l.b16 %v179
      %v305 = vunpack.c.l.b16 %v180
      %v306 = vunpack.c.l.b16 %v181
      %v307 = vpack.c.b16 %v297, %v296
      %v308 = vpack.c.b16 %v299, %v298
      %v309 = vpack.c.b16 %v301, %v300
      %v310 = vpack.c.b16 %v303, %v302
      %v311 = vpack.c.b16 %v305, %v304
      %v312 = vpack.c.b16 %v306, %v306
      %v319 = vsel %vm237, %v170, 0
      %v322 = vsel %vm241, %v312, 0
      %324 = vmatprep.subr.bf16.mxu0 0
      %325 = vmatpush1.bf16.msra.mxu0 0
      %326 = vmatprep.subr.bf16.mxu0 0
      %327 = vmatpush1.bf16.msra.mxu0 0
      %328 = vmatprep.subr.bf16.mxu0 0
      %329 = vmatpush1.bf16.msra.mxu0 %v322
      %330 = vmatprep.subr.bf16.mxu0 0
      %331 = vmatpush1.bf16.msra.mxu0 %v311
      %332 = vmatprep.subr.bf16.mxu0 0
      %333 = vmatpush1.bf16.msra.mxu0 %v310
      %334 = vmatprep.subr.bf16.mxu0 0
      %335 = vmatpush1.bf16.msra.mxu0 %v309
      %336 = vmatprep.subr.bf16.mxu0 0
      %337 = vmatpush1.bf16.msra.mxu0 %v308
      %338 = vmatprep.subr.bf16.mxu0 0
      %339 = vmatpush1.bf16.msra.mxu0 %v307
      %340 = vmatprep.subr.bf16.mxu0 0
      %341 = vmatpush2.bf16.msra.mxu0 0
      %342 = vmatprep.subr.bf16.mxu0 0
      %343 = vmatpush2.bf16.msra.mxu0 0
      %344 = vmatprep.subr.bf16.mxu0 0
      %345 = vmatpush2.bf16.msra.mxu0 0
      %346 = vmatprep.subr.bf16.mxu0 0
      %347 = vmatpush2.bf16.msra.mxu0 0
      %348 = vmatprep.subr.bf16.mxu0 0
      %349 = vmatpush2.bf16.msra.mxu0 0
      %350 = vmatprep.subr.bf16.mxu0 0
      %351 = vmatpush2.bf16.msra.mxu0 0
      %352 = vmatprep.subr.bf16.mxu0 0
      %353 = vmatpush2.bf16.msra.mxu0 0
      %354 = vmatprep.subr.bf16.mxu0 0
      %355 = vmatpush2.bf16.msra.mxu0 0
      %356 = vmatprep.mubr.bf16.mxu0 0
      %357 = vmatmul.mubr.bf16.gmra.mxu0 %v319
      %v358 = vpop.f32.mrf.mxu0
      %v359 = vadd.f32 %v280, %v358
      %v360 = vpop.f32.mrf.mxu0
      %v361 = vpop.f32.mrf.mxu0
      %v362 = vpop.f32.mrf.mxu0
      %363 = vdwg.mxu0
      %v364 = vld [vmem:[%s164] sm:$0xe]
      %v365 = vld [vmem:[%s164 + $0x4] sm:$0x1]
      %s366 = scalar_lea.vmem %s1, 88
      %v367 = vld [vmem:[%s366] sm:$0xf]
      %v368 = vld [vmem:[%s366 + $0x4] sm:$0xf]
      %v369 = vld [vmem:[%s366 + $0x8] sm:$0xf]
      %v370 = vld [vmem:[%s366 + $0xc] sm:$0xf]
      %v371 = vld [vmem:[%s366 + $0x10] sm:$0xf]
      %v372 = vld [vmem:[%s366 + $0x14] sm:$0xf]
      %v373 = vld [vmem:[%s366 + $0x18] sm:$0xf]
      %v374 = vld [vmem:[%s366 + $0x1c] sm:$0xf]
      %v375 = vld [vmem:[%s366 + $0x20] sm:$0xf]
      %v376 = vld [vmem:[%s366 + $0x24] sm:$0xf]
      %v377 = vld [vmem:[%s366 + $0x28] sm:$0xf]
      %v380 = vunpack.c.l.b16 %v364
      %v381 = vunpack.c.l.b16 %v365
      %v382 = vpack.c.b16 %v381, %v380
      %v383 = vrot.slane %v382, 1
      %v395 = vunpack.c.l.b16 %v367
      %v396 = vunpack.c.l.b16 %v368
      %v397 = vunpack.c.l.b16 %v369
      %v398 = vunpack.c.l.b16 %v370
      %v399 = vunpack.c.l.b16 %v371
      %v400 = vunpack.c.l.b16 %v372
      %v401 = vunpack.c.l.b16 %v373
      %v402 = vunpack.c.l.b16 %v374
      %v403 = vunpack.c.l.b16 %v375
      %v404 = vunpack.c.l.b16 %v376
      %v405 = vunpack.c.l.b16 %v377
      %v406 = vpack.c.b16 %v396, %v395
      %v407 = vpack.c.b16 %v398, %v397
      %v408 = vpack.c.b16 %v400, %v399
      %v409 = vpack.c.b16 %v402, %v401
      %v410 = vpack.c.b16 %v404, %v403
      %v411 = vpack.c.b16 %v405, %v405
      %v418 = vsel %vm237, %v383, 0
      %v421 = vsel %vm241, %v411, 0
      %423 = vmatprep.subr.bf16.mxu0 0
      %424 = vmatpush1.bf16.msra.mxu0 0
      %425 = vmatprep.subr.bf16.mxu0 0
      %426 = vmatpush1.bf16.msra.mxu0 0
      %427 = vmatprep.subr.bf16.mxu0 0
      %428 = vmatpush1.bf16.msra.mxu0 %v421
      %429 = vmatprep.subr.bf16.mxu0 0
      %430 = vmatpush1.bf16.msra.mxu0 %v410
      %431 = vmatprep.subr.bf16.mxu0 0
      %432 = vmatpush1.bf16.msra.mxu0 %v409
      %433 = vmatprep.subr.bf16.mxu0 0
      %434 = vmatpush1.bf16.msra.mxu0 %v408
      %435 = vmatprep.subr.bf16.mxu0 0
      %436 = vmatpush1.bf16.msra.mxu0 %v407
      %437 = vmatprep.subr.bf16.mxu0 0
      %438 = vmatpush1.bf16.msra.mxu0 %v406
      %439 = vmatprep.subr.bf16.mxu0 0
      %440 = vmatpush2.bf16.msra.mxu0 0
      %441 = vmatprep.subr.bf16.mxu0 0
      %442 = vmatpush2.bf16.msra.mxu0 0
      %443 = vmatprep.subr.bf16.mxu0 0
      %444 = vmatpush2.bf16.msra.mxu0 0
      %445 = vmatprep.subr.bf16.mxu0 0
      %446 = vmatpush2.bf16.msra.mxu0 0
      %447 = vmatprep.subr.bf16.mxu0 0
      %448 = vmatpush2.bf16.msra.mxu0 0
      %449 = vmatprep.subr.bf16.mxu0 0
      %450 = vmatpush2.bf16.msra.mxu0 0
      %451 = vmatprep.subr.bf16.mxu0 0
      %452 = vmatpush2.bf16.msra.mxu0 0
      %453 = vmatprep.subr.bf16.mxu0 0
      %454 = vmatpush2.bf16.msra.mxu0 0
      %455 = vmatprep.mubr.bf16.mxu0 0
      %456 = vmatmul.mubr.bf16.gmra.mxu0 %v418
      %v457 = vpop.f32.mrf.mxu0
      %v458 = vadd.f32 0.0, %v457
      %v459 = vpop.f32.mrf.mxu0
      %v460 = vpop.f32.mrf.mxu0
      %v461 = vpop.f32.mrf.mxu0
      %462 = vdwg.mxu0
      %v463 = vadd.f32 %v359, %v458
      %s464 = scalar_lea.vmem %s1, 132
      %v465 = vld [vmem:[%s464] sm:$0xf]
      %v466 = vld [vmem:[%s464 + $0x4] sm:$0xf]
      %v467 = vld [vmem:[%s464 + $0x8] sm:$0xf]
      %v468 = vld [vmem:[%s464 + $0xc] sm:$0xf]
      %v469 = vld [vmem:[%s464 + $0x10] sm:$0xf]
      %v470 = vld [vmem:[%s464 + $0x14] sm:$0xf]
      %v471 = vld [vmem:[%s464 + $0x18] sm:$0xf]
      %v472 = vld [vmem:[%s464 + $0x1c] sm:$0xf]
      %v473 = vld [vmem:[%s464 + $0x20] sm:$0xf]
      %v474 = vld [vmem:[%s464 + $0x24] sm:$0xf]
      %v475 = vld [vmem:[%s464 + $0x28] sm:$0xf]
      %v477 = vshrl.u32 %v382, 16
      %v479 = vrot.slane %v477, 1
      %v480 = vshll.u32 %v382, 16
      %v482 = vrot.slane %v480, 2
      %v483 = vor.u32 %v479, %v482
      %v495 = vunpack.c.l.b16 %v465
      %v496 = vunpack.c.l.b16 %v466
      %v497 = vunpack.c.l.b16 %v467
      %v498 = vunpack.c.l.b16 %v468
      %v499 = vunpack.c.l.b16 %v469
      %v500 = vunpack.c.l.b16 %v470
      %v501 = vunpack.c.l.b16 %v471
      %v502 = vunpack.c.l.b16 %v472
      %v503 = vunpack.c.l.b16 %v473
      %v504 = vunpack.c.l.b16 %v474
      %v505 = vunpack.c.l.b16 %v475
      %v506 = vpack.c.b16 %v496, %v495
      %v507 = vpack.c.b16 %v498, %v497
      %v508 = vpack.c.b16 %v500, %v499
      %v509 = vpack.c.b16 %v502, %v501
      %v510 = vpack.c.b16 %v504, %v503
      %v511 = vpack.c.b16 %v505, %v505
      %v518 = vsel %vm237, %v483, 0
      %v521 = vsel %vm241, %v511, 0
      %523 = vmatprep.subr.bf16.mxu0 0
      %524 = vmatpush1.bf16.msra.mxu0 0
      %525 = vmatprep.subr.bf16.mxu0 0
      %526 = vmatpush1.bf16.msra.mxu0 0
      %527 = vmatprep.subr.bf16.mxu0 0
      %528 = vmatpush1.bf16.msra.mxu0 %v521
      %529 = vmatprep.subr.bf16.mxu0 0
      %530 = vmatpush1.bf16.msra.mxu0 %v510
      %531 = vmatprep.subr.bf16.mxu0 0
      %532 = vmatpush1.bf16.msra.mxu0 %v509
      %533 = vmatprep.subr.bf16.mxu0 0
      %534 = vmatpush1.bf16.msra.mxu0 %v508
      %535 = vmatprep.subr.bf16.mxu0 0
      %536 = vmatpush1.bf16.msra.mxu0 %v507
      %537 = vmatprep.subr.bf16.mxu0 0
      %538 = vmatpush1.bf16.msra.mxu0 %v506
      %539 = vmatprep.subr.bf16.mxu0 0
      %540 = vmatpush2.bf16.msra.mxu0 0
      %541 = vmatprep.subr.bf16.mxu0 0
      %542 = vmatpush2.bf16.msra.mxu0 0
      %543 = vmatprep.subr.bf16.mxu0 0
      %544 = vmatpush2.bf16.msra.mxu0 0
      %545 = vmatprep.subr.bf16.mxu0 0
      %546 = vmatpush2.bf16.msra.mxu0 0
      %547 = vmatprep.subr.bf16.mxu0 0
      %548 = vmatpush2.bf16.msra.mxu0 0
      %549 = vmatprep.subr.bf16.mxu0 0
      %550 = vmatpush2.bf16.msra.mxu0 0
      %551 = vmatprep.subr.bf16.mxu0 0
      %552 = vmatpush2.bf16.msra.mxu0 0
      %553 = vmatprep.subr.bf16.mxu0 0
      %554 = vmatpush2.bf16.msra.mxu0 0
      %555 = vmatprep.mubr.bf16.mxu0 0
      %556 = vmatmul.mubr.bf16.gmra.mxu0 %v518
      %v557 = vpop.f32.mrf.mxu0
      %v558 = vadd.f32 0.0, %v557
      %v559 = vpop.f32.mrf.mxu0
      %v560 = vpop.f32.mrf.mxu0
      %v561 = vpop.f32.mrf.mxu0
      %562 = vdwg.mxu0
      %v563 = vadd.f32 %v463, %v558
      %v564 = vld [vmem:[%s164] sm:$0xc]
      %v565 = vld [vmem:[%s164 + $0x4] sm:$0x3]
      %s566 = scalar_lea.vmem %s1, 176
      %v567 = vld [vmem:[%s566] sm:$0xf]
      %v568 = vld [vmem:[%s566 + $0x4] sm:$0xf]
      %v569 = vld [vmem:[%s566 + $0x8] sm:$0xf]
      %v570 = vld [vmem:[%s566 + $0xc] sm:$0xf]
      %v571 = vld [vmem:[%s566 + $0x10] sm:$0xf]
      %v572 = vld [vmem:[%s566 + $0x14] sm:$0xf]
      %v573 = vld [vmem:[%s566 + $0x18] sm:$0xf]
      %v574 = vld [vmem:[%s566 + $0x1c] sm:$0xf]
      %v575 = vld [vmem:[%s566 + $0x20] sm:$0xf]
      %v576 = vld [vmem:[%s566 + $0x24] sm:$0xf]
      %v577 = vld [vmem:[%s566 + $0x28] sm:$0xf]
      %v580 = vunpack.c.l.b16 %v564
      %v581 = vunpack.c.l.b16 %v565
      %v582 = vpack.c.b16 %v581, %v580
      %v583 = vrot.slane %v582, 2
      %v595 = vunpack.c.l.b16 %v567
      %v596 = vunpack.c.l.b16 %v568
      %v597 = vunpack.c.l.b16 %v569
      %v598 = vunpack.c.l.b16 %v570
      %v599 = vunpack.c.l.b16 %v571
      %v600 = vunpack.c.l.b16 %v572
      %v601 = vunpack.c.l.b16 %v573
      %v602 = vunpack.c.l.b16 %v574
      %v603 = vunpack.c.l.b16 %v575
      %v604 = vunpack.c.l.b16 %v576
      %v605 = vunpack.c.l.b16 %v577
      %v606 = vpack.c.b16 %v596, %v595
      %v607 = vpack.c.b16 %v598, %v597
      %v608 = vpack.c.b16 %v600, %v599
      %v609 = vpack.c.b16 %v602, %v601
      %v610 = vpack.c.b16 %v604, %v603
      %v611 = vpack.c.b16 %v605, %v605
      %v618 = vsel %vm237, %v583, 0
      %v621 = vsel %vm241, %v611, 0
      %623 = vmatprep.subr.bf16.mxu0 0
      %624 = vmatpush1.bf16.msra.mxu0 0
      %625 = vmatprep.subr.bf16.mxu0 0
      %626 = vmatpush1.bf16.msra.mxu0 0
      %627 = vmatprep.subr.bf16.mxu0 0
      %628 = vmatpush1.bf16.msra.mxu0 %v621
      %629 = vmatprep.subr.bf16.mxu0 0
      %630 = vmatpush1.bf16.msra.mxu0 %v610
      %631 = vmatprep.subr.bf16.mxu0 0
      %632 = vmatpush1.bf16.msra.mxu0 %v609
      %633 = vmatprep.subr.bf16.mxu0 0
      %634 = vmatpush1.bf16.msra.mxu0 %v608
      %635 = vmatprep.subr.bf16.mxu0 0
      %636 = vmatpush1.bf16.msra.mxu0 %v607
      %637 = vmatprep.subr.bf16.mxu0 0
      %638 = vmatpush1.bf16.msra.mxu0 %v606
      %639 = vmatprep.subr.bf16.mxu0 0
      %640 = vmatpush2.bf16.msra.mxu0 0
      %641 = vmatprep.subr.bf16.mxu0 0
      %642 = vmatpush2.bf16.msra.mxu0 0
      %643 = vmatprep.subr.bf16.mxu0 0
      %644 = vmatpush2.bf16.msra.mxu0 0
      %645 = vmatprep.subr.bf16.mxu0 0
      %646 = vmatpush2.bf16.msra.mxu0 0
      %647 = vmatprep.subr.bf16.mxu0 0
      %648 = vmatpush2.bf16.msra.mxu0 0
      %649 = vmatprep.subr.bf16.mxu0 0
      %650 = vmatpush2.bf16.msra.mxu0 0
      %651 = vmatprep.subr.bf16.mxu0 0
      %652 = vmatpush2.bf16.msra.mxu0 0
      %653 = vmatprep.subr.bf16.mxu0 0
      %654 = vmatpush2.bf16.msra.mxu0 0
      %655 = vmatprep.mubr.bf16.mxu0 0
      %656 = vmatmul.mubr.bf16.gmra.mxu0 %v618
      %v657 = vpop.f32.mrf.mxu0
      %v658 = vadd.f32 0.0, %v657
      %v659 = vpop.f32.mrf.mxu0
      %v660 = vpop.f32.mrf.mxu0
      %v661 = vpop.f32.mrf.mxu0
      %662 = vdwg.mxu0
      %v663 = vadd.f32 %v563, %v658
      %v664 = vld [vmem:[%s2] sm:$0x1]
      %v666 = vlaneseq
      %v667 = vshrl.u32 %v666, 7
      %v668 = vsub.s32 0, %v667
      %v669 = vrot.slane %v664, %v668
      %v671 = vadd.f32 %v663, %v669
      %v672 = vmax.f32 %v671, 0.0
      %v673 = vpack.c.bf16 %v672, %v672
      %vm674 = vcmask 568320
      %vm675 = vsmask.f32 3328
      %vm676 = vmand %vm674, %vm675
      %v677 = vld [vmem:[%s168] sm:$0xf]
      %v678 = vsel %vm676, %v673, %v677
      %679 = vst [vmem:[%s168] sm:$0xf] %v678
      %p680 = scmp.lt.s32.totalorder %s14, 1
      %s681 = scalar_select %p680, %s14, 1
      %s682 = smul.addr %s681, 4
      %s683 = scalar_lea.vmem %s3, %s682
      // Predicated region
      $region33: #{forward.7} parent=31 // pred_check
        %p684 = pneg %p100
      $region34: #{forward.7} parent=31 // pred_check_branch
        %686 = sbr.rel (%p684) target = $region36
      $region35: #{forward.7} parent=31 // pred_region
        _
      $region36: #{forward.7} parent=31 // pred_fallthru
        _
    $region32: #{forward.7} parent=5 // pred_fallthru
      _
    %p687 = scmp.le.s32.totalorder 2, %s9
    // Predicated region
    $region37: #{forward.7} parent=5 // pred_check
      %p688 = pneg %p687
    $region38: #{forward.7} parent=5 // pred_check_branch
      %690 = sbr.rel (%p688) target = $region40
    $region39: #{forward.7} parent=5 // pred_region
      %s691 = ssub.s32 %s9, 2
      // Predicated region
      $region41: #{forward.7} parent=39 // pred_check
        %p692 = pneg %p106
      $region42: #{forward.7} parent=39 // pred_check_branch
        %694 = sbr.rel (%p692) target = $region44
      $region43: #{forward.7} parent=39 // pred_region
        %p695 = scmp.lt.s32.totalorder %s15, 1
        %s696 = scalar_select %p695, %s15, 1
        %s697 = smul.addr %s696, 4
        %s698 = scalar_lea.vmem %s3, %s697
      $region44: #{forward.7} parent=39 // pred_fallthru
        _
    $region40: #{forward.7} parent=5 // pred_fallthru
      _
  $region6: #{forward.7} parent=0 // loop_footer
    %s13 = sadd.s32 1, %s9
  $region7: #{forward.7} parent=0 // loop_footer_branch
    %8 = sbr.rel target = $region3
  $region8: #{forward.7} parent=0 // loop_exit
    _

// kernel: forward.8
$region0: #{forward.8}
  #allocation0 [shape = 'u32[]', space=smem, size = 0x4, offset = 0x4, fixed_abs, tag = 'smem constant byte address 0x4 - core index']
  #allocation1 [shape = 'u32[144,128]{1,0:T(1,128)}', space=vmem, size = 0x12000, scoped, tag = 'internal scratch']
  %s0 = inlined_call_operand.vmem [shape: bf16[2,90], index: 0, kind: input, shape index: {}]
  %s1 = inlined_call_operand.vmem [shape: f32[90,32], index: 1, kind: input, shape index: {}]
  %s2 = inlined_call_operand.vmem [shape: f32[1,32], index: 2, kind: input, shape index: {}]
  %s3 = inlined_call_operand.vmem [shape: f32[32,6], index: 3, kind: input, shape index: {}]
  %s4 = inlined_call_operand.vmem [shape: f32[1,6], index: 4, kind: input, shape index: {}]
  %s5 = inlined_call_operand.vmem [shape: f32[2,6], index: 5, kind: output, shape index: {}]
  %s6 = sld [smem:[#allocation0]]
  $region30: #{forward.8} parent=0
    _
  %s8 = ssub.s32 1, %s6
  %s9 = scalar_select 0, %s8, %s6
  // Predicated region
  $region2: #{forward.8} parent=0 // pred_check
    _
  $region3: #{forward.8} parent=0 // pred_check_branch
    %11 = sbr.rel (0) target = $region5
  $region4: #{forward.8} parent=0 // pred_region
    _
  $region5: #{forward.8} parent=0 // pred_fallthru
    _
  // Predicated region
  $region6: #{forward.8} parent=0 // pred_check
    _
  $region7: #{forward.8} parent=0 // pred_check_branch
    %13 = sbr.rel (0) target = $region9
  $region8: #{forward.8} parent=0 // pred_region
    _
  $region9: #{forward.8} parent=0 // pred_fallthru
    _
  // Predicated region
  $region10: #{forward.8} parent=0 // pred_check
    _
  $region11: #{forward.8} parent=0 // pred_check_branch
    %15 = sbr.rel (0) target = $region13
  $region12: #{forward.8} parent=0 // pred_region
    _
  $region13: #{forward.8} parent=0 // pred_fallthru
    _
  // Predicated region
  $region14: #{forward.8} parent=0 // pred_check
    _
  $region15: #{forward.8} parent=0 // pred_check_branch
    %17 = sbr.rel (0) target = $region17
  $region16: #{forward.8} parent=0 // pred_region
    _
  $region17: #{forward.8} parent=0 // pred_fallthru
    _
  // Predicated region
  $region18: #{forward.8} parent=0 // pred_check
    _
  $region19: #{forward.8} parent=0 // pred_check_branch
    %19 = sbr.rel (0) target = $region21
  $region20: #{forward.8} parent=0 // pred_region
    _
  $region21: #{forward.8} parent=0 // pred_fallthru
    _
  %v20 = vld [vmem:[%s0] sm:$0x1]
  %v21 = vunpack.c.l.bf16 %v20
  %v22 = vld [vmem:[%s1] sm:$0xff]
  %v23 = vld [vmem:[%s1 + $0x8] sm:$0xff]
  %v24 = vld [vmem:[%s1 + $0x10] sm:$0xff]
  %v25 = vld [vmem:[%s1 + $0x18] sm:$0xff]
  %v26 = vld [vmem:[%s1 + $0x20] sm:$0xff]
  %v27 = vld [vmem:[%s1 + $0x28] sm:$0xff]
  %v28 = vld [vmem:[%s1 + $0x30] sm:$0xff]
  %v29 = vld [vmem:[%s1 + $0x38] sm:$0xff]
  %v30 = vld [vmem:[%s1 + $0x40] sm:$0xff]
  %v31 = vld [vmem:[%s1 + $0x48] sm:$0xff]
  %v32 = vld [vmem:[%s1 + $0x50] sm:$0xff]
  %v33 = vld [vmem:[%s1 + $0x58] sm:$0x3]
  %v34 = vld [vmem:[%s2] sm:$0x1]
  %v36 = vlaneseq
  %v37 = vshrl.u32 %v36, 7
  %v38 = vsub.s32 0, %v37
  %v39 = vrot.slane %v34, %v38
  %vm41 = vcmask 736256
  %v43 = vsel %vm41, %v21, 0
  %vm45 = vcmask 1041408
  %v47 = vsel %vm45, %v33, 0
  %49 = vmatprep.subr.mxu0 0.0
  %50 = vmatpush1.msra.mxu0 0.0
  %51 = vmatprep.subr.mxu0 0.0
  %52 = vmatpush1.msra.mxu0 0.0
  %53 = vmatprep.subr.mxu0 0.0
  %54 = vmatpush1.msra.mxu0 0.0
  %55 = vmatprep.subr.mxu0 0.0
  %56 = vmatpush1.msra.mxu0 0.0
  %57 = vmatprep.subr.mxu0 0.0
  %58 = vmatpush1.msra.mxu0 %v47
  %59 = vmatprep.subr.mxu0 0.0
  %60 = vmatpush1.msra.mxu0 %v32
  %61 = vmatprep.subr.mxu0 0.0
  %62 = vmatpush1.msra.mxu0 %v31
  %63 = vmatprep.subr.mxu0 0.0
  %64 = vmatpush1.msra.mxu0 %v30
  %65 = vmatprep.subr.mxu0 0.0
  %66 = vmatpush1.msra.mxu0 %v29
  %67 = vmatprep.subr.mxu0 0.0
  %68 = vmatpush1.msra.mxu0 %v28
  %69 = vmatprep.subr.mxu0 0.0
  %70 = vmatpush1.msra.mxu0 %v27
  %71 = vmatprep.subr.mxu0 0.0
  %72 = vmatpush1.msra.mxu0 %v26
  %73 = vmatprep.subr.mxu0 0.0
  %74 = vmatpush1.msra.mxu0 %v25
  %75 = vmatprep.subr.mxu0 0.0
  %76 = vmatpush1.msra.mxu0 %v24
  %77 = vmatprep.subr.mxu0 0.0
  %78 = vmatpush1.msra.mxu0 %v23
  %79 = vmatprep.subr.mxu0 0.0
  %80 = vmatpush1.msra.mxu0 %v22
  %81 = vmatprep.subr.mxu0 0.0
  %82 = vmatpush2.msra.mxu0 0.0
  %83 = vmatprep.subr.mxu0 0.0
  %84 = vmatpush2.msra.mxu0 0.0
  %85 = vmatprep.subr.mxu0 0.0
  %86 = vmatpush2.msra.mxu0 0.0
  %87 = vmatprep.subr.mxu0 0.0
  %88 = vmatpush2.msra.mxu0 0.0
  %89 = vmatprep.subr.mxu0 0.0
  %90 = vmatpush2.msra.mxu0 0.0
  %91 = vmatprep.subr.mxu0 0.0
  %92 = vmatpush2.msra.mxu0 0.0
  %93 = vmatprep.subr.mxu0 0.0
  %94 = vmatpush2.msra.mxu0 0.0
  %95 = vmatprep.subr.mxu0 0.0
  %96 = vmatpush2.msra.mxu0 0.0
  %97 = vmatprep.subr.mxu0 0.0
  %98 = vmatpush2.msra.mxu0 0.0
  %99 = vmatprep.subr.mxu0 0.0
  %100 = vmatpush2.msra.mxu0 0.0
  %101 = vmatprep.subr.mxu0 0.0
  %102 = vmatpush2.msra.mxu0 0.0
  %103 = vmatprep.subr.mxu0 0.0
  %104 = vmatpush2.msra.mxu0 0.0
  %105 = vmatprep.subr.mxu0 0.0
  %106 = vmatpush2.msra.mxu0 0.0
  %107 = vmatprep.subr.mxu0 0.0
  %108 = vmatpush2.msra.mxu0 0.0
  %109 = vmatprep.subr.mxu0 0.0
  %110 = vmatpush2.msra.mxu0 0.0
  %111 = vmatprep.subr.mxu0 0.0
  %112 = vmatpush2.msra.mxu0 0.0
  %113 = vmatprep.mubr.f32.mxu0 0.0
  %114 = vmatmul.mubr.f32.gmra.mxu0 %v43
  %v115 = vpop.f32.mrf.mxu0
  %v116 = vadd.f32 %v39, %v115
  %v117 = vpop.f32.mrf.mxu0
  %118 = vdwg.mxu0
  %v119 = vmax.f32 %v116, 0.0
  %v120 = vld [vmem:[%s3] sm:$0xff]
  %v121 = vld [vmem:[%s3 + $0x8] sm:$0xff]
  %v122 = vld [vmem:[%s3 + $0x10] sm:$0xff]
  %v123 = vld [vmem:[%s3 + $0x18] sm:$0xff]
  %v124 = vld [vmem:[%s4] sm:$0x1]
  %v126 = vlaneseq
  %v127 = vshrl.u32 %v126, 7
  %v128 = vsub.s32 0, %v127
  %v129 = vrot.slane %v124, %v128
  %vm131 = vcmask 261120
  %v133 = vsel %vm131, %v119, 0
  %135 = vmatprep.subr.mxu0 0.0
  %136 = vmatpush1.msra.mxu0 0.0
  %137 = vmatprep.subr.mxu0 0.0
  %138 = vmatpush1.msra.mxu0 0.0
  %139 = vmatprep.subr.mxu0 0.0
  %140 = vmatpush1.msra.mxu0 0.0
  %141 = vmatprep.subr.mxu0 0.0
  %142 = vmatpush1.msra.mxu0 0.0
  %143 = vmatprep.subr.mxu0 0.0
  %144 = vmatpush1.msra.mxu0 0.0
  %145 = vmatprep.subr.mxu0 0.0
  %146 = vmatpush1.msra.mxu0 0.0
  %147 = vmatprep.subr.mxu0 0.0
  %148 = vmatpush1.msra.mxu0 0.0
  %149 = vmatprep.subr.mxu0 0.0
  %150 = vmatpush1.msra.mxu0 0.0
  %151 = vmatprep.subr.mxu0 0.0
  %152 = vmatpush1.msra.mxu0 0.0
  %153 = vmatprep.subr.mxu0 0.0
  %154 = vmatpush1.msra.mxu0 0.0
  %155 = vmatprep.subr.mxu0 0.0
  %156 = vmatpush1.msra.mxu0 0.0
  %157 = vmatprep.subr.mxu0 0.0
  %158 = vmatpush1.msra.mxu0 0.0
  %159 = vmatprep.subr.mxu0 0.0
  %160 = vmatpush1.msra.mxu0 %v123
  %161 = vmatprep.subr.mxu0 0.0
  %162 = vmatpush1.msra.mxu0 %v122
  %163 = vmatprep.subr.mxu0 0.0
  %164 = vmatpush1.msra.mxu0 %v121
  %165 = vmatprep.subr.mxu0 0.0
  %166 = vmatpush1.msra.mxu0 %v120
  %167 = vmatprep.subr.mxu0 0.0
  %168 = vmatpush2.msra.mxu0 0.0
  %169 = vmatprep.subr.mxu0 0.0
  %170 = vmatpush2.msra.mxu0 0.0
  %171 = vmatprep.subr.mxu0 0.0
  %172 = vmatpush2.msra.mxu0 0.0
  %173 = vmatprep.subr.mxu0 0.0
  %174 = vmatpush2.msra.mxu0 0.0
  %175 = vmatprep.subr.mxu0 0.0
  %176 = vmatpush2.msra.mxu0 0.0
  %177 = vmatprep.subr.mxu0 0.0
  %178 = vmatpush2.msra.mxu0 0.0
  %179 = vmatprep.subr.mxu0 0.0
  %180 = vmatpush2.msra.mxu0 0.0
  %181 = vmatprep.subr.mxu0 0.0
  %182 = vmatpush2.msra.mxu0 0.0
  %183 = vmatprep.subr.mxu0 0.0
  %184 = vmatpush2.msra.mxu0 0.0
  %185 = vmatprep.subr.mxu0 0.0
  %186 = vmatpush2.msra.mxu0 0.0
  %187 = vmatprep.subr.mxu0 0.0
  %188 = vmatpush2.msra.mxu0 0.0
  %189 = vmatprep.subr.mxu0 0.0
  %190 = vmatpush2.msra.mxu0 0.0
  %191 = vmatprep.subr.mxu0 0.0
  %192 = vmatpush2.msra.mxu0 0.0
  %193 = vmatprep.subr.mxu0 0.0
  %194 = vmatpush2.msra.mxu0 0.0
  %195 = vmatprep.subr.mxu0 0.0
  %196 = vmatpush2.msra.mxu0 0.0
  %197 = vmatprep.subr.mxu0 0.0
  %198 = vmatpush2.msra.mxu0 0.0
  %199 = vmatprep.mubr.f32.mxu0 0.0
  %200 = vmatmul.mubr.f32.gmra.mxu0 %v133
  %v201 = vpop.f32.mrf.mxu0
  %v202 = vadd.f32 %v129, %v201
  %v203 = vpop.f32.mrf.mxu0
  %204 = vdwg.mxu0
  %vm205 = vcmask 41984
  %206 = vst.msk [vmem:[%s5] sm:$0x3] %vm205, %v202
  // Predicated region
  $region22: #{forward.8} parent=0 // pred_check
    _
  $region23: #{forward.8} parent=0 // pred_check_branch
    %208 = sbr.rel (0) target = $region25
  $region24: #{forward.8} parent=0 // pred_region
    _
  $region25: #{forward.8} parent=0 // pred_fallthru
    _
  // Predicated region
  $region26: #{forward.8} parent=0 // pred_check
    _
  $region27: #{forward.8} parent=0 // pred_check_branch
    %210 = sbr.rel (0) target = $region29
  $region28: #{forward.8} parent=0 // pred_region
    _
  $region29: #{forward.8} parent=0 // pred_fallthru
    _

// kernel: forward.9
$region0: #{forward.9}
  #allocation0 [shape = 'u32[]', space=smem, size = 0x4, offset = 0x4, fixed_abs, tag = 'smem constant byte address 0x4 - core index']
  #allocation1 [shape = 'u32[144,128]{1,0:T(1,128)}', space=vmem, size = 0x12000, scoped, tag = 'internal scratch']
  %s0 = inlined_call_operand.vmem [shape: bf16[2,28,28], index: 0, kind: input, shape index: {}]
  %s1 = inlined_call_operand.vmem [shape: bf16[5,28,240], index: 1, kind: input, shape index: {}]
  %s2 = inlined_call_operand.vmem [shape: f32[1,240], index: 2, kind: input, shape index: {}]
  %s3 = inlined_call_operand.vmem [shape: bf16[2,24,240], index: 3, kind: output, shape index: {}]
  %s4 = sld [smem:[#allocation0]]
  $region45: #{forward.9} parent=0
    _
  %s6 = ssub.s32 1, %s4
  %s7 = scalar_select 0, %s6, %s4
  loop: start=0, step=1, limit=4
  $region2: #{forward.9} parent=0 // loop_pre_header
    _
  $region3: #{forward.9} parent=0 // loop_header
    %s9 = sphi 0, %s13
    %p10 = scmp.ge.s32.totalorder %s9, 4
    %s19 = sphi 0, %s21
    %s22 = sphi 0, %s19
    %s23 = sphi 0, %s22
    %s39 = sphi 0, %s23
    %s43 = sphi 0, %s43
    %s45 = sphi 0, %s43
    %s46 = sphi 0, %s45
    %s60 = sphi 0, %s46
    %s64 = sphi 0, %s64
    %s66 = sphi 0, %s64
    %s67 = sphi 0, %s66
    %s81 = sphi 0, %s67
    %s87 = sphi 0, %s89
    %s90 = sphi 0, %s87
    %s91 = sphi 0, %s90
    %s107 = sphi 0, %s91
  $region4: #{forward.9} parent=0 // loop_header_branch
    %12 = sbr.rel (%p10) target = $region8
  $region5: #{forward.9} parent=0 // loop_body
    %s14 = ssub.s32 %s9, 1
    %s15 = ssub.s32 %s9, 2
    %s16 = sadd.s32 %s9, 1
    %s17 = ssub.s32 %s9, %s16
    %p18 = scmp.eq.s32.totalorder %s17, 0
    %s20 = sadd.s32 %s19, 1
    %s21 = scalar_select %p18, %s19, %s20
    %p24 = pneg %p18
    %p25 = scmp.eq.s32.totalorder %s9, 1
    %p26 = por %p24, %p25
    %p27 = scmp.ne.s32.totalorder %s19, %s22
    %p28 = scmp.eq.s32.totalorder %s9, 0
    %p29 = por %p27, %p28
    %p30 = scmp.ne.s32.totalorder %s19, %s22
    %p31 = scmp.eq.s32.totalorder %s14, 1
    %p32 = por %p30, %p31
    %p33 = scmp.ne.s32.totalorder %s22, %s23
    %p34 = scmp.eq.s32.totalorder %s14, 0
    %p35 = por %p33, %p34
    %p36 = scmp.ne.s32.totalorder %s22, %s23
    %p37 = scmp.eq.s32.totalorder %s15, 1
    %p38 = por %p36, %p37
    %p40 = scmp.ne.s32.totalorder %s23, %s39
    %p41 = scmp.eq.s32.totalorder %s15, 0
    %p42 = por %p40, %p41
    %s44 = sadd.s32 %s43, 1
    %p47 = scmp.eq.s32.totalorder %s9, 1
    %p48 = scmp.ne.s32.totalorder %s43, %s45
    %p49 = scmp.eq.s32.totalorder %s9, 0
    %p50 = por %p48, %p49
    %p51 = scmp.ne.s32.totalorder %s43, %s45
    %p52 = scmp.eq.s32.totalorder %s14, 1
    %p53 = por %p51, %p52
    %p54 = scmp.ne.s32.totalorder %s45, %s46
    %p55 = scmp.eq.s32.totalorder %s14, 0
    %p56 = por %p54, %p55
    %p57 = scmp.ne.s32.totalorder %s45, %s46
    %p58 = scmp.eq.s32.totalorder %s15, 1
    %p59 = por %p57, %p58
    %p61 = scmp.ne.s32.totalorder %s46, %s60
    %p62 = scmp.eq.s32.totalorder %s15, 0
    %p63 = por %p61, %p62
    %s65 = sadd.s32 %s64, 1
    %p68 = scmp.eq.s32.totalorder %s9, 1
    %p69 = scmp.ne.s32.totalorder %s64, %s66
    %p70 = scmp.eq.s32.totalorder %s9, 0
    %p71 = por %p69, %p70
    %p72 = scmp.ne.s32.totalorder %s64, %s66
    %p73 = scmp.eq.s32.totalorder %s14, 1
    %p74 = por %p72, %p73
    %p75 = scmp.ne.s32.totalorder %s66, %s67
    %p76 = scmp.eq.s32.totalorder %s14, 0
    %p77 = por %p75, %p76
    %p78 = scmp.ne.s32.totalorder %s66, %s67
    %p79 = scmp.eq.s32.totalorder %s15, 1
    %p80 = por %p78, %p79
    %p82 = scmp.ne.s32.totalorder %s67, %s81
    %p83 = scmp.eq.s32.totalorder %s15, 0
    %p84 = por %p82, %p83
    %s85 = ssub.s32 %s9, %s16
    %p86 = scmp.eq.s32.totalorder %s85, 0
    %s88 = sadd.s32 %s87, 1
    %s89 = scalar_select %p86, %s87, %s88
    %p92 = pneg %p86
    %p93 = scmp.eq.s32.totalorder %s9, 1
    %p94 = por %p92, %p93
    %p95 = scmp.ne.s32.totalorder %s87, %s90
    %p96 = scmp.eq.s32.totalorder %s9, 0
    %p97 = por %p95, %p96
    %p98 = scmp.ne.s32.totalorder %s87, %s90
    %p99 = scmp.eq.s32.totalorder %s14, 1
    %p100 = por %p98, %p99
    %p101 = scmp.ne.s32.totalorder %s90, %s91
    %p102 = scmp.eq.s32.totalorder %s14, 0
    %p103 = por %p101, %p102
    %p104 = scmp.ne.s32.totalorder %s90, %s91
    %p105 = scmp.eq.s32.totalorder %s15, 1
    %p106 = por %p104, %p105
    %p108 = scmp.ne.s32.totalorder %s91, %s107
    %p109 = scmp.eq.s32.totalorder %s15, 0
    %p110 = por %p108, %p109
    %p111 = scmp.le.s32.totalorder 1, %s9
    %p112 = scmp.lt.s32.totalorder %s9, 3
    %p113 = pnand %p111, %p112
    %p114 = pneg %p113
    // Predicated region
    $region9: #{forward.9} parent=5 // pred_check
      _
    $region10: #{forward.9} parent=5 // pred_check_branch
      %116 = sbr.rel (%p113) target = $region12
    $region11: #{forward.9} parent=5 // pred_region
      %s117 = ssub.s32 %s9, 1
      // Predicated region
      $region13: #{forward.9} parent=11 // pred_check
        %p118 = pneg %p56
      $region14: #{forward.9} parent=11 // pred_check_branch
        %120 = sbr.rel (%p118) target = $region16
      $region15: #{forward.9} parent=11 // pred_region
        _
      $region16: #{forward.9} parent=11 // pred_fallthru
        _
      // Predicated region
      $region17: #{forward.9} parent=11 // pred_check
        %p121 = pneg %p77
      $region18: #{forward.9} parent=11 // pred_check_branch
        %123 = sbr.rel (%p121) target = $region20
      $region19: #{forward.9} parent=11 // pred_region
        _
      $region20: #{forward.9} parent=11 // pred_fallthru
        _
    $region12: #{forward.9} parent=5 // pred_fallthru
      _
    %p124 = scmp.lt.s32.totalorder %s9, 2
    // Predicated region
    $region21: #{forward.9} parent=5 // pred_check
      %p125 = pneg %p124
    $region22: #{forward.9} parent=5 // pred_check_branch
      %127 = sbr.rel (%p125) target = $region24
    $region23: #{forward.9} parent=5 // pred_region
      // Predicated region
      $region25: #{forward.9} parent=23 // pred_check
        %p128 = pneg %p29
      $region26: #{forward.9} parent=23 // pred_check_branch
        %130 = sbr.rel (%p128) target = $region28
      $region27: #{forward.9} parent=23 // pred_region
        %p131 = scmp.lt.s32.totalorder %s9, 1
        %s132 = scalar_select %p131, %s9, 1
        %s133 = smul.addr %s132, 4
        %s134 = smul.addr %s133, 4
        %s135 = scalar_lea.vmem %s0, %s134
      $region28: #{forward.9} parent=23 // pred_fallthru
        _
    $region24: #{forward.9} parent=5 // pred_fallthru
      _
    %p136 = scmp.le.s32.totalorder 1, %s9
    %p137 = scmp.lt.s32.totalorder %s9, 3
    %p138 = pnand %p136, %p137
    %p139 = pneg %p138
    // Predicated region
    $region29: #{forward.9} parent=5 // pred_check
      _
    $region30: #{forward.9} parent=5 // pred_check_branch
      %141 = sbr.rel (%p138) target = $region32
    $region31: #{forward.9} parent=5 // pred_region
      %s142 = ssub.s32 %s9, 1
      %p143 = scmp.lt.s32.totalorder %s14, 1
      %s144 = scalar_select %p143, %s14, 1
      %s145 = smul.addr %s144, 4
      %s146 = smul.addr %s145, 4
      %s147 = scalar_lea.vmem %s0, %s146
      %p148 = pneg %p35
      %p149 = pneg %p32
      %p150 = pneg %p56
      %p151 = pneg %p53
      %p152 = pneg %p77
      %p153 = pneg %p74
      %p154 = pneg %p103
      %p155 = pneg %p100
      %p156 = scmp.lt.s32.totalorder %s14, 1
      %s157 = scalar_select %p156, %s14, 1
      %s158 = smul.addr %s157, 6
      %s159 = smul.addr %s158, 4
      %s160 = scalar_lea.vmem %s3, %s159
      %p161 = scmp.lt.s32.totalorder %s14, 1
      %s162 = scalar_select %p161, %s14, 1
      %s163 = smul.addr %s162, 4
      %s164 = smul.addr %s163, 4
      %s165 = scalar_lea.vmem %s0, %s164
      %p166 = scmp.lt.s32.totalorder %s14, 1
      %s167 = scalar_select %p166, %s14, 1
      %s168 = smul.addr %s167, 6
      %s169 = smul.addr %s168, 4
      %s170 = scalar_lea.vmem %s3, %s169
      %v172 = vld [vmem:[%s165] sm:$0xf]
      %v173 = vld [vmem:[%s165 + $0x4] sm:$0xf]
      %v174 = vld [vmem:[%s165 + $0x8] sm:$0xf]
      %v175 = vld [vmem:[%s1] sm:$0xff]
      %v176 = vld [vmem:[%s1 + $0x8] sm:$0xff]
      %v177 = vld [vmem:[%s1 + $0x10] sm:$0xff]
      %v178 = vld [vmem:[%s1 + $0x18] sm:$0x33]
      %v179 = vld [vmem:[%s165 + $0xc] sm:$0x1]
      %s180 = scalar_lea.vmem %s1, 32
      %v181 = vld [vmem:[%s180] sm:$0xff]
      %v182 = vld [vmem:[%s180 + $0x8] sm:$0xff]
      %v183 = vld [vmem:[%s180 + $0x10] sm:$0xff]
      %v184 = vld [vmem:[%s180 + $0x18] sm:$0x33]
      %v189 = vunpack.c.l.b16 %v172
      %v190 = vunpack.c.l.b16 %v173
      %v191 = vunpack.c.l.b16 %v174
      %v192 = vunpack.c.l.b16 %v179
      %v193 = vpack.c.b16 %v190, %v189
      %v194 = vpack.c.b16 %v192, %v191
      %vm195 = vsmask.f32 7424
      %v197 = vshrl.u32 %v193, 16
      %v199 = vshll.u32 %v193, 16
      %v201 = vrot.slane %v199, 1
      %v202 = vor.u32 %v197, %v201
      %v204 = vshll.u32 %v194, 16
      %v206 = vrot.slane %v204, 1
      %v207 = vsel %vm195, %v202, %v206
      %v208 = vshrl.u32 %v194, 16
      %v210 = vor.u32 %v208, %v206
      %v215 = vunpack.c.l.b16 %v181
      %v216 = vunpack.c.h.b16 %v181
      %v217 = vunpack.c.l.b16 %v182
      %v218 = vunpack.c.h.b16 %v182
      %v219 = vunpack.c.l.b16 %v183
      %v220 = vunpack.c.h.b16 %v183
      %v221 = vunpack.c.l.b16 %v184
      %v222 = vunpack.c.h.b16 %v184
      %v223 = vpack.c.b16 %v217, %v215
      %v224 = vpack.c.b16 %v218, %v216
      %v225 = vpack.c.b16 %v221, %v219
      %v226 = vpack.c.b16 %v222, %v220
      %vm229 = vcmask 228352
      %v231 = vsel %vm229, %v207, 0
      %v234 = vsel %vm229, %v210, 0
      %vm236 = vcmask 1045504
      %v238 = vsel %vm236, %v225, 0
      %v241 = vsel %vm236, %v226, 0
      %243 = vmatprep.subr.bf16.mxu0 0
      %244 = vmatpush1.bf16.msra.mxu0 0
      %245 = vmatprep.subr.bf16.mxu0 0
      %246 = vmatpush1.bf16.msra.mxu0 0
      %247 = vmatprep.subr.bf16.mxu0 0
      %248 = vmatpush1.bf16.msra.mxu0 0
      %249 = vmatprep.subr.bf16.mxu0 0
      %250 = vmatpush1.bf16.msra.mxu0 0
      %251 = vmatprep.subr.bf16.mxu0 0
      %252 = vmatpush1.bf16.msra.mxu0 0
      %253 = vmatprep.subr.bf16.mxu0 0
      %254 = vmatpush1.bf16.msra.mxu0 0
      %255 = vmatprep.subr.bf16.mxu0 %v241
      %256 = vmatpush1.bf16.msra.mxu0 %v238
      %257 = vmatprep.subr.bf16.mxu0 %v224
      %258 = vmatpush1.bf16.msra.mxu0 %v223
      %259 = vmatprep.subr.bf16.mxu0 0
      %260 = vmatpush2.bf16.msra.mxu0 0
      %261 = vmatprep.subr.bf16.mxu0 0
      %262 = vmatpush2.bf16.msra.mxu0 0
      %263 = vmatprep.subr.bf16.mxu0 0
      %264 = vmatpush2.bf16.msra.mxu0 0
      %265 = vmatprep.subr.bf16.mxu0 0
      %266 = vmatpush2.bf16.msra.mxu0 0
      %267 = vmatprep.subr.bf16.mxu0 0
      %268 = vmatpush2.bf16.msra.mxu0 0
      %269 = vmatprep.subr.bf16.mxu0 0
      %270 = vmatpush2.bf16.msra.mxu0 0
      %271 = vmatprep.subr.bf16.mxu0 0
      %272 = vmatpush2.bf16.msra.mxu0 0
      %273 = vmatprep.subr.bf16.mxu0 0
      %274 = vmatpush2.bf16.msra.mxu0 0
      %275 = vmatprep.mubr.bf16.mxu0 0
      %276 = vmatmul.mubr.bf16.gmra.mxu0 %v231
      %v277 = vpop.f32.mrf.mxu0
      %v278 = vadd.f32 0.0, %v277
      %v279 = vpop.f32.mrf.mxu0
      %v280 = vadd.f32 0.0, %v279
      %v281 = vpop.f32.mrf.mxu0
      %v282 = vadd.f32 0.0, %v281
      %v283 = vpop.f32.mrf.mxu0
      %v284 = vadd.f32 0.0, %v283
      %285 = vmatprep.mubr.bf16.mxu0 0
      %286 = vmatmul.mubr.bf16.gmra.mxu0 %v234
      %v287 = vpop.f32.mrf.mxu0
      %v288 = vadd.f32 0.0, %v287
      %v289 = vpop.f32.mrf.mxu0
      %v290 = vadd.f32 0.0, %v289
      %v291 = vpop.f32.mrf.mxu0
      %v292 = vpop.f32.mrf.mxu0
      %293 = vdwg.mxu0
      %v294 = vpack.c.b16 %v191, %v191
      %v299 = vunpack.c.l.b16 %v175
      %v300 = vunpack.c.h.b16 %v175
      %v301 = vunpack.c.l.b16 %v176
      %v302 = vunpack.c.h.b16 %v176
      %v303 = vunpack.c.l.b16 %v177
      %v304 = vunpack.c.h.b16 %v177
      %v305 = vunpack.c.l.b16 %v178
      %v306 = vunpack.c.h.b16 %v178
      %v307 = vpack.c.b16 %v301, %v299
      %v308 = vpack.c.b16 %v302, %v300
      %v309 = vpack.c.b16 %v305, %v303
      %v310 = vpack.c.b16 %v306, %v304
      %v313 = vsel %vm229, %v193, 0
      %v316 = vsel %vm229, %v294, 0
      %v319 = vsel %vm236, %v309, 0
      %v322 = vsel %vm236, %v310, 0
      %324 = vmatprep.subr.bf16.mxu0 0
      %325 = vmatpush1.bf16.msra.mxu0 0
      %326 = vmatprep.subr.bf16.mxu0 0
      %327 = vmatpush1.bf16.msra.mxu0 0
      %328 = vmatprep.subr.bf16.mxu0 0
      %329 = vmatpush1.bf16.msra.mxu0 0
      %330 = vmatprep.subr.bf16.mxu0 0
      %331 = vmatpush1.bf16.msra.mxu0 0
      %332 = vmatprep.subr.bf16.mxu0 0
      %333 = vmatpush1.bf16.msra.mxu0 0
      %334 = vmatprep.subr.bf16.mxu0 0
      %335 = vmatpush1.bf16.msra.mxu0 0
      %336 = vmatprep.subr.bf16.mxu0 %v322
      %337 = vmatpush1.bf16.msra.mxu0 %v319
      %338 = vmatprep.subr.bf16.mxu0 %v308
      %339 = vmatpush1.bf16.msra.mxu0 %v307
      %340 = vmatprep.subr.bf16.mxu0 0
      %341 = vmatpush2.bf16.msra.mxu0 0
      %342 = vmatprep.subr.bf16.mxu0 0
      %343 = vmatpush2.bf16.msra.mxu0 0
      %344 = vmatprep.subr.bf16.mxu0 0
      %345 = vmatpush2.bf16.msra.mxu0 0
      %346 = vmatprep.subr.bf16.mxu0 0
      %347 = vmatpush2.bf16.msra.mxu0 0
      %348 = vmatprep.subr.bf16.mxu0 0
      %349 = vmatpush2.bf16.msra.mxu0 0
      %350 = vmatprep.subr.bf16.mxu0 0
      %351 = vmatpush2.bf16.msra.mxu0 0
      %352 = vmatprep.subr.bf16.mxu0 0
      %353 = vmatpush2.bf16.msra.mxu0 0
      %354 = vmatprep.subr.bf16.mxu0 0
      %355 = vmatpush2.bf16.msra.mxu0 0
      %356 = vmatprep.mubr.bf16.mxu0 0
      %357 = vmatmul.mubr.bf16.gmra.mxu0 %v313
      %v358 = vpop.f32.mrf.mxu0
      %v359 = vadd.f32 %v278, %v358
      %v360 = vpop.f32.mrf.mxu0
      %v361 = vadd.f32 %v280, %v360
      %v362 = vpop.f32.mrf.mxu0
      %v363 = vadd.f32 %v282, %v362
      %v364 = vpop.f32.mrf.mxu0
      %v365 = vadd.f32 %v284, %v364
      %366 = vmatprep.mubr.bf16.mxu0 0
      %367 = vmatmul.mubr.bf16.gmra.mxu0 %v316
      %v368 = vpop.f32.mrf.mxu0
      %v369 = vadd.f32 %v288, %v368
      %v370 = vpop.f32.mrf.mxu0
      %v371 = vadd.f32 %v290, %v370
      %v372 = vpop.f32.mrf.mxu0
      %v373 = vpop.f32.mrf.mxu0
      %374 = vdwg.mxu0
      %v375 = vld [vmem:[%s165] sm:$0xe]
      %s376 = scalar_lea.vmem %s1, 64
      %v377 = vld [vmem:[%s376] sm:$0xff]
      %v378 = vld [vmem:[%s376 + $0x8] sm:$0xff]
      %v379 = vld [vmem:[%s376 + $0x10] sm:$0xff]
      %v380 = vld [vmem:[%s376 + $0x18] sm:$0x33]
      %v382 = vunpack.c.l.b16 %v375
      %v383 = vpack.c.b16 %v190, %v382
      %vm384 = vcmask 1046528
      %v385 = vrot.slane %v383, 1
      %v386 = vrot.slane %v194, 1
      %v387 = vsel %vm384, %v385, %v386
      %v392 = vunpack.c.l.b16 %v377
      %v393 = vunpack.c.h.b16 %v377
      %v394 = vunpack.c.l.b16 %v378
      %v395 = vunpack.c.h.b16 %v378
      %v396 = vunpack.c.l.b16 %v379
      %v397 = vunpack.c.h.b16 %v379
      %v398 = vunpack.c.l.b16 %v380
      %v399 = vunpack.c.h.b16 %v380
      %v400 = vpack.c.b16 %v394, %v392
      %v401 = vpack.c.b16 %v395, %v393
      %v402 = vpack.c.b16 %v398, %v396
      %v403 = vpack.c.b16 %v399, %v397
      %v407 = vsel %vm229, %v387, 0
      %v410 = vsel %vm229, %v386, 0
      %v413 = vsel %vm236, %v402, 0
      %v416 = vsel %vm236, %v403, 0
      %418 = vmatprep.subr.bf16.mxu0 0
      %419 = vmatpush1.bf16.msra.mxu0 0
      %420 = vmatprep.subr.bf16.mxu0 0
      %421 = vmatpush1.bf16.msra.mxu0 0
      %422 = vmatprep.subr.bf16.mxu0 0
      %423 = vmatpush1.bf16.msra.mxu0 0
      %424 = vmatprep.subr.bf16.mxu0 0
      %425 = vmatpush1.bf16.msra.mxu0 0
      %426 = vmatprep.subr.bf16.mxu0 0
      %427 = vmatpush1.bf16.msra.mxu0 0
      %428 = vmatprep.subr.bf16.mxu0 0
      %429 = vmatpush1.bf16.msra.mxu0 0
      %430 = vmatprep.subr.bf16.mxu0 %v416
      %431 = vmatpush1.bf16.msra.mxu0 %v413
      %432 = vmatprep.subr.bf16.mxu0 %v401
      %433 = vmatpush1.bf16.msra.mxu0 %v400
      %434 = vmatprep.subr.bf16.mxu0 0
      %435 = vmatpush2.bf16.msra.mxu0 0
      %436 = vmatprep.subr.bf16.mxu0 0
      %437 = vmatpush2.bf16.msra.mxu0 0
      %438 = vmatprep.subr.bf16.mxu0 0
      %439 = vmatpush2.bf16.msra.mxu0 0
      %440 = vmatprep.subr.bf16.mxu0 0
      %441 = vmatpush2.bf16.msra.mxu0 0
      %442 = vmatprep.subr.bf16.mxu0 0
      %443 = vmatpush2.bf16.msra.mxu0 0
      %444 = vmatprep.subr.bf16.mxu0 0
      %445 = vmatpush2.bf16.msra.mxu0 0
      %446 = vmatprep.subr.bf16.mxu0 0
      %447 = vmatpush2.bf16.msra.mxu0 0
      %448 = vmatprep.subr.bf16.mxu0 0
      %449 = vmatpush2.bf16.msra.mxu0 0
      %450 = vmatprep.mubr.bf16.mxu0 0
      %451 = vmatmul.mubr.bf16.gmra.mxu0 %v407
      %v452 = vpop.f32.mrf.mxu0
      %v453 = vadd.f32 0.0, %v452
      %v454 = vpop.f32.mrf.mxu0
      %v455 = vadd.f32 0.0, %v454
      %v456 = vpop.f32.mrf.mxu0
      %v457 = vadd.f32 0.0, %v456
      %v458 = vpop.f32.mrf.mxu0
      %v459 = vadd.f32 0.0, %v458
      %460 = vmatprep.mubr.bf16.mxu0 0
      %461 = vmatmul.mubr.bf16.gmra.mxu0 %v410
      %v462 = vpop.f32.mrf.mxu0
      %v463 = vadd.f32 0.0, %v462
      %v464 = vpop.f32.mrf.mxu0
      %v465 = vadd.f32 0.0, %v464
      %v466 = vpop.f32.mrf.mxu0
      %v467 = vpop.f32.mrf.mxu0
      %468 = vdwg.mxu0
      %v469 = vadd.f32 %v359, %v453
      %v470 = vadd.f32 %v361, %v455
      %v471 = vadd.f32 %v363, %v457
      %v472 = vadd.f32 %v365, %v459
      %v473 = vadd.f32 %v369, %v463
      %v474 = vadd.f32 %v371, %v465
      %v475 = vld [vmem:[%s165 + $0xc] sm:$0x3]
      %s476 = scalar_lea.vmem %s1, 96
      %v477 = vld [vmem:[%s476] sm:$0xff]
      %v478 = vld [vmem:[%s476 + $0x8] sm:$0xff]
      %v479 = vld [vmem:[%s476 + $0x10] sm:$0xff]
      %v480 = vld [vmem:[%s476 + $0x18] sm:$0x33]
      %v482 = vunpack.c.l.b16 %v475
      %v483 = vpack.c.b16 %v482, %v191
      %vm484 = vsmask.f32 6400
      %v486 = vshrl.u32 %v383, 16
      %v488 = vrot.slane %v486, 1
      %v489 = vshll.u32 %v383, 16
      %v491 = vrot.slane %v489, 2
      %v492 = vor.u32 %v488, %v491
      %v494 = vshrl.u32 %v483, 16
      %v496 = vrot.slane %v494, 1
      %v497 = vshll.u32 %v483, 16
      %v499 = vrot.slane %v497, 2
      %v500 = vor.u32 %v496, %v499
      %v501 = vsel %vm484, %v492, %v500
      %v506 = vunpack.c.l.b16 %v477
      %v507 = vunpack.c.h.b16 %v477
      %v508 = vunpack.c.l.b16 %v478
      %v509 = vunpack.c.h.b16 %v478
      %v510 = vunpack.c.l.b16 %v479
      %v511 = vunpack.c.h.b16 %v479
      %v512 = vunpack.c.l.b16 %v480
      %v513 = vunpack.c.h.b16 %v480
      %v514 = vpack.c.b16 %v508, %v506
      %v515 = vpack.c.b16 %v509, %v507
      %v516 = vpack.c.b16 %v512, %v510
      %v517 = vpack.c.b16 %v513, %v511
      %v521 = vsel %vm229, %v501, 0
      %v524 = vsel %vm229, %v500, 0
      %v527 = vsel %vm236, %v516, 0
      %v530 = vsel %vm236, %v517, 0
      %532 = vmatprep.subr.bf16.mxu0 0
      %533 = vmatpush1.bf16.msra.mxu0 0
      %534 = vmatprep.subr.bf16.mxu0 0
      %535 = vmatpush1.bf16.msra.mxu0 0
      %536 = vmatprep.subr.bf16.mxu0 0
      %537 = vmatpush1.bf16.msra.mxu0 0
      %538 = vmatprep.subr.bf16.mxu0 0
      %539 = vmatpush1.bf16.msra.mxu0 0
      %540 = vmatprep.subr.bf16.mxu0 0
      %541 = vmatpush1.bf16.msra.mxu0 0
      %542 = vmatprep.subr.bf16.mxu0 0
      %543 = vmatpush1.bf16.msra.mxu0 0
      %544 = vmatprep.subr.bf16.mxu0 %v530
      %545 = vmatpush1.bf16.msra.mxu0 %v527
      %546 = vmatprep.subr.bf16.mxu0 %v515
      %547 = vmatpush1.bf16.msra.mxu0 %v514
      %548 = vmatprep.subr.bf16.mxu0 0
      %549 = vmatpush2.bf16.msra.mxu0 0
      %550 = vmatprep.subr.bf16.mxu0 0
      %551 = vmatpush2.bf16.msra.mxu0 0
      %552 = vmatprep.subr.bf16.mxu0 0
      %553 = vmatpush2.bf16.msra.mxu0 0
      %554 = vmatprep.subr.bf16.mxu0 0
      %555 = vmatpush2.bf16.msra.mxu0 0
      %556 = vmatprep.subr.bf16.mxu0 0
      %557 = vmatpush2.bf16.msra.mxu0 0
      %558 = vmatprep.subr.bf16.mxu0 0
      %559 = vmatpush2.bf16.msra.mxu0 0
      %560 = vmatprep.subr.bf16.mxu0 0
      %561 = vmatpush2.bf16.msra.mxu0 0
      %562 = vmatprep.subr.bf16.mxu0 0
      %563 = vmatpush2.bf16.msra.mxu0 0
      %564 = vmatprep.mubr.bf16.mxu0 0
      %565 = vmatmul.mubr.bf16.gmra.mxu0 %v521
      %v566 = vpop.f32.mrf.mxu0
      %v567 = vadd.f32 0.0, %v566
      %v568 = vpop.f32.mrf.mxu0
      %v569 = vadd.f32 0.0, %v568
      %v570 = vpop.f32.mrf.mxu0
      %v571 = vadd.f32 0.0, %v570
      %v572 = vpop.f32.mrf.mxu0
      %v573 = vadd.f32 0.0, %v572
      %574 = vmatprep.mubr.bf16.mxu0 0
      %575 = vmatmul.mubr.bf16.gmra.mxu0 %v524
      %v576 = vpop.f32.mrf.mxu0
      %v577 = vadd.f32 0.0, %v576
      %v578 = vpop.f32.mrf.mxu0
      %v579 = vadd.f32 0.0, %v578
      %v580 = vpop.f32.mrf.mxu0
      %v581 = vpop.f32.mrf.mxu0
      %582 = vdwg.mxu0
      %v583 = vadd.f32 %v469, %v567
      %v584 = vadd.f32 %v470, %v569
      %v585 = vadd.f32 %v471, %v571
      %v586 = vadd.f32 %v472, %v573
      %v587 = vadd.f32 %v473, %v577
      %v588 = vadd.f32 %v474, %v579
      %v589 = vld [vmem:[%s165] sm:$0xc]
      %s590 = scalar_lea.vmem %s1, 128
      %v591 = vld [vmem:[%s590] sm:$0xff]
      %v592 = vld [vmem:[%s590 + $0x8] sm:$0xff]
      %v593 = vld [vmem:[%s590 + $0x10] sm:$0xff]
      %v594 = vld [vmem:[%s590 + $0x18] sm:$0x33]
      %v596 = vunpack.c.l.b16 %v589
      %v597 = vpack.c.b16 %v190, %v596
      %vm598 = vcmask 1045504
      %v599 = vrot.slane %v597, 2
      %v600 = vrot.slane %v483, 2
      %v601 = vsel %vm598, %v599, %v600
      %v606 = vunpack.c.l.b16 %v591
      %v607 = vunpack.c.h.b16 %v591
      %v608 = vunpack.c.l.b16 %v592
      %v609 = vunpack.c.h.b16 %v592
      %v610 = vunpack.c.l.b16 %v593
      %v611 = vunpack.c.h.b16 %v593
      %v612 = vunpack.c.l.b16 %v594
      %v613 = vunpack.c.h.b16 %v594
      %v614 = vpack.c.b16 %v608, %v606
      %v615 = vpack.c.b16 %v609, %v607
      %v616 = vpack.c.b16 %v612, %v610
      %v617 = vpack.c.b16 %v613, %v611
      %v621 = vsel %vm229, %v601, 0
      %v624 = vsel %vm229, %v600, 0
      %v627 = vsel %vm236, %v616, 0
      %v630 = vsel %vm236, %v617, 0
      %632 = vmatprep.subr.bf16.mxu0 0
      %633 = vmatpush1.bf16.msra.mxu0 0
      %634 = vmatprep.subr.bf16.mxu0 0
      %635 = vmatpush1.bf16.msra.mxu0 0
      %636 = vmatprep.subr.bf16.mxu0 0
      %637 = vmatpush1.bf16.msra.mxu0 0
      %638 = vmatprep.subr.bf16.mxu0 0
      %639 = vmatpush1.bf16.msra.mxu0 0
      %640 = vmatprep.subr.bf16.mxu0 0
      %641 = vmatpush1.bf16.msra.mxu0 0
      %642 = vmatprep.subr.bf16.mxu0 0
      %643 = vmatpush1.bf16.msra.mxu0 0
      %644 = vmatprep.subr.bf16.mxu0 %v630
      %645 = vmatpush1.bf16.msra.mxu0 %v627
      %646 = vmatprep.subr.bf16.mxu0 %v615
      %647 = vmatpush1.bf16.msra.mxu0 %v614
      %648 = vmatprep.subr.bf16.mxu0 0
      %649 = vmatpush2.bf16.msra.mxu0 0
      %650 = vmatprep.subr.bf16.mxu0 0
      %651 = vmatpush2.bf16.msra.mxu0 0
      %652 = vmatprep.subr.bf16.mxu0 0
      %653 = vmatpush2.bf16.msra.mxu0 0
      %654 = vmatprep.subr.bf16.mxu0 0
      %655 = vmatpush2.bf16.msra.mxu0 0
      %656 = vmatprep.subr.bf16.mxu0 0
      %657 = vmatpush2.bf16.msra.mxu0 0
      %658 = vmatprep.subr.bf16.mxu0 0
      %659 = vmatpush2.bf16.msra.mxu0 0
      %660 = vmatprep.subr.bf16.mxu0 0
      %661 = vmatpush2.bf16.msra.mxu0 0
      %662 = vmatprep.subr.bf16.mxu0 0
      %663 = vmatpush2.bf16.msra.mxu0 0
      %664 = vmatprep.mubr.bf16.mxu0 0
      %665 = vmatmul.mubr.bf16.gmra.mxu0 %v621
      %v666 = vpop.f32.mrf.mxu0
      %v667 = vadd.f32 0.0, %v666
      %v668 = vpop.f32.mrf.mxu0
      %v669 = vadd.f32 0.0, %v668
      %v670 = vpop.f32.mrf.mxu0
      %v671 = vadd.f32 0.0, %v670
      %v672 = vpop.f32.mrf.mxu0
      %v673 = vadd.f32 0.0, %v672
      %674 = vmatprep.mubr.bf16.mxu0 0
      %675 = vmatmul.mubr.bf16.gmra.mxu0 %v624
      %v676 = vpop.f32.mrf.mxu0
      %v677 = vadd.f32 0.0, %v676
      %v678 = vpop.f32.mrf.mxu0
      %v679 = vadd.f32 0.0, %v678
      %v680 = vpop.f32.mrf.mxu0
      %v681 = vpop.f32.mrf.mxu0
      %682 = vdwg.mxu0
      %v683 = vadd.f32 %v583, %v667
      %v684 = vadd.f32 %v584, %v669
      %v685 = vadd.f32 %v585, %v671
      %v686 = vadd.f32 %v586, %v673
      %v687 = vadd.f32 %v587, %v677
      %v688 = vadd.f32 %v588, %v679
      %v689 = vld [vmem:[%s2] sm:$0x3]
      %v691 = vlaneseq
      %v692 = vshrl.u32 %v691, 7
      %v693 = vsub.s32 0, %v692
      %v694 = vrot.slane %v689, %v693
      %v695 = vlaneseq
      %v696 = vshrl.u32 %v695, 7
      %v697 = vsub.s32 1, %v696
      %v698 = vrot.slane %v689, %v697
      %v701 = vadd.f32 %v683, %v694
      %v702 = vadd.f32 %v684, %v698
      %v703 = vadd.f32 %v685, %v694
      %v704 = vadd.f32 %v686, %v698
      %v705 = vadd.f32 %v687, %v694
      %v706 = vadd.f32 %v688, %v698
      %v707 = vmax.f32 %v701, 0.0
      %v708 = vmax.f32 %v702, 0.0
      %v709 = vmax.f32 %v703, 0.0
      %v710 = vmax.f32 %v704, 0.0
      %v711 = vmax.f32 %v705, 0.0
      %v712 = vmax.f32 %v706, 0.0
      %v713 = vpack.c.bf16 %v709, %v707
      %v714 = vpack.c.bf16 %v710, %v708
      %v715 = vpack.c.bf16 %v711, %v711
      %v716 = vpack.c.bf16 %v712, %v712
      %v721 = vunpack.c.l.b16 %v713
      %v722 = vunpack.c.l.b16 %v714
      %v723 = vunpack.c.h.b16 %v713
      %v724 = vunpack.c.h.b16 %v714
      %v725 = vunpack.c.l.b16 %v715
      %v726 = vunpack.c.l.b16 %v716
      %v727 = vpack.c.b16 %v722, %v721
      %v728 = vpack.c.b16 %v724, %v723
      %v729 = vpack.c.b16 %v726, %v725
      %vm733 = vcmask 1043456
      %vm734 = vcmask 916484
      %vm735 = vmor %vm734, %vm733
      %736 = vst.msk [vmem:[%s170] sm:$0xff] %vm735, %v727
      %737 = vst.msk [vmem:[%s170 + $0x8] sm:$0xff] %vm735, %v728
      %738 = vst.msk [vmem:[%s170 + $0x10] sm:$0xff] %vm735, %v729
      %p739 = scmp.lt.s32.totalorder %s14, 1
      %s740 = scalar_select %p739, %s14, 1
      %s741 = smul.addr %s740, 6
      %s742 = smul.addr %s741, 4
      %s743 = scalar_lea.vmem %s3, %s742
      // Predicated region
      $region33: #{forward.9} parent=31 // pred_check
        %p744 = pneg %p100
      $region34: #{forward.9} parent=31 // pred_check_branch
        %746 = sbr.rel (%p744) target = $region36
      $region35: #{forward.9} parent=31 // pred_region
        _
      $region36: #{forward.9} parent=31 // pred_fallthru
        _
    $region32: #{forward.9} parent=5 // pred_fallthru
      _
    %p747 = scmp.le.s32.totalorder 2, %s9
    // Predicated region
    $region37: #{forward.9} parent=5 // pred_check
      %p748 = pneg %p747
    $region38: #{forward.9} parent=5 // pred_check_branch
      %750 = sbr.rel (%p748) target = $region40
    $region39: #{forward.9} parent=5 // pred_region
      %s751 = ssub.s32 %s9, 2
      // Predicated region
      $region41: #{forward.9} parent=39 // pred_check
        %p752 = pneg %p106
      $region42: #{forward.9} parent=39 // pred_check_branch
        %754 = sbr.rel (%p752) target = $region44
      $region43: #{forward.9} parent=39 // pred_region
        %p755 = scmp.lt.s32.totalorder %s15, 1
        %s756 = scalar_select %p755, %s15, 1
        %s757 = smul.addr %s756, 6
        %s758 = smul.addr %s757, 4
        %s759 = scalar_lea.vmem %s3, %s758
      $region44: #{forward.9} parent=39 // pred_fallthru
        _
    $region40: #{forward.9} parent=5 // pred_fallthru
      _
  $region6: #{forward.9} parent=0 // loop_footer
    %s13 = sadd.s32 1, %s9
  $region7: #{forward.9} parent=0 // loop_footer_branch
    %8 = sbr.rel target = $region3
  $region8: #{forward.9} parent=0 // loop_exit
    _

// kernel: forward.10
$region0: #{forward.10}
  #allocation0 [shape = 'u32[]', space=smem, size = 0x4, offset = 0x4, fixed_abs, tag = 'smem constant byte address 0x4 - core index']
  #allocation1 [shape = 'u32[144,128]{1,0:T(1,128)}', space=vmem, size = 0x12000, scoped, tag = 'internal scratch']
  %s0 = inlined_call_operand.vmem [shape: bf16[2,12,120], index: 0, kind: input, shape index: {}]
  %s1 = inlined_call_operand.vmem [shape: bf16[5,120,160], index: 1, kind: input, shape index: {}]
  %s2 = inlined_call_operand.vmem [shape: f32[1,160], index: 2, kind: input, shape index: {}]
  %s3 = inlined_call_operand.vmem [shape: bf16[2,8,160], index: 3, kind: output, shape index: {}]
  %s4 = sld [smem:[#allocation0]]
  $region45: #{forward.10} parent=0
    _
  %s6 = ssub.s32 1, %s4
  %s7 = scalar_select 0, %s6, %s4
  loop: start=0, step=1, limit=4
  $region2: #{forward.10} parent=0 // loop_pre_header
    _
  $region3: #{forward.10} parent=0 // loop_header
    %s9 = sphi 0, %s13
    %p10 = scmp.ge.s32.totalorder %s9, 4
    %s19 = sphi 0, %s21
    %s22 = sphi 0, %s19
    %s23 = sphi 0, %s22
    %s39 = sphi 0, %s23
    %s43 = sphi 0, %s43
    %s45 = sphi 0, %s43
    %s46 = sphi 0, %s45
    %s60 = sphi 0, %s46
    %s64 = sphi 0, %s64
    %s66 = sphi 0, %s64
    %s67 = sphi 0, %s66
    %s81 = sphi 0, %s67
    %s87 = sphi 0, %s89
    %s90 = sphi 0, %s87
    %s91 = sphi 0, %s90
    %s107 = sphi 0, %s91
  $region4: #{forward.10} parent=0 // loop_header_branch
    %12 = sbr.rel (%p10) target = $region8
  $region5: #{forward.10} parent=0 // loop_body
    %s14 = ssub.s32 %s9, 1
    %s15 = ssub.s32 %s9, 2
    %s16 = sadd.s32 %s9, 1
    %s17 = ssub.s32 %s9, %s16
    %p18 = scmp.eq.s32.totalorder %s17, 0
    %s20 = sadd.s32 %s19, 1
    %s21 = scalar_select %p18, %s19, %s20
    %p24 = pneg %p18
    %p25 = scmp.eq.s32.totalorder %s9, 1
    %p26 = por %p24, %p25
    %p27 = scmp.ne.s32.totalorder %s19, %s22
    %p28 = scmp.eq.s32.totalorder %s9, 0
    %p29 = por %p27, %p28
    %p30 = scmp.ne.s32.totalorder %s19, %s22
    %p31 = scmp.eq.s32.totalorder %s14, 1
    %p32 = por %p30, %p31
    %p33 = scmp.ne.s32.totalorder %s22, %s23
    %p34 = scmp.eq.s32.totalorder %s14, 0
    %p35 = por %p33, %p34
    %p36 = scmp.ne.s32.totalorder %s22, %s23
    %p37 = scmp.eq.s32.totalorder %s15, 1
    %p38 = por %p36, %p37
    %p40 = scmp.ne.s32.totalorder %s23, %s39
    %p41 = scmp.eq.s32.totalorder %s15, 0
    %p42 = por %p40, %p41
    %s44 = sadd.s32 %s43, 1
    %p47 = scmp.eq.s32.totalorder %s9, 1
    %p48 = scmp.ne.s32.totalorder %s43, %s45
    %p49 = scmp.eq.s32.totalorder %s9, 0
    %p50 = por %p48, %p49
    %p51 = scmp.ne.s32.totalorder %s43, %s45
    %p52 = scmp.eq.s32.totalorder %s14, 1
    %p53 = por %p51, %p52
    %p54 = scmp.ne.s32.totalorder %s45, %s46
    %p55 = scmp.eq.s32.totalorder %s14, 0
    %p56 = por %p54, %p55
    %p57 = scmp.ne.s32.totalorder %s45, %s46
    %p58 = scmp.eq.s32.totalorder %s15, 1
    %p59 = por %p57, %p58
    %p61 = scmp.ne.s32.totalorder %s46, %s60
    %p62 = scmp.eq.s32.totalorder %s15, 0
    %p63 = por %p61, %p62
    %s65 = sadd.s32 %s64, 1
    %p68 = scmp.eq.s32.totalorder %s9, 1
    %p69 = scmp.ne.s32.totalorder %s64, %s66
    %p70 = scmp.eq.s32.totalorder %s9, 0
    %p71 = por %p69, %p70
    %p72 = scmp.ne.s32.totalorder %s64, %s66
    %p73 = scmp.eq.s32.totalorder %s14, 1
    %p74 = por %p72, %p73
    %p75 = scmp.ne.s32.totalorder %s66, %s67
    %p76 = scmp.eq.s32.totalorder %s14, 0
    %p77 = por %p75, %p76
    %p78 = scmp.ne.s32.totalorder %s66, %s67
    %p79 = scmp.eq.s32.totalorder %s15, 1
    %p80 = por %p78, %p79
    %p82 = scmp.ne.s32.totalorder %s67, %s81
    %p83 = scmp.eq.s32.totalorder %s15, 0
    %p84 = por %p82, %p83
    %s85 = ssub.s32 %s9, %s16
    %p86 = scmp.eq.s32.totalorder %s85, 0
    %s88 = sadd.s32 %s87, 1
    %s89 = scalar_select %p86, %s87, %s88
    %p92 = pneg %p86
    %p93 = scmp.eq.s32.totalorder %s9, 1
    %p94 = por %p92, %p93
    %p95 = scmp.ne.s32.totalorder %s87, %s90
    %p96 = scmp.eq.s32.totalorder %s9, 0
    %p97 = por %p95, %p96
    %p98 = scmp.ne.s32.totalorder %s87, %s90
    %p99 = scmp.eq.s32.totalorder %s14, 1
    %p100 = por %p98, %p99
    %p101 = scmp.ne.s32.totalorder %s90, %s91
    %p102 = scmp.eq.s32.totalorder %s14, 0
    %p103 = por %p101, %p102
    %p104 = scmp.ne.s32.totalorder %s90, %s91
    %p105 = scmp.eq.s32.totalorder %s15, 1
    %p106 = por %p104, %p105
    %p108 = scmp.ne.s32.totalorder %s91, %s107
    %p109 = scmp.eq.s32.totalorder %s15, 0
    %p110 = por %p108, %p109
    %p111 = scmp.le.s32.totalorder 1, %s9
    %p112 = scmp.lt.s32.totalorder %s9, 3
    %p113 = pnand %p111, %p112
    %p114 = pneg %p113
    // Predicated region
    $region9: #{forward.10} parent=5 // pred_check
      _
    $region10: #{forward.10} parent=5 // pred_check_branch
      %116 = sbr.rel (%p113) target = $region12
    $region11: #{forward.10} parent=5 // pred_region
      %s117 = ssub.s32 %s9, 1
      // Predicated region
      $region13: #{forward.10} parent=11 // pred_check
        %p118 = pneg %p56
      $region14: #{forward.10} parent=11 // pred_check_branch
        %120 = sbr.rel (%p118) target = $region16
      $region15: #{forward.10} parent=11 // pred_region
        _
      $region16: #{forward.10} parent=11 // pred_fallthru
        _
      // Predicated region
      $region17: #{forward.10} parent=11 // pred_check
        %p121 = pneg %p77
      $region18: #{forward.10} parent=11 // pred_check_branch
        %123 = sbr.rel (%p121) target = $region20
      $region19: #{forward.10} parent=11 // pred_region
        _
      $region20: #{forward.10} parent=11 // pred_fallthru
        _
    $region12: #{forward.10} parent=5 // pred_fallthru
      _
    %p124 = scmp.lt.s32.totalorder %s9, 2
    // Predicated region
    $region21: #{forward.10} parent=5 // pred_check
      %p125 = pneg %p124
    $region22: #{forward.10} parent=5 // pred_check_branch
      %127 = sbr.rel (%p125) target = $region24
    $region23: #{forward.10} parent=5 // pred_region
      // Predicated region
      $region25: #{forward.10} parent=23 // pred_check
        %p128 = pneg %p29
      $region26: #{forward.10} parent=23 // pred_check_branch
        %130 = sbr.rel (%p128) target = $region28
      $region27: #{forward.10} parent=23 // pred_region
        %p131 = scmp.lt.s32.totalorder %s9, 1
        %s132 = scalar_select %p131, %s9, 1
        %s133 = smul.addr %s132, 2
        %s134 = smul.addr %s133, 4
        %s135 = scalar_lea.vmem %s0, %s134
      $region28: #{forward.10} parent=23 // pred_fallthru
        _
    $region24: #{forward.10} parent=5 // pred_fallthru
      _
    %p136 = scmp.le.s32.totalorder 1, %s9
    %p137 = scmp.lt.s32.totalorder %s9, 3
    %p138 = pnand %p136, %p137
    %p139 = pneg %p138
    // Predicated region
    $region29: #{forward.10} parent=5 // pred_check
      _
    $region30: #{forward.10} parent=5 // pred_check_branch
      %141 = sbr.rel (%p138) target = $region32
    $region31: #{forward.10} parent=5 // pred_region
      %s142 = ssub.s32 %s9, 1
      %p143 = scmp.lt.s32.totalorder %s14, 1
      %s144 = scalar_select %p143, %s14, 1
      %s145 = smul.addr %s144, 2
      %s146 = smul.addr %s145, 4
      %s147 = scalar_lea.vmem %s0, %s146
      %p148 = pneg %p35
      %p149 = pneg %p32
      %p150 = pneg %p56
      %p151 = pneg %p53
      %p152 = pneg %p77
      %p153 = pneg %p74
      %p154 = pneg %p103
      %p155 = pneg %p100
      %p156 = scmp.lt.s32.totalorder %s14, 1
      %s157 = scalar_select %p156, %s14, 1
      %s158 = smul.addr %s157, 2
      %s159 = smul.addr %s158, 4
      %s160 = scalar_lea.vmem %s3, %s159
      %p161 = scmp.lt.s32.totalorder %s14, 1
      %s162 = scalar_select %p161, %s14, 1
      %s163 = smul.addr %s162, 2
      %s164 = smul.addr %s163, 4
      %s165 = scalar_lea.vmem %s0, %s164
      %p166 = scmp.lt.s32.totalorder %s14, 1
      %s167 = scalar_select %p166, %s14, 1
      %s168 = smul.addr %s167, 2
      %s169 = smul.addr %s168, 4
      %s170 = scalar_lea.vmem %s3, %s169
      %v172 = vld [vmem:[%s165] sm:$0xf]
      %v173 = vld [vmem:[%s1] sm:$0xff]
      %v174 = vld [vmem:[%s1 + $0x8] sm:$0xff]
      %v175 = vld [vmem:[%s1 + $0x10] sm:$0xff]
      %v176 = vld [vmem:[%s1 + $0x18] sm:$0xff]
      %v177 = vld [vmem:[%s1 + $0x20] sm:$0xff]
      %v178 = vld [vmem:[%s1 + $0x28] sm:$0xff]
      %v179 = vld [vmem:[%s1 + $0x30] sm:$0xff]
      %v180 = vld [vmem:[%s1 + $0x38] sm:$0xff]
      %v181 = vld [vmem:[%s1 + $0x40] sm:$0xff]
      %v182 = vld [vmem:[%s1 + $0x48] sm:$0xff]
      %v183 = vld [vmem:[%s1 + $0x50] sm:$0xff]
      %v184 = vld [vmem:[%s1 + $0x58] sm:$0xff]
      %v185 = vld [vmem:[%s1 + $0x60] sm:$0xff]
      %v186 = vld [vmem:[%s1 + $0x68] sm:$0xff]
      %v187 = vld [vmem:[%s1 + $0x70] sm:$0xff]
      %v188 = vld [vmem:[%s165 + $0x4] sm:$0x1]
      %s189 = scalar_lea.vmem %s1, 120
      %v190 = vld [vmem:[%s189] sm:$0xff]
      %v191 = vld [vmem:[%s189 + $0x8] sm:$0xff]
      %v192 = vld [vmem:[%s189 + $0x10] sm:$0xff]
      %v193 = vld [vmem:[%s189 + $0x18] sm:$0xff]
      %v194 = vld [vmem:[%s189 + $0x20] sm:$0xff]
      %v195 = vld [vmem:[%s189 + $0x28] sm:$0xff]
      %v196 = vld [vmem:[%s189 + $0x30] sm:$0xff]
      %v197 = vld [vmem:[%s189 + $0x38] sm:$0xff]
      %v198 = vld [vmem:[%s189 + $0x40] sm:$0xff]
      %v199 = vld [vmem:[%s189 + $0x48] sm:$0xff]
      %v200 = vld [vmem:[%s189 + $0x50] sm:$0xff]
      %v201 = vld [vmem:[%s189 + $0x58] sm:$0xff]
      %v202 = vld [vmem:[%s189 + $0x60] sm:$0xff]
      %v203 = vld [vmem:[%s189 + $0x68] sm:$0xff]
      %v204 = vld [vmem:[%s189 + $0x70] sm:$0xff]
      %v207 = vunpack.c.l.b16 %v172
      %v208 = vunpack.c.l.b16 %v188
      %v209 = vpack.c.b16 %v208, %v207
      %v211 = vshrl.u32 %v209, 16
      %v213 = vshll.u32 %v209, 16
      %v215 = vrot.slane %v213, 1
      %v216 = vor.u32 %v211, %v215
      %v232 = vunpack.c.l.b16 %v190
      %v233 = vunpack.c.h.b16 %v190
      %v234 = vunpack.c.l.b16 %v191
      %v235 = vunpack.c.h.b16 %v191
      %v236 = vunpack.c.l.b16 %v192
      %v237 = vunpack.c.h.b16 %v192
      %v238 = vunpack.c.l.b16 %v193
      %v239 = vunpack.c.h.b16 %v193
      %v240 = vunpack.c.l.b16 %v194
      %v241 = vunpack.c.h.b16 %v194
      %v242 = vunpack.c.l.b16 %v195
      %v243 = vunpack.c.h.b16 %v195
      %v244 = vunpack.c.l.b16 %v196
      %v245 = vunpack.c.h.b16 %v196
      %v246 = vunpack.c.l.b16 %v197
      %v247 = vunpack.c.h.b16 %v197
      %v248 = vunpack.c.l.b16 %v198
      %v249 = vunpack.c.h.b16 %v198
      %v250 = vunpack.c.l.b16 %v199
      %v251 = vunpack.c.h.b16 %v199
      %v252 = vunpack.c.l.b16 %v200
      %v253 = vunpack.c.h.b16 %v200
      %v254 = vunpack.c.l.b16 %v201
      %v255 = vunpack.c.h.b16 %v201
      %v256 = vunpack.c.l.b16 %v202
      %v257 = vunpack.c.h.b16 %v202
      %v258 = vunpack.c.l.b16 %v203
      %v259 = vunpack.c.h.b16 %v203
      %v260 = vunpack.c.l.b16 %v204
      %v261 = vunpack.c.h.b16 %v204
      %v262 = vpack.c.b16 %v234, %v232
      %v263 = vpack.c.b16 %v235, %v233
      %v264 = vpack.c.b16 %v238, %v236
      %v265 = vpack.c.b16 %v239, %v237
      %v266 = vpack.c.b16 %v242, %v240
      %v267 = vpack.c.b16 %v243, %v241
      %v268 = vpack.c.b16 %v246, %v244
      %v269 = vpack.c.b16 %v247, %v245
      %v270 = vpack.c.b16 %v250, %v248
      %v271 = vpack.c.b16 %v251, %v249
      %v272 = vpack.c.b16 %v254, %v252
      %v273 = vpack.c.b16 %v255, %v253
      %v274 = vpack.c.b16 %v258, %v256
      %v275 = vpack.c.b16 %v259, %v257
      %v276 = vpack.c.b16 %v260, %v260
      %v277 = vpack.c.b16 %v261, %v261
      %vm292 = vcmask 982016
      %v294 = vsel %vm292, %v216, 0
      %vm296 = vcmask 1043456
      %v298 = vsel %vm296, %v276, 0
      %v301 = vsel %vm296, %v277, 0
      %303 = vmatprep.subr.bf16.mxu0 %v301
      %304 = vmatpush1.bf16.msra.mxu0 %v298
      %305 = vmatprep.subr.bf16.mxu0 %v275
      %306 = vmatpush1.bf16.msra.mxu0 %v274
      %307 = vmatprep.subr.bf16.mxu0 %v273
      %308 = vmatpush1.bf16.msra.mxu0 %v272
      %309 = vmatprep.subr.bf16.mxu0 %v271
      %310 = vmatpush1.bf16.msra.mxu0 %v270
      %311 = vmatprep.subr.bf16.mxu0 %v269
      %312 = vmatpush1.bf16.msra.mxu0 %v268
      %313 = vmatprep.subr.bf16.mxu0 %v267
      %314 = vmatpush1.bf16.msra.mxu0 %v266
      %315 = vmatprep.subr.bf16.mxu0 %v265
      %316 = vmatpush1.bf16.msra.mxu0 %v264
      %317 = vmatprep.subr.bf16.mxu0 %v263
      %318 = vmatpush1.bf16.msra.mxu0 %v262
      %319 = vmatprep.subr.bf16.mxu0 0
      %320 = vmatpush2.bf16.msra.mxu0 0
      %321 = vmatprep.subr.bf16.mxu0 0
      %322 = vmatpush2.bf16.msra.mxu0 0
      %323 = vmatprep.subr.bf16.mxu0 0
      %324 = vmatpush2.bf16.msra.mxu0 0
      %325 = vmatprep.subr.bf16.mxu0 0
      %326 = vmatpush2.bf16.msra.mxu0 0
      %327 = vmatprep.subr.bf16.mxu0 0
      %328 = vmatpush2.bf16.msra.mxu0 0
      %329 = vmatprep.subr.bf16.mxu0 0
      %330 = vmatpush2.bf16.msra.mxu0 0
      %331 = vmatprep.subr.bf16.mxu0 0
      %332 = vmatpush2.bf16.msra.mxu0 0
      %333 = vmatprep.subr.bf16.mxu0 0
      %334 = vmatpush2.bf16.msra.mxu0 0
      %335 = vmatprep.mubr.bf16.mxu0 0
      %336 = vmatmul.mubr.bf16.gmra.mxu0 %v294
      %v337 = vpop.f32.mrf.mxu0
      %v338 = vadd.f32 0.0, %v337
      %v339 = vpop.f32.mrf.mxu0
      %v340 = vadd.f32 0.0, %v339
      %v341 = vpop.f32.mrf.mxu0
      %v342 = vpop.f32.mrf.mxu0
      %343 = vdwg.mxu0
      %v359 = vunpack.c.l.b16 %v173
      %v360 = vunpack.c.h.b16 %v173
      %v361 = vunpack.c.l.b16 %v174
      %v362 = vunpack.c.h.b16 %v174
      %v363 = vunpack.c.l.b16 %v175
      %v364 = vunpack.c.h.b16 %v175
      %v365 = vunpack.c.l.b16 %v176
      %v366 = vunpack.c.h.b16 %v176
      %v367 = vunpack.c.l.b16 %v177
      %v368 = vunpack.c.h.b16 %v177
      %v369 = vunpack.c.l.b16 %v178
      %v370 = vunpack.c.h.b16 %v178
      %v371 = vunpack.c.l.b16 %v179
      %v372 = vunpack.c.h.b16 %v179
      %v373 = vunpack.c.l.b16 %v180
      %v374 = vunpack.c.h.b16 %v180
      %v375 = vunpack.c.l.b16 %v181
      %v376 = vunpack.c.h.b16 %v181
      %v377 = vunpack.c.l.b16 %v182
      %v378 = vunpack.c.h.b16 %v182
      %v379 = vunpack.c.l.b16 %v183
      %v380 = vunpack.c.h.b16 %v183
      %v381 = vunpack.c.l.b16 %v184
      %v382 = vunpack.c.h.b16 %v184
      %v383 = vunpack.c.l.b16 %v185
      %v384 = vunpack.c.h.b16 %v185
      %v385 = vunpack.c.l.b16 %v186
      %v386 = vunpack.c.h.b16 %v186
      %v387 = vunpack.c.l.b16 %v187
      %v388 = vunpack.c.h.b16 %v187
      %v389 = vpack.c.b16 %v361, %v359
      %v390 = vpack.c.b16 %v362, %v360
      %v391 = vpack.c.b16 %v365, %v363
      %v392 = vpack.c.b16 %v366, %v364
      %v393 = vpack.c.b16 %v369, %v367
      %v394 = vpack.c.b16 %v370, %v368
      %v395 = vpack.c.b16 %v373, %v371
      %v396 = vpack.c.b16 %v374, %v372
      %v397 = vpack.c.b16 %v377, %v375
      %v398 = vpack.c.b16 %v378, %v376
      %v399 = vpack.c.b16 %v381, %v379
      %v400 = vpack.c.b16 %v382, %v380
      %v401 = vpack.c.b16 %v385, %v383
      %v402 = vpack.c.b16 %v386, %v384
      %v403 = vpack.c.b16 %v387, %v387
      %v404 = vpack.c.b16 %v388, %v388
      %v420 = vsel %vm292, %v172, 0
      %v423 = vsel %vm296, %v403, 0
      %v426 = vsel %vm296, %v404, 0
      %428 = vmatprep.subr.bf16.mxu0 %v426
      %429 = vmatpush1.bf16.msra.mxu0 %v423
      %430 = vmatprep.subr.bf16.mxu0 %v402
      %431 = vmatpush1.bf16.msra.mxu0 %v401
      %432 = vmatprep.subr.bf16.mxu0 %v400
      %433 = vmatpush1.bf16.msra.mxu0 %v399
      %434 = vmatprep.subr.bf16.mxu0 %v398
      %435 = vmatpush1.bf16.msra.mxu0 %v397
      %436 = vmatprep.subr.bf16.mxu0 %v396
      %437 = vmatpush1.bf16.msra.mxu0 %v395
      %438 = vmatprep.subr.bf16.mxu0 %v394
      %439 = vmatpush1.bf16.msra.mxu0 %v393
      %440 = vmatprep.subr.bf16.mxu0 %v392
      %441 = vmatpush1.bf16.msra.mxu0 %v391
      %442 = vmatprep.subr.bf16.mxu0 %v390
      %443 = vmatpush1.bf16.msra.mxu0 %v389
      %444 = vmatprep.subr.bf16.mxu0 0
      %445 = vmatpush2.bf16.msra.mxu0 0
      %446 = vmatprep.subr.bf16.mxu0 0
      %447 = vmatpush2.bf16.msra.mxu0 0
      %448 = vmatprep.subr.bf16.mxu0 0
      %449 = vmatpush2.bf16.msra.mxu0 0
      %450 = vmatprep.subr.bf16.mxu0 0
      %451 = vmatpush2.bf16.msra.mxu0 0
      %452 = vmatprep.subr.bf16.mxu0 0
      %453 = vmatpush2.bf16.msra.mxu0 0
      %454 = vmatprep.subr.bf16.mxu0 0
      %455 = vmatpush2.bf16.msra.mxu0 0
      %456 = vmatprep.subr.bf16.mxu0 0
      %457 = vmatpush2.bf16.msra.mxu0 0
      %458 = vmatprep.subr.bf16.mxu0 0
      %459 = vmatpush2.bf16.msra.mxu0 0
      %460 = vmatprep.mubr.bf16.mxu0 0
      %461 = vmatmul.mubr.bf16.gmra.mxu0 %v420
      %v462 = vpop.f32.mrf.mxu0
      %v463 = vadd.f32 %v338, %v462
      %v464 = vpop.f32.mrf.mxu0
      %v465 = vadd.f32 %v340, %v464
      %v466 = vpop.f32.mrf.mxu0
      %v467 = vpop.f32.mrf.mxu0
      %468 = vdwg.mxu0
      %v469 = vld [vmem:[%s165] sm:$0xe]
      %s470 = scalar_lea.vmem %s1, 240
      %v471 = vld [vmem:[%s470] sm:$0xff]
      %v472 = vld [vmem:[%s470 + $0x8] sm:$0xff]
      %v473 = vld [vmem:[%s470 + $0x10] sm:$0xff]
      %v474 = vld [vmem:[%s470 + $0x18] sm:$0xff]
      %v475 = vld [vmem:[%s470 + $0x20] sm:$0xff]
      %v476 = vld [vmem:[%s470 + $0x28] sm:$0xff]
      %v477 = vld [vmem:[%s470 + $0x30] sm:$0xff]
      %v478 = vld [vmem:[%s470 + $0x38] sm:$0xff]
      %v479 = vld [vmem:[%s470 + $0x40] sm:$0xff]
      %v480 = vld [vmem:[%s470 + $0x48] sm:$0xff]
      %v481 = vld [vmem:[%s470 + $0x50] sm:$0xff]
      %v482 = vld [vmem:[%s470 + $0x58] sm:$0xff]
      %v483 = vld [vmem:[%s470 + $0x60] sm:$0xff]
      %v484 = vld [vmem:[%s470 + $0x68] sm:$0xff]
      %v485 = vld [vmem:[%s470 + $0x70] sm:$0xff]
      %v487 = vunpack.c.l.b16 %v469
      %v488 = vpack.c.b16 %v208, %v487
      %v489 = vrot.slane %v488, 1
      %v505 = vunpack.c.l.b16 %v471
      %v506 = vunpack.c.h.b16 %v471
      %v507 = vunpack.c.l.b16 %v472
      %v508 = vunpack.c.h.b16 %v472
      %v509 = vunpack.c.l.b16 %v473
      %v510 = vunpack.c.h.b16 %v473
      %v511 = vunpack.c.l.b16 %v474
      %v512 = vunpack.c.h.b16 %v474
      %v513 = vunpack.c.l.b16 %v475
      %v514 = vunpack.c.h.b16 %v475
      %v515 = vunpack.c.l.b16 %v476
      %v516 = vunpack.c.h.b16 %v476
      %v517 = vunpack.c.l.b16 %v477
      %v518 = vunpack.c.h.b16 %v477
      %v519 = vunpack.c.l.b16 %v478
      %v520 = vunpack.c.h.b16 %v478
      %v521 = vunpack.c.l.b16 %v479
      %v522 = vunpack.c.h.b16 %v479
      %v523 = vunpack.c.l.b16 %v480
      %v524 = vunpack.c.h.b16 %v480
      %v525 = vunpack.c.l.b16 %v481
      %v526 = vunpack.c.h.b16 %v481
      %v527 = vunpack.c.l.b16 %v482
      %v528 = vunpack.c.h.b16 %v482
      %v529 = vunpack.c.l.b16 %v483
      %v530 = vunpack.c.h.b16 %v483
      %v531 = vunpack.c.l.b16 %v484
      %v532 = vunpack.c.h.b16 %v484
      %v533 = vunpack.c.l.b16 %v485
      %v534 = vunpack.c.h.b16 %v485
      %v535 = vpack.c.b16 %v507, %v505
      %v536 = vpack.c.b16 %v508, %v506
      %v537 = vpack.c.b16 %v511, %v509
      %v538 = vpack.c.b16 %v512, %v510
      %v539 = vpack.c.b16 %v515, %v513
      %v540 = vpack.c.b16 %v516, %v514
      %v541 = vpack.c.b16 %v519, %v517
      %v542 = vpack.c.b16 %v520, %v518
      %v543 = vpack.c.b16 %v523, %v521
      %v544 = vpack.c.b16 %v524, %v522
      %v545 = vpack.c.b16 %v527, %v525
      %v546 = vpack.c.b16 %v528, %v526
      %v547 = vpack.c.b16 %v531, %v529
      %v548 = vpack.c.b16 %v532, %v530
      %v549 = vpack.c.b16 %v533, %v533
      %v550 = vpack.c.b16 %v534, %v534
      %v566 = vsel %vm292, %v489, 0
      %v569 = vsel %vm296, %v549, 0
      %v572 = vsel %vm296, %v550, 0
      %574 = vmatprep.subr.bf16.mxu0 %v572
      %575 = vmatpush1.bf16.msra.mxu0 %v569
      %576 = vmatprep.subr.bf16.mxu0 %v548
      %577 = vmatpush1.bf16.msra.mxu0 %v547
      %578 = vmatprep.subr.bf16.mxu0 %v546
      %579 = vmatpush1.bf16.msra.mxu0 %v545
      %580 = vmatprep.subr.bf16.mxu0 %v544
      %581 = vmatpush1.bf16.msra.mxu0 %v543
      %582 = vmatprep.subr.bf16.mxu0 %v542
      %583 = vmatpush1.bf16.msra.mxu0 %v541
      %584 = vmatprep.subr.bf16.mxu0 %v540
      %585 = vmatpush1.bf16.msra.mxu0 %v539
      %586 = vmatprep.subr.bf16.mxu0 %v538
      %587 = vmatpush1.bf16.msra.mxu0 %v537
      %588 = vmatprep.subr.bf16.mxu0 %v536
      %589 = vmatpush1.bf16.msra.mxu0 %v535
      %590 = vmatprep.subr.bf16.mxu0 0
      %591 = vmatpush2.bf16.msra.mxu0 0
      %592 = vmatprep.subr.bf16.mxu0 0
      %593 = vmatpush2.bf16.msra.mxu0 0
      %594 = vmatprep.subr.bf16.mxu0 0
      %595 = vmatpush2.bf16.msra.mxu0 0
      %596 = vmatprep.subr.bf16.mxu0 0
      %597 = vmatpush2.bf16.msra.mxu0 0
      %598 = vmatprep.subr.bf16.mxu0 0
      %599 = vmatpush2.bf16.msra.mxu0 0
      %600 = vmatprep.subr.bf16.mxu0 0
      %601 = vmatpush2.bf16.msra.mxu0 0
      %602 = vmatprep.subr.bf16.mxu0 0
      %603 = vmatpush2.bf16.msra.mxu0 0
      %604 = vmatprep.subr.bf16.mxu0 0
      %605 = vmatpush2.bf16.msra.mxu0 0
      %606 = vmatprep.mubr.bf16.mxu0 0
      %607 = vmatmul.mubr.bf16.gmra.mxu0 %v566
      %v608 = vpop.f32.mrf.mxu0
      %v609 = vadd.f32 0.0, %v608
      %v610 = vpop.f32.mrf.mxu0
      %v611 = vadd.f32 0.0, %v610
      %v612 = vpop.f32.mrf.mxu0
      %v613 = vpop.f32.mrf.mxu0
      %614 = vdwg.mxu0
      %v615 = vadd.f32 %v463, %v609
      %v616 = vadd.f32 %v465, %v611
      %v617 = vld [vmem:[%s165 + $0x4] sm:$0x3]
      %s618 = scalar_lea.vmem %s1, 360
      %v619 = vld [vmem:[%s618] sm:$0xff]
      %v620 = vld [vmem:[%s618 + $0x8] sm:$0xff]
      %v621 = vld [vmem:[%s618 + $0x10] sm:$0xff]
      %v622 = vld [vmem:[%s618 + $0x18] sm:$0xff]
      %v623 = vld [vmem:[%s618 + $0x20] sm:$0xff]
      %v624 = vld [vmem:[%s618 + $0x28] sm:$0xff]
      %v625 = vld [vmem:[%s618 + $0x30] sm:$0xff]
      %v626 = vld [vmem:[%s618 + $0x38] sm:$0xff]
      %v627 = vld [vmem:[%s618 + $0x40] sm:$0xff]
      %v628 = vld [vmem:[%s618 + $0x48] sm:$0xff]
      %v629 = vld [vmem:[%s618 + $0x50] sm:$0xff]
      %v630 = vld [vmem:[%s618 + $0x58] sm:$0xff]
      %v631 = vld [vmem:[%s618 + $0x60] sm:$0xff]
      %v632 = vld [vmem:[%s618 + $0x68] sm:$0xff]
      %v633 = vld [vmem:[%s618 + $0x70] sm:$0xff]
      %v635 = vunpack.c.l.b16 %v617
      %v636 = vpack.c.b16 %v635, %v487
      %v638 = vshrl.u32 %v636, 16
      %v640 = vrot.slane %v638, 1
      %v641 = vshll.u32 %v636, 16
      %v643 = vrot.slane %v641, 2
      %v644 = vor.u32 %v640, %v643
      %v660 = vunpack.c.l.b16 %v619
      %v661 = vunpack.c.h.b16 %v619
      %v662 = vunpack.c.l.b16 %v620
      %v663 = vunpack.c.h.b16 %v620
      %v664 = vunpack.c.l.b16 %v621
      %v665 = vunpack.c.h.b16 %v621
      %v666 = vunpack.c.l.b16 %v622
      %v667 = vunpack.c.h.b16 %v622
      %v668 = vunpack.c.l.b16 %v623
      %v669 = vunpack.c.h.b16 %v623
      %v670 = vunpack.c.l.b16 %v624
      %v671 = vunpack.c.h.b16 %v624
      %v672 = vunpack.c.l.b16 %v625
      %v673 = vunpack.c.h.b16 %v625
      %v674 = vunpack.c.l.b16 %v626
      %v675 = vunpack.c.h.b16 %v626
      %v676 = vunpack.c.l.b16 %v627
      %v677 = vunpack.c.h.b16 %v627
      %v678 = vunpack.c.l.b16 %v628
      %v679 = vunpack.c.h.b16 %v628
      %v680 = vunpack.c.l.b16 %v629
      %v681 = vunpack.c.h.b16 %v629
      %v682 = vunpack.c.l.b16 %v630
      %v683 = vunpack.c.h.b16 %v630
      %v684 = vunpack.c.l.b16 %v631
      %v685 = vunpack.c.h.b16 %v631
      %v686 = vunpack.c.l.b16 %v632
      %v687 = vunpack.c.h.b16 %v632
      %v688 = vunpack.c.l.b16 %v633
      %v689 = vunpack.c.h.b16 %v633
      %v690 = vpack.c.b16 %v662, %v660
      %v691 = vpack.c.b16 %v663, %v661
      %v692 = vpack.c.b16 %v666, %v664
      %v693 = vpack.c.b16 %v667, %v665
      %v694 = vpack.c.b16 %v670, %v668
      %v695 = vpack.c.b16 %v671, %v669
      %v696 = vpack.c.b16 %v674, %v672
      %v697 = vpack.c.b16 %v675, %v673
      %v698 = vpack.c.b16 %v678, %v676
      %v699 = vpack.c.b16 %v679, %v677
      %v700 = vpack.c.b16 %v682, %v680
      %v701 = vpack.c.b16 %v683, %v681
      %v702 = vpack.c.b16 %v686, %v684
      %v703 = vpack.c.b16 %v687, %v685
      %v704 = vpack.c.b16 %v688, %v688
      %v705 = vpack.c.b16 %v689, %v689
      %v721 = vsel %vm292, %v644, 0
      %v724 = vsel %vm296, %v704, 0
      %v727 = vsel %vm296, %v705, 0
      %729 = vmatprep.subr.bf16.mxu0 %v727
      %730 = vmatpush1.bf16.msra.mxu0 %v724
      %731 = vmatprep.subr.bf16.mxu0 %v703
      %732 = vmatpush1.bf16.msra.mxu0 %v702
      %733 = vmatprep.subr.bf16.mxu0 %v701
      %734 = vmatpush1.bf16.msra.mxu0 %v700
      %735 = vmatprep.subr.bf16.mxu0 %v699
      %736 = vmatpush1.bf16.msra.mxu0 %v698
      %737 = vmatprep.subr.bf16.mxu0 %v697
      %738 = vmatpush1.bf16.msra.mxu0 %v696
      %739 = vmatprep.subr.bf16.mxu0 %v695
      %740 = vmatpush1.bf16.msra.mxu0 %v694
      %741 = vmatprep.subr.bf16.mxu0 %v693
      %742 = vmatpush1.bf16.msra.mxu0 %v692
      %743 = vmatprep.subr.bf16.mxu0 %v691
      %744 = vmatpush1.bf16.msra.mxu0 %v690
      %745 = vmatprep.subr.bf16.mxu0 0
      %746 = vmatpush2.bf16.msra.mxu0 0
      %747 = vmatprep.subr.bf16.mxu0 0
      %748 = vmatpush2.bf16.msra.mxu0 0
      %749 = vmatprep.subr.bf16.mxu0 0
      %750 = vmatpush2.bf16.msra.mxu0 0
      %751 = vmatprep.subr.bf16.mxu0 0
      %752 = vmatpush2.bf16.msra.mxu0 0
      %753 = vmatprep.subr.bf16.mxu0 0
      %754 = vmatpush2.bf16.msra.mxu0 0
      %755 = vmatprep.subr.bf16.mxu0 0
      %756 = vmatpush2.bf16.msra.mxu0 0
      %757 = vmatprep.subr.bf16.mxu0 0
      %758 = vmatpush2.bf16.msra.mxu0 0
      %759 = vmatprep.subr.bf16.mxu0 0
      %760 = vmatpush2.bf16.msra.mxu0 0
      %761 = vmatprep.mubr.bf16.mxu0 0
      %762 = vmatmul.mubr.bf16.gmra.mxu0 %v721
      %v763 = vpop.f32.mrf.mxu0
      %v764 = vadd.f32 0.0, %v763
      %v765 = vpop.f32.mrf.mxu0
      %v766 = vadd.f32 0.0, %v765
      %v767 = vpop.f32.mrf.mxu0
      %v768 = vpop.f32.mrf.mxu0
      %769 = vdwg.mxu0
      %v770 = vadd.f32 %v615, %v764
      %v771 = vadd.f32 %v616, %v766
      %v772 = vld [vmem:[%s165] sm:$0xc]
      %s773 = scalar_lea.vmem %s1, 480
      %v774 = vld [vmem:[%s773] sm:$0xff]
      %v775 = vld [vmem:[%s773 + $0x8] sm:$0xff]
      %v776 = vld [vmem:[%s773 + $0x10] sm:$0xff]
      %v777 = vld [vmem:[%s773 + $0x18] sm:$0xff]
      %v778 = vld [vmem:[%s773 + $0x20] sm:$0xff]
      %v779 = vld [vmem:[%s773 + $0x28] sm:$0xff]
      %v780 = vld [vmem:[%s773 + $0x30] sm:$0xff]
      %v781 = vld [vmem:[%s773 + $0x38] sm:$0xff]
      %v782 = vld [vmem:[%s773 + $0x40] sm:$0xff]
      %v783 = vld [vmem:[%s773 + $0x48] sm:$0xff]
      %v784 = vld [vmem:[%s773 + $0x50] sm:$0xff]
      %v785 = vld [vmem:[%s773 + $0x58] sm:$0xff]
      %v786 = vld [vmem:[%s773 + $0x60] sm:$0xff]
      %v787 = vld [vmem:[%s773 + $0x68] sm:$0xff]
      %v788 = vld [vmem:[%s773 + $0x70] sm:$0xff]
      %v790 = vunpack.c.l.b16 %v772
      %v791 = vpack.c.b16 %v635, %v790
      %v792 = vrot.slane %v791, 2
      %v808 = vunpack.c.l.b16 %v774
      %v809 = vunpack.c.h.b16 %v774
      %v810 = vunpack.c.l.b16 %v775
      %v811 = vunpack.c.h.b16 %v775
      %v812 = vunpack.c.l.b16 %v776
      %v813 = vunpack.c.h.b16 %v776
      %v814 = vunpack.c.l.b16 %v777
      %v815 = vunpack.c.h.b16 %v777
      %v816 = vunpack.c.l.b16 %v778
      %v817 = vunpack.c.h.b16 %v778
      %v818 = vunpack.c.l.b16 %v779
      %v819 = vunpack.c.h.b16 %v779
      %v820 = vunpack.c.l.b16 %v780
      %v821 = vunpack.c.h.b16 %v780
      %v822 = vunpack.c.l.b16 %v781
      %v823 = vunpack.c.h.b16 %v781
      %v824 = vunpack.c.l.b16 %v782
      %v825 = vunpack.c.h.b16 %v782
      %v826 = vunpack.c.l.b16 %v783
      %v827 = vunpack.c.h.b16 %v783
      %v828 = vunpack.c.l.b16 %v784
      %v829 = vunpack.c.h.b16 %v784
      %v830 = vunpack.c.l.b16 %v785
      %v831 = vunpack.c.h.b16 %v785
      %v832 = vunpack.c.l.b16 %v786
      %v833 = vunpack.c.h.b16 %v786
      %v834 = vunpack.c.l.b16 %v787
      %v835 = vunpack.c.h.b16 %v787
      %v836 = vunpack.c.l.b16 %v788
      %v837 = vunpack.c.h.b16 %v788
      %v838 = vpack.c.b16 %v810, %v808
      %v839 = vpack.c.b16 %v811, %v809
      %v840 = vpack.c.b16 %v814, %v812
      %v841 = vpack.c.b16 %v815, %v813
      %v842 = vpack.c.b16 %v818, %v816
      %v843 = vpack.c.b16 %v819, %v817
      %v844 = vpack.c.b16 %v822, %v820
      %v845 = vpack.c.b16 %v823, %v821
      %v846 = vpack.c.b16 %v826, %v824
      %v847 = vpack.c.b16 %v827, %v825
      %v848 = vpack.c.b16 %v830, %v828
      %v849 = vpack.c.b16 %v831, %v829
      %v850 = vpack.c.b16 %v834, %v832
      %v851 = vpack.c.b16 %v835, %v833
      %v852 = vpack.c.b16 %v836, %v836
      %v853 = vpack.c.b16 %v837, %v837
      %v869 = vsel %vm292, %v792, 0
      %v872 = vsel %vm296, %v852, 0
      %v875 = vsel %vm296, %v853, 0
      %877 = vmatprep.subr.bf16.mxu0 %v875
      %878 = vmatpush1.bf16.msra.mxu0 %v872
      %879 = vmatprep.subr.bf16.mxu0 %v851
      %880 = vmatpush1.bf16.msra.mxu0 %v850
      %881 = vmatprep.subr.bf16.mxu0 %v849
      %882 = vmatpush1.bf16.msra.mxu0 %v848
      %883 = vmatprep.subr.bf16.mxu0 %v847
      %884 = vmatpush1.bf16.msra.mxu0 %v846
      %885 = vmatprep.subr.bf16.mxu0 %v845
      %886 = vmatpush1.bf16.msra.mxu0 %v844
      %887 = vmatprep.subr.bf16.mxu0 %v843
      %888 = vmatpush1.bf16.msra.mxu0 %v842
      %889 = vmatprep.subr.bf16.mxu0 %v841
      %890 = vmatpush1.bf16.msra.mxu0 %v840
      %891 = vmatprep.subr.bf16.mxu0 %v839
      %892 = vmatpush1.bf16.msra.mxu0 %v838
      %893 = vmatprep.subr.bf16.mxu0 0
      %894 = vmatpush2.bf16.msra.mxu0 0
      %895 = vmatprep.subr.bf16.mxu0 0
      %896 = vmatpush2.bf16.msra.mxu0 0
      %897 = vmatprep.subr.bf16.mxu0 0
      %898 = vmatpush2.bf16.msra.mxu0 0
      %899 = vmatprep.subr.bf16.mxu0 0
      %900 = vmatpush2.bf16.msra.mxu0 0
      %901 = vmatprep.subr.bf16.mxu0 0
      %902 = vmatpush2.bf16.msra.mxu0 0
      %903 = vmatprep.subr.bf16.mxu0 0
      %904 = vmatpush2.bf16.msra.mxu0 0
      %905 = vmatprep.subr.bf16.mxu0 0
      %906 = vmatpush2.bf16.msra.mxu0 0
      %907 = vmatprep.subr.bf16.mxu0 0
      %908 = vmatpush2.bf16.msra.mxu0 0
      %909 = vmatprep.mubr.bf16.mxu0 0
      %910 = vmatmul.mubr.bf16.gmra.mxu0 %v869
      %v911 = vpop.f32.mrf.mxu0
      %v912 = vadd.f32 0.0, %v911
      %v913 = vpop.f32.mrf.mxu0
      %v914 = vadd.f32 0.0, %v913
      %v915 = vpop.f32.mrf.mxu0
      %v916 = vpop.f32.mrf.mxu0
      %917 = vdwg.mxu0
      %v918 = vadd.f32 %v770, %v912
      %v919 = vadd.f32 %v771, %v914
      %v920 = vld [vmem:[%s2] sm:$0x3]
      %v922 = vlaneseq
      %v923 = vshrl.u32 %v922, 7
      %v924 = vsub.s32 0, %v923
      %v925 = vrot.slane %v920, %v924
      %v926 = vlaneseq
      %v927 = vshrl.u32 %v926, 7
      %v928 = vsub.s32 1, %v927
      %v929 = vrot.slane %v920, %v928
      %v932 = vadd.f32 %v918, %v925
      %v933 = vadd.f32 %v919, %v929
      %v934 = vmax.f32 %v932, 0.0
      %v935 = vmax.f32 %v933, 0.0
      %v936 = vpack.c.bf16 %v934, %v934
      %v937 = vpack.c.bf16 %v935, %v935
      %v940 = vunpack.c.l.b16 %v936
      %v941 = vunpack.c.l.b16 %v937
      %v942 = vpack.c.b16 %v941, %v940
      %vm944 = vcmask 261124
      %vm945 = vmor %vm944, %vm296
      %946 = vst.msk [vmem:[%s170] sm:$0xff] %vm945, %v942
      %p947 = scmp.lt.s32.totalorder %s14, 1
      %s948 = scalar_select %p947, %s14, 1
      %s949 = smul.addr %s948, 2
      %s950 = smul.addr %s949, 4
      %s951 = scalar_lea.vmem %s3, %s950
      // Predicated region
      $region33: #{forward.10} parent=31 // pred_check
        %p952 = pneg %p100
      $region34: #{forward.10} parent=31 // pred_check_branch
        %954 = sbr.rel (%p952) target = $region36
      $region35: #{forward.10} parent=31 // pred_region
        _
      $region36: #{forward.10} parent=31 // pred_fallthru
        _
    $region32: #{forward.10} parent=5 // pred_fallthru
      _
    %p955 = scmp.le.s32.totalorder 2, %s9
    // Predicated region
    $region37: #{forward.10} parent=5 // pred_check
      %p956 = pneg %p955
    $region38: #{forward.10} parent=5 // pred_check_branch
      %958 = sbr.rel (%p956) target = $region40
    $region39: #{forward.10} parent=5 // pred_region
      %s959 = ssub.s32 %s9, 2
      // Predicated region
      $region41: #{forward.10} parent=39 // pred_check
        %p960 = pneg %p106
      $region42: #{forward.10} parent=39 // pred_check_branch
        %962 = sbr.rel (%p960) target = $region44
      $region43: #{forward.10} parent=39 // pred_region
        %p963 = scmp.lt.s32.totalorder %s15, 1
        %s964 = scalar_select %p963, %s15, 1
        %s965 = smul.addr %s964, 2
        %s966 = smul.addr %s965, 4
        %s967 = scalar_lea.vmem %s3, %s966
      $region44: #{forward.10} parent=39 // pred_fallthru
        _
    $region40: #{forward.10} parent=5 // pred_fallthru
      _
  $region6: #{forward.10} parent=0 // loop_footer
    %s13 = sadd.s32 1, %s9
  $region7: #{forward.10} parent=0 // loop_footer_branch
    %8 = sbr.rel target = $region3
  $region8: #{forward.10} parent=0 // loop_exit
    _

// kernel: forward.11
$region0: #{forward.11}
  #allocation0 [shape = 'u32[]', space=smem, size = 0x4, offset = 0x4, fixed_abs, tag = 'smem constant byte address 0x4 - core index']
  #allocation1 [shape = 'u32[144,128]{1,0:T(1,128)}', space=vmem, size = 0x12000, scoped, tag = 'internal scratch']
  %s0 = inlined_call_operand.vmem [shape: bf16[2,320], index: 0, kind: input, shape index: {}]
  %s1 = inlined_call_operand.vmem [shape: f32[320,50], index: 1, kind: input, shape index: {}]
  %s2 = inlined_call_operand.vmem [shape: f32[1,50], index: 2, kind: input, shape index: {}]
  %s3 = inlined_call_operand.vmem [shape: f32[50,10], index: 3, kind: input, shape index: {}]
  %s4 = inlined_call_operand.vmem [shape: f32[1,10], index: 4, kind: input, shape index: {}]
  %s5 = inlined_call_operand.hbm [shape: f32[2,10], index: 5, kind: output, shape index: {}]
  %s6 = sld [smem:[#allocation0]]
  $region30: #{forward.11} parent=0
    _
  %s8 = ssub.s32 1, %s6
  %s9 = scalar_select 0, %s8, %s6
  $region1: #{forward.11} parent=0
    #allocation2 [shape = 'u8[1024]{0}', space=vmem, size = 0x400, scoped, tag = 'output window, operand 0, single buffered']
    #allocation3 [shape = 's32[1]{0}', space=sflag, size = 0x4, scoped, tag = 'scoped memory for forward.11']
    %10 = vsyncpa [#allocation3], 0
    // Predicated region
    $region2: #{forward.11} parent=1 // pred_check
      _
    $region3: #{forward.11} parent=1 // pred_check_branch
      %12 = sbr.rel (0) target = $region5
    $region4: #{forward.11} parent=1 // pred_region
      _
    $region5: #{forward.11} parent=1 // pred_fallthru
      _
    // Predicated region
    $region6: #{forward.11} parent=1 // pred_check
      _
    $region7: #{forward.11} parent=1 // pred_check_branch
      %14 = sbr.rel (0) target = $region9
    $region8: #{forward.11} parent=1 // pred_region
      _
    $region9: #{forward.11} parent=1 // pred_fallthru
      _
    // Predicated region
    $region10: #{forward.11} parent=1 // pred_check
      _
    $region11: #{forward.11} parent=1 // pred_check_branch
      %16 = sbr.rel (0) target = $region13
    $region12: #{forward.11} parent=1 // pred_region
      _
    $region13: #{forward.11} parent=1 // pred_fallthru
      _
    // Predicated region
    $region14: #{forward.11} parent=1 // pred_check
      _
    $region15: #{forward.11} parent=1 // pred_check_branch
      %18 = sbr.rel (0) target = $region17
    $region16: #{forward.11} parent=1 // pred_region
      _
    $region17: #{forward.11} parent=1 // pred_fallthru
      _
    // Predicated region
    $region18: #{forward.11} parent=1 // pred_check
      _
    $region19: #{forward.11} parent=1 // pred_check_branch
      %20 = sbr.rel (0) target = $region21
    $region20: #{forward.11} parent=1 // pred_region
      _
    $region21: #{forward.11} parent=1 // pred_fallthru
      _
    %v21 = vld [vmem:[%s0] sm:$0x7]
    %v22 = vunpack.c.l.bf16 %v21
    %v23 = vld [vmem:[%s1] sm:$0xff]
    %v24 = vld [vmem:[%s1 + $0x8] sm:$0xff]
    %v25 = vld [vmem:[%s1 + $0x10] sm:$0xff]
    %v26 = vld [vmem:[%s1 + $0x18] sm:$0xff]
    %v27 = vld [vmem:[%s1 + $0x20] sm:$0xff]
    %v28 = vld [vmem:[%s1 + $0x28] sm:$0xff]
    %v29 = vld [vmem:[%s1 + $0x30] sm:$0xff]
    %v30 = vld [vmem:[%s1 + $0x38] sm:$0xff]
    %v31 = vld [vmem:[%s1 + $0x40] sm:$0xff]
    %v32 = vld [vmem:[%s1 + $0x48] sm:$0xff]
    %v33 = vld [vmem:[%s1 + $0x50] sm:$0xff]
    %v34 = vld [vmem:[%s1 + $0x58] sm:$0xff]
    %v35 = vld [vmem:[%s1 + $0x60] sm:$0xff]
    %v36 = vld [vmem:[%s1 + $0x68] sm:$0xff]
    %v37 = vld [vmem:[%s1 + $0x70] sm:$0xff]
    %v38 = vld [vmem:[%s1 + $0x78] sm:$0xff]
    %v39 = vld [vmem:[%s1 + $0x80] sm:$0xff]
    %v40 = vld [vmem:[%s1 + $0x88] sm:$0xff]
    %v41 = vld [vmem:[%s1 + $0x90] sm:$0xff]
    %v42 = vld [vmem:[%s1 + $0x98] sm:$0xff]
    %v43 = vld [vmem:[%s1 + $0xa0] sm:$0xff]
    %v44 = vld [vmem:[%s1 + $0xa8] sm:$0xff]
    %v45 = vld [vmem:[%s1 + $0xb0] sm:$0xff]
    %v46 = vld [vmem:[%s1 + $0xb8] sm:$0xff]
    %v47 = vld [vmem:[%s1 + $0xc0] sm:$0xff]
    %v48 = vld [vmem:[%s1 + $0xc8] sm:$0xff]
    %v49 = vld [vmem:[%s1 + $0xd0] sm:$0xff]
    %v50 = vld [vmem:[%s1 + $0xd8] sm:$0xff]
    %v51 = vld [vmem:[%s1 + $0xe0] sm:$0xff]
    %v52 = vld [vmem:[%s1 + $0xe8] sm:$0xff]
    %v53 = vld [vmem:[%s1 + $0xf0] sm:$0xff]
    %v54 = vld [vmem:[%s1 + $0xf8] sm:$0xff]
    %v55 = vld [vmem:[%s1 + $0x100] sm:$0xff]
    %v56 = vld [vmem:[%s1 + $0x108] sm:$0xff]
    %v57 = vld [vmem:[%s1 + $0x110] sm:$0xff]
    %v58 = vld [vmem:[%s1 + $0x118] sm:$0xff]
    %v59 = vld [vmem:[%s1 + $0x120] sm:$0xff]
    %v60 = vld [vmem:[%s1 + $0x128] sm:$0xff]
    %v61 = vld [vmem:[%s1 + $0x130] sm:$0xff]
    %v62 = vld [vmem:[%s1 + $0x138] sm:$0xff]
    %v63 = vld [vmem:[%s2] sm:$0x1]
    %v65 = vlaneseq
    %v66 = vshrl.u32 %v65, 7
    %v67 = vsub.s32 0, %v66
    %v68 = vrot.slane %v63, %v67
    %v71 = vcombine.high %v22, %v22
    %v73 = vunpack.c.l.s4 1983009808
    %v74 = vunpack.c.0.s8 %v73
    %v75 = vlaneseq
    %v76 = vshrl.u32 %v75, 7
    %v77 = vsub.s32 %v74, %v76
    %v78 = vrot.slane %v22, %v77
    %v80 = vunpack.c.l.s4 1983009808
    %v81 = vunpack.c.0.s8 %v80
    %v82 = vlaneseq
    %v83 = vshrl.u32 %v82, 7
    %v84 = vsub.s32 %v81, %v83
    %v85 = vrot.slane %v71, %v84
    %v86 = vcombine.high %v78, %v78
    %vm89 = vcmask 523264
    %v90 = vsel %vm89, %v85, 0
    %92 = vmatprep.subr.mxu0 0.0
    %93 = vmatpush1.msra.mxu0 %v38
    %94 = vmatprep.subr.mxu0 0.0
    %95 = vmatpush1.msra.mxu0 %v37
    %96 = vmatprep.subr.mxu0 0.0
    %97 = vmatpush1.msra.mxu0 %v36
    %98 = vmatprep.subr.mxu0 0.0
    %99 = vmatpush1.msra.mxu0 %v35
    %100 = vmatprep.subr.mxu0 0.0
    %101 = vmatpush1.msra.mxu0 %v34
    %102 = vmatprep.subr.mxu0 0.0
    %103 = vmatpush1.msra.mxu0 %v33
    %104 = vmatprep.subr.mxu0 0.0
    %105 = vmatpush1.msra.mxu0 %v32
    %106 = vmatprep.subr.mxu0 0.0
    %107 = vmatpush1.msra.mxu0 %v31
    %108 = vmatprep.subr.mxu0 0.0
    %109 = vmatpush1.msra.mxu0 %v30
    %110 = vmatprep.subr.mxu0 0.0
    %111 = vmatpush1.msra.mxu0 %v29
    %112 = vmatprep.subr.mxu0 0.0
    %113 = vmatpush1.msra.mxu0 %v28
    %114 = vmatprep.subr.mxu0 0.0
    %115 = vmatpush1.msra.mxu0 %v27
    %116 = vmatprep.subr.mxu0 0.0
    %117 = vmatpush1.msra.mxu0 %v26
    %118 = vmatprep.subr.mxu0 0.0
    %119 = vmatpush1.msra.mxu0 %v25
    %120 = vmatprep.subr.mxu0 0.0
    %121 = vmatpush1.msra.mxu0 %v24
    %122 = vmatprep.subr.mxu0 0.0
    %123 = vmatpush1.msra.mxu0 %v23
    %124 = vmatprep.subr.mxu0 0.0
    %125 = vmatpush2.msra.mxu0 %v54
    %126 = vmatprep.subr.mxu0 0.0
    %127 = vmatpush2.msra.mxu0 %v53
    %128 = vmatprep.subr.mxu0 0.0
    %129 = vmatpush2.msra.mxu0 %v52
    %130 = vmatprep.subr.mxu0 0.0
    %131 = vmatpush2.msra.mxu0 %v51
    %132 = vmatprep.subr.mxu0 0.0
    %133 = vmatpush2.msra.mxu0 %v50
    %134 = vmatprep.subr.mxu0 0.0
    %135 = vmatpush2.msra.mxu0 %v49
    %136 = vmatprep.subr.mxu0 0.0
    %137 = vmatpush2.msra.mxu0 %v48
    %138 = vmatprep.subr.mxu0 0.0
    %139 = vmatpush2.msra.mxu0 %v47
    %140 = vmatprep.subr.mxu0 0.0
    %141 = vmatpush2.msra.mxu0 %v46
    %142 = vmatprep.subr.mxu0 0.0
    %143 = vmatpush2.msra.mxu0 %v45
    %144 = vmatprep.subr.mxu0 0.0
    %145 = vmatpush2.msra.mxu0 %v44
    %146 = vmatprep.subr.mxu0 0.0
    %147 = vmatpush2.msra.mxu0 %v43
    %148 = vmatprep.subr.mxu0 0.0
    %149 = vmatpush2.msra.mxu0 %v42
    %150 = vmatprep.subr.mxu0 0.0
    %151 = vmatpush2.msra.mxu0 %v41
    %152 = vmatprep.subr.mxu0 0.0
    %153 = vmatpush2.msra.mxu0 %v40
    %154 = vmatprep.subr.mxu0 0.0
    %155 = vmatpush2.msra.mxu0 %v39
    %156 = vmatprep.mubr.f32.mxu0 %v86
    %157 = vmatmul.mubr.f32.gmra.mxu0 %v78
    %v158 = vpop.f32.mrf.mxu0
    %v159 = vadd.f32 %v68, %v158
    %v160 = vpop.f32.mrf.mxu0
    %161 = vdwg.mxu0
    %162 = vmatprep.subr.mxu0 0.0
    %163 = vmatpush1.msra.mxu0 0.0
    %164 = vmatprep.subr.mxu0 0.0
    %165 = vmatpush1.msra.mxu0 0.0
    %166 = vmatprep.subr.mxu0 0.0
    %167 = vmatpush1.msra.mxu0 0.0
    %168 = vmatprep.subr.mxu0 0.0
    %169 = vmatpush1.msra.mxu0 0.0
    %170 = vmatprep.subr.mxu0 0.0
    %171 = vmatpush1.msra.mxu0 0.0
    %172 = vmatprep.subr.mxu0 0.0
    %173 = vmatpush1.msra.mxu0 0.0
    %174 = vmatprep.subr.mxu0 0.0
    %175 = vmatpush1.msra.mxu0 0.0
    %176 = vmatprep.subr.mxu0 0.0
    %177 = vmatpush1.msra.mxu0 0.0
    %178 = vmatprep.subr.mxu0 0.0
    %179 = vmatpush1.msra.mxu0 %v62
    %180 = vmatprep.subr.mxu0 0.0
    %181 = vmatpush1.msra.mxu0 %v61
    %182 = vmatprep.subr.mxu0 0.0
    %183 = vmatpush1.msra.mxu0 %v60
    %184 = vmatprep.subr.mxu0 0.0
    %185 = vmatpush1.msra.mxu0 %v59
    %186 = vmatprep.subr.mxu0 0.0
    %187 = vmatpush1.msra.mxu0 %v58
    %188 = vmatprep.subr.mxu0 0.0
    %189 = vmatpush1.msra.mxu0 %v57
    %190 = vmatprep.subr.mxu0 0.0
    %191 = vmatpush1.msra.mxu0 %v56
    %192 = vmatprep.subr.mxu0 0.0
    %193 = vmatpush1.msra.mxu0 %v55
    %194 = vmatprep.subr.mxu0 0.0
    %195 = vmatpush2.msra.mxu0 0.0
    %196 = vmatprep.subr.mxu0 0.0
    %197 = vmatpush2.msra.mxu0 0.0
    %198 = vmatprep.subr.mxu0 0.0
    %199 = vmatpush2.msra.mxu0 0.0
    %200 = vmatprep.subr.mxu0 0.0
    %201 = vmatpush2.msra.mxu0 0.0
    %202 = vmatprep.subr.mxu0 0.0
    %203 = vmatpush2.msra.mxu0 0.0
    %204 = vmatprep.subr.mxu0 0.0
    %205 = vmatpush2.msra.mxu0 0.0
    %206 = vmatprep.subr.mxu0 0.0
    %207 = vmatpush2.msra.mxu0 0.0
    %208 = vmatprep.subr.mxu0 0.0
    %209 = vmatpush2.msra.mxu0 0.0
    %210 = vmatprep.subr.mxu0 0.0
    %211 = vmatpush2.msra.mxu0 0.0
    %212 = vmatprep.subr.mxu0 0.0
    %213 = vmatpush2.msra.mxu0 0.0
    %214 = vmatprep.subr.mxu0 0.0
    %215 = vmatpush2.msra.mxu0 0.0
    %216 = vmatprep.subr.mxu0 0.0
    %217 = vmatpush2.msra.mxu0 0.0
    %218 = vmatprep.subr.mxu0 0.0
    %219 = vmatpush2.msra.mxu0 0.0
    %220 = vmatprep.subr.mxu0 0.0
    %221 = vmatpush2.msra.mxu0 0.0
    %222 = vmatprep.subr.mxu0 0.0
    %223 = vmatpush2.msra.mxu0 0.0
    %224 = vmatprep.subr.mxu0 0.0
    %225 = vmatpush2.msra.mxu0 0.0
    %226 = vmatprep.mubr.f32.mxu0 0.0
    %227 = vmatmul.mubr.f32.gmra.mxu0 %v90
    %v228 = vpop.f32.mrf.mxu0
    %v229 = vadd.f32 %v159, %v228
    %v230 = vpop.f32.mrf.mxu0
    %231 = vdwg.mxu0
    %v232 = vmax.f32 %v229, 0.0
    %v233 = vld [vmem:[%s3] sm:$0xff]
    %v234 = vld [vmem:[%s3 + $0x8] sm:$0xff]
    %v235 = vld [vmem:[%s3 + $0x10] sm:$0xff]
    %v236 = vld [vmem:[%s3 + $0x18] sm:$0xff]
    %v237 = vld [vmem:[%s3 + $0x20] sm:$0xff]
    %v238 = vld [vmem:[%s3 + $0x28] sm:$0xff]
    %v239 = vld [vmem:[%s3 + $0x30] sm:$0x3]
    %v240 = vld [vmem:[%s4] sm:$0x1]
    %v242 = vlaneseq
    %v243 = vshrl.u32 %v242, 7
    %v244 = vsub.s32 0, %v243
    %v245 = vrot.slane %v240, %v244
    %vm247 = vcmask 408576
    %v249 = vsel %vm247, %v232, 0
    %vm251 = vcmask 1041408
    %v253 = vsel %vm251, %v239, 0
    %255 = vmatprep.subr.mxu0 0.0
    %256 = vmatpush1.msra.mxu0 0.0
    %257 = vmatprep.subr.mxu0 0.0
    %258 = vmatpush1.msra.mxu0 0.0
    %259 = vmatprep.subr.mxu0 0.0
    %260 = vmatpush1.msra.mxu0 0.0
    %261 = vmatprep.subr.mxu0 0.0
    %262 = vmatpush1.msra.mxu0 0.0
    %263 = vmatprep.subr.mxu0 0.0
    %264 = vmatpush1.msra.mxu0 0.0
    %265 = vmatprep.subr.mxu0 0.0
    %266 = vmatpush1.msra.mxu0 0.0
    %267 = vmatprep.subr.mxu0 0.0
    %268 = vmatpush1.msra.mxu0 0.0
    %269 = vmatprep.subr.mxu0 0.0
    %270 = vmatpush1.msra.mxu0 0.0
    %271 = vmatprep.subr.mxu0 0.0
    %272 = vmatpush1.msra.mxu0 0.0
    %273 = vmatprep.subr.mxu0 0.0
    %274 = vmatpush1.msra.mxu0 %v253
    %275 = vmatprep.subr.mxu0 0.0
    %276 = vmatpush1.msra.mxu0 %v238
    %277 = vmatprep.subr.mxu0 0.0
    %278 = vmatpush1.msra.mxu0 %v237
    %279 = vmatprep.subr.mxu0 0.0
    %280 = vmatpush1.msra.mxu0 %v236
    %281 = vmatprep.subr.mxu0 0.0
    %282 = vmatpush1.msra.mxu0 %v235
    %283 = vmatprep.subr.mxu0 0.0
    %284 = vmatpush1.msra.mxu0 %v234
    %285 = vmatprep.subr.mxu0 0.0
    %286 = vmatpush1.msra.mxu0 %v233
    %287 = vmatprep.subr.mxu0 0.0
    %288 = vmatpush2.msra.mxu0 0.0
    %289 = vmatprep.subr.mxu0 0.0
    %290 = vmatpush2.msra.mxu0 0.0
    %291 = vmatprep.subr.mxu0 0.0
    %292 = vmatpush2.msra.mxu0 0.0
    %293 = vmatprep.subr.mxu0 0.0
    %294 = vmatpush2.msra.mxu0 0.0
    %295 = vmatprep.subr.mxu0 0.0
    %296 = vmatpush2.msra.mxu0 0.0
    %297 = vmatprep.subr.mxu0 0.0
    %298 = vmatpush2.msra.mxu0 0.0
    %299 = vmatprep.subr.mxu0 0.0
    %300 = vmatpush2.msra.mxu0 0.0
    %301 = vmatprep.subr.mxu0 0.0
    %302 = vmatpush2.msra.mxu0 0.0
    %303 = vmatprep.subr.mxu0 0.0
    %304 = vmatpush2.msra.mxu0 0.0
    %305 = vmatprep.subr.mxu0 0.0
    %306 = vmatpush2.msra.mxu0 0.0
    %307 = vmatprep.subr.mxu0 0.0
    %308 = vmatpush2.msra.mxu0 0.0
    %309 = vmatprep.subr.mxu0 0.0
    %310 = vmatpush2.msra.mxu0 0.0
    %311 = vmatprep.subr.mxu0 0.0
    %312 = vmatpush2.msra.mxu0 0.0
    %313 = vmatprep.subr.mxu0 0.0
    %314 = vmatpush2.msra.mxu0 0.0
    %315 = vmatprep.subr.mxu0 0.0
    %316 = vmatpush2.msra.mxu0 0.0
    %317 = vmatprep.subr.mxu0 0.0
    %318 = vmatpush2.msra.mxu0 0.0
    %319 = vmatprep.mubr.f32.mxu0 0.0
    %320 = vmatmul.mubr.f32.gmra.mxu0 %v249
    %v321 = vpop.f32.mrf.mxu0
    %v322 = vadd.f32 %v245, %v321
    %v323 = vpop.f32.mrf.mxu0
    %324 = vdwg.mxu0
    %vm325 = vcmask 74752
    %v326 = vsel %vm325, %v322, -inf
    %327 = vmax.xlane.f32.xlu0 %v326
    %v328 = vpop.xlane.xlu0 %327
    %v329 = vsub.f32 %v322, %v328
    %v330 = vmul.f32 %v329, 1.442695
    %v331 = vpow.pop %v330
    %v332 = vsel %vm325, %v331, 0.0
    %333 = vadd.xlane.f32.xlu0 %v332
    %v334 = vpop.xlane.xlu0 %333
    %v335 = vlog2.pop %v334
    %v336 = vmul.f32 %v335, 0.6931472
    %v337 = vsub.f32 %v329, %v336
    %338 = vst.msk [vmem:[#allocation2] sm:$0x3] %vm325, %v337
    // Predicated region
    $region22: #{forward.11} parent=1 // pred_check
      _
    $region23: #{forward.11} parent=1 // pred_check_branch
      %340 = sbr.rel (0) target = $region25
    $region24: #{forward.11} parent=1 // pred_region
      %s342 = ssub.s32 32, 32
      %343 = vsyncadd [#allocation3], %s342
      %s345 = sshll.u32 [#allocation2], 4
      %s346 = int_to_ptr.vmem [resolvable:$true] %s345
      %348 = dma.vmem_to_hbm [thread:$0]  %s346, 32, %s5, [#allocation3]
    $region25: #{forward.11} parent=1 // pred_fallthru
      _
    // Predicated region
    $region26: #{forward.11} parent=1 // pred_check
      _
    $region27: #{forward.11} parent=1 // pred_check_branch
      %350 = sbr.rel (0) target = $region29
    $region28: #{forward.11} parent=1 // pred_region
      %351 = dma.done [#allocation3], 32
    $region29: #{forward.11} parent=1 // pred_fallthru
      _
    %352 = vsyncpa [#allocation3], 1

</llo_original>
